<compile_context>
chip_gen: v6e
topology: v6e:2x2x1
jax: 0.10.0
libtpu: 0.0.40
codegen_flags: <defaults>
</compile_context>

<pallas_src>
import jax
import jax.numpy as jnp
from jax.experimental import pallas as pl
from jax.experimental.pallas import tpu as pltpu


NUM_FEATURES = 2362   # self.num_features in the module
K_PAD = 2432          # next multiple of 128 (zero-padded contraction dim)
HIDDEN_SIZE = 768     # self.hidden_size in the module


def _pick_tn():
    """Output-channel tile: 384 (two 'parallel' tiles, one per TensorCore) on
    the 2-TC v7x; 768 (grid=1, single contiguous weight DMA) on 1-TC chips."""
    try:
        kind = jax.devices()[0].device_kind.lower()
    except Exception:
        kind = ""
    return 384 if "7" in kind else HIDDEN_SIZE


def _linear_kernel(x_ref, w_ref, b_ref, o_ref):
    # x_ref: (TM, K_PAD) f32   batch tile, full padded K (resident across j)
    # w_ref: (K_PAD, TN) bf16  one tile-contiguous output-column block
    # b_ref: (1, TN)     f32   bias slice for this output tile
    # o_ref: (TM, TN)    f32   output tile
    acc = jnp.dot(x_ref[...].astype(jnp.bfloat16), w_ref[...],
                  preferred_element_type=jnp.float32)
    o_ref[...] = (acc + b_ref[...]).astype(o_ref.dtype)


def pack_weight(w_t_f32, tn):
    """(2362, 768) f32 -> (768//tn, 2432, tn) bf16.

    K is zero-padded to 2432 and the array is re-laid-out so each output tile
    j is the contiguous slab w_packed[j] (one linear HBM DMA per grid step)."""
    k, n = w_t_f32.shape
    assert k == NUM_FEATURES and n == HIDDEN_SIZE and n % tn == 0
    w_pad = jnp.pad(w_t_f32, ((0, K_PAD - k), (0, 0))).astype(jnp.bfloat16)
    return jnp.transpose(w_pad.reshape(K_PAD, n // tn, tn), (1, 0, 2))


def unpack_weight(w_packed):
    """Inverse of pack_weight (for reference checks): -> (2432, 768) bf16."""
    nt, kp, tn = w_packed.shape
    return jnp.transpose(w_packed, (1, 0, 2)).reshape(kp, nt * tn)


def smiles_encoder_forward(feats, w_packed, b):
    """feats: [B, 2362] f32, w_packed: [N//TN, 2432, TN] bf16, b: [768] f32
    -> [B, 768] f32."""
    B, K = feats.shape
    nt, kp, tn = w_packed.shape
    N = nt * tn
    assert kp == K_PAD and N == HIDDEN_SIZE
    if K != K_PAD:
        assert K == NUM_FEATURES
        feats = jnp.pad(feats, ((0, 0), (0, K_PAD - K)))

    # Batch-tile guard: one full-B block while B is small (B=2 here); 256-row
    # 'parallel' tiles once B grows so VMEM stays bounded and the batch axis
    # can also feed the MXU / shard across v7x TensorCores.
    if B <= 256:
        tm, b_pad = B, B
    else:
        tm = 256
        b_pad = pl.cdiv(B, tm) * tm
        if b_pad != B:
            feats = jnp.pad(feats, ((0, b_pad - B), (0, 0)))

    b2 = b.reshape(1, N)

    flops = 2 * b_pad * K_PAD * N
    bytes_accessed = (feats.size * 4 + w_packed.size * 2
                      + b2.size * 4 + b_pad * N * 4)

    out = pl.pallas_call(
        _linear_kernel,
        out_shape=jax.ShapeDtypeStruct((b_pad, N), jnp.float32),
        grid_spec=pltpu.PrefetchScalarGridSpec(
            num_scalar_prefetch=0,
            grid=(b_pad // tm, nt),
            in_specs=[
                # activations: batch tile i, full padded K; same block index
                # across the output-tile axis -> stays resident in VMEM.
                pl.BlockSpec((tm, K_PAD), lambda i, j: (i, 0)),
                # weight: tile j is one contiguous (K_PAD, TN) bf16 HBM slab.
                pl.BlockSpec((None, K_PAD, tn), lambda i, j: (j, 0, 0)),
                # bias: tiny per-tile row slice.
                pl.BlockSpec((1, tn), lambda i, j: (0, j)),
            ],
            out_specs=pl.BlockSpec((tm, tn), lambda i, j: (i, j)),
        ),
        compiler_params=pltpu.CompilerParams(
            dimension_semantics=("parallel", "parallel"),
        ),
        cost_estimate=pl.CostEstimate(
            flops=flops, bytes_accessed=bytes_accessed, transcendentals=0),
    )(feats, w_packed, b2)
    return out[:B] if b_pad != B else out


def init_params(key):
    """Deterministic synthetic init of fc_hidden (Linear(2362, 768)) in f32."""
    kw, kb = jax.random.split(key)
    bound = 1.0 / jnp.sqrt(NUM_FEATURES)
    # PyTorch stores weight as (out, in); keep the transposed (in, out) copy.
    w = jax.random.uniform(kw, (HIDDEN_SIZE, NUM_FEATURES),
                           minval=-bound, maxval=bound, dtype=jnp.float32)
    b = jax.random.uniform(kb, (HIDDEN_SIZE,),
                           minval=-bound, maxval=bound, dtype=jnp.float32)
    return jnp.transpose(w), b


if __name__ == "__main__":
    key = jax.random.PRNGKey(0)
    k_in, k_params = jax.random.split(key)

    batch = 2
    # "mol" after the (undefined) SmilesModule: [batch, num_features] features.
    smiles_feats = jax.random.normal(k_in, (batch, NUM_FEATURES),
                                     dtype=jnp.float32)
    w_t_f32, b = init_params(k_params)

    tn = _pick_tn()                       # 768 on v5e/v6e, 384 on v7x
    w_packed = pack_weight(w_t_f32, tn)   # one-time pad + bf16 + tile-pack

    out = smiles_encoder_forward(smiles_feats, w_packed, b)
    out = jax.block_until_ready(out)
    assert out.shape == (batch, HIDDEN_SIZE)

    # Exact-semantics reference (bf16 activations AND bf16 weights, f32 MXU
    # accumulation -- precisely what the kernel computes): tight tolerance.
    w_bf16 = unpack_weight(w_packed)[:NUM_FEATURES, :]
    ref_q = jnp.dot(smiles_feats.astype(jnp.bfloat16), w_bf16,
                    preferred_element_type=jnp.float32) + b[None, :]
    assert jnp.allclose(out, ref_q, atol=1e-3, rtol=1e-3)

    # Full-f32 PyTorch-semantics reference. Error budget: bf16 quantization of
    # both operands over a 2362-term contraction (~2e-3 typical on ~0.6-scale
    # outputs), so 3e-2 tolerance has >10x headroom and does not flake.
    ref_f32 = smiles_feats @ w_t_f32 + b[None, :]
    assert jnp.allclose(out, ref_f32, atol=3e-2, rtol=3e-2)

    print("KERNEL_OK")
</pallas_src>

<mosaic_0001>
module attributes {stable_mosaic.version = 11 : i64} {
  func.func @_linear_kernel(%arg0: i32, %arg1: i32, %arg2: memref<2x2432xf32, #tpu.memory_space<vmem>>, %arg3: memref<1x2432x768xbf16, #tpu.memory_space<vmem>>, %arg4: memref<1x768xf32, #tpu.memory_space<vmem>>, %arg5: memref<2x768xf32, #tpu.memory_space<vmem>>) attributes {dimension_semantics = [#tpu.dimension_semantics<parallel>, #tpu.dimension_semantics<parallel>], iteration_bounds = array<i64: 1, 1>, scalar_prefetch = 0 : i64, scratch_operands = 0 : i64, tpu.core_type = #tpu.core_type<tc>, window_params = [{transform_indices = @transform_0, window_bounds = array<i64: 2, 2432>}, {transform_indices = @transform_1, window_bounds = array<i64: 1, 2432, 768>}, {transform_indices = @transform_2, window_bounds = array<i64: 1, 768>}, {transform_indices = @transform_3, window_bounds = array<i64: 2, 768>}]} {
    %c0 = arith.constant 0 : index
    %c0_0 = arith.constant 0 : index
    %0 = vector.load %arg2[%c0, %c0_0] : memref<2x2432xf32, #tpu.memory_space<vmem>>, vector<2x2432xf32>
    %1 = arith.truncf %0 : vector<2x2432xf32> to vector<2x2432xbf16>
    %c0_1 = arith.constant 0 : index
    %c0_2 = arith.constant 0 : index
    %c0_3 = arith.constant 0 : index
    %2 = vector.load %arg3[%c0_1, %c0_2, %c0_3] : memref<1x2432x768xbf16, #tpu.memory_space<vmem>>, vector<1x2432x768xbf16>
    %3 = vector.shape_cast %2 : vector<1x2432x768xbf16> to vector<2432x768xbf16>
    %cst = arith.constant dense<0.000000e+00> : vector<2x768xf32>
    %4 = tpu.matmul %1, %3, %cst {dimension_numbers = #tpu.dot_dimension_numbers<[1], [0], [0], [1], [0, 0, 1, 1], [], []>} : vector<2x2432xbf16>, vector<2432x768xbf16>, vector<2x768xf32> -> vector<2x768xf32>
    %c0_4 = arith.constant 0 : index
    %c0_5 = arith.constant 0 : index
    %5 = vector.load %arg4[%c0_4, %c0_5] : memref<1x768xf32, #tpu.memory_space<vmem>>, vector<1x768xf32>
    %6 = vector.broadcast %5 : vector<1x768xf32> to vector<2x768xf32>
    %7 = arith.addf %4, %6 : vector<2x768xf32>
    %c0_6 = arith.constant 0 : index
    %c0_7 = arith.constant 0 : index
    %8 = vector.load %arg5[%c0_6, %c0_7] : memref<2x768xf32, #tpu.memory_space<vmem>>, vector<2x768xf32>
    tpu.vector_store %arg5[%c0_6, %c0_7], %7 {strides = array<i32>} : memref<2x768xf32, #tpu.memory_space<vmem>>, vector<2x768xf32>,
    return
  }
  func.func @transform_0(%arg0: i32, %arg1: i32) -> (i32, i32) {
    %c0_i32 = arith.constant 0 : i32
    %c0_i32_0 = arith.constant 0 : i32
    return %arg0, %c0_i32 : i32, i32
  }
  func.func @transform_1(%arg0: i32, %arg1: i32) -> (i32, i32, i32) {
    %c0_i32 = arith.constant 0 : i32
    %c0_i32_0 = arith.constant 0 : i32
    %c0_i32_1 = arith.constant 0 : i32
    return %arg1, %c0_i32, %c0_i32_0 : i32, i32, i32
  }
  func.func @transform_2(%arg0: i32, %arg1: i32) -> (i32, i32) {
    %c0_i32 = arith.constant 0 : i32
    %c0_i32_0 = arith.constant 0 : i32
    return %c0_i32, %arg1 : i32, i32
  }
  func.func @transform_3(%arg0: i32, %arg1: i32) -> (i32, i32) {
    %c0_i32 = arith.constant 0 : i32
    return %arg0, %arg1 : i32, i32
  }
}

</mosaic_0001>

<llo_original>
// kernel: tpu_custom_call.1
$region0: #{tpu_custom_call.1}
  #allocation0 [shape = 'u32[]', space=smem, size = 0x4, offset = 0x4, fixed_abs, tag = 'smem constant byte address 0x4 - core index']
  #allocation1 [shape = 'u32[144,128]{1,0:T(1,128)}', space=vmem, size = 0x12000, scoped, tag = 'internal scratch']
  %s0 = inlined_call_operand.hbm [shape: f32[2,2432], index: 0, kind: input, shape index: {}]
  %s1 = inlined_call_operand.hbm [shape: bf16[1,2432,768], index: 1, kind: input, shape index: {}]
  %s2 = inlined_call_operand.hbm [shape: f32[1,768], index: 2, kind: input, shape index: {}]
  %s3 = inlined_call_operand.hbm [shape: f32[2,768], index: 3, kind: output, shape index: {}]
  %s4 = sld [smem:[#allocation0]]
  $region34: #{tpu_custom_call.1} parent=0
    _
  %s6 = ssub.s32 1, %s4
  %s7 = scalar_select 0, %s6, %s4
  $region1: #{tpu_custom_call.1} parent=0
    #allocation2 [shape = 'u8[19456]{0}', space=vmem, size = 0x4c00, scoped, tag = 'input window, operand 0, single buffered']
    #allocation3 [shape = 's32[1]{0}', space=sflag, size = 0x4, scoped, tag = 'scoped memory for tpu_custom_call.1']
    #allocation4 [shape = 's32[1]{0}', space=sflag, size = 0x4, scoped, tag = 'scoped memory for tpu_custom_call.1']
    #allocation5 [shape = 'u8[3735552]{0}', space=vmem, size = 0x390000, scoped, tag = 'input window, operand 1, single buffered']
    #allocation6 [shape = 's32[1]{0}', space=sflag, size = 0x4, scoped, tag = 'scoped memory for tpu_custom_call.1']
    #allocation7 [shape = 'u8[3072]{0}', space=vmem, size = 0xc00, scoped, tag = 'input window, operand 2, single buffered']
    #allocation8 [shape = 'u8[6144]{0}', space=vmem, size = 0x1800, scoped, tag = 'output window, operand 0, single buffered']
    %8 = vsyncpa [#allocation3], 0
    %9 = vsyncpa [#allocation6], 0
    %10 = vsyncpa [#allocation4], 0
    // Predicated region
    $region2: #{tpu_custom_call.1} parent=1 // pred_check
      _
    $region3: #{tpu_custom_call.1} parent=1 // pred_check_branch
      %12 = sbr.rel (0) target = $region5
    $region4: #{tpu_custom_call.1} parent=1 // pred_region
      %s14 = ssub.s32 608, 608
      %15 = vsyncadd [#allocation3], %s14
      %s17 = sshll.u32 [#allocation2], 4
      %s18 = int_to_ptr.vmem [resolvable:$true] %s17
      %20 = dma.hbm_to_vmem [thread:$0]  %s0, 608, %s18, [#allocation3]
    $region5: #{tpu_custom_call.1} parent=1 // pred_fallthru
      _
    // Predicated region
    $region6: #{tpu_custom_call.1} parent=1 // pred_check
      _
    $region7: #{tpu_custom_call.1} parent=1 // pred_check_branch
      %22 = sbr.rel (0) target = $region9
    $region8: #{tpu_custom_call.1} parent=1 // pred_region
      %s24 = ssub.s32 116736, 116736
      %25 = vsyncadd [#allocation6], %s24
      %s26 = sshll.u32 [#allocation5], 4
      %s27 = int_to_ptr.vmem [resolvable:$true] %s26
      %32 = dma.hbm_to_vmem [thread:$0]  %s1, 116736, %s27, [#allocation6], 384, 384, 24
    $region9: #{tpu_custom_call.1} parent=1 // pred_fallthru
      _
    // Predicated region
    $region10: #{tpu_custom_call.1} parent=1 // pred_check
      _
    $region11: #{tpu_custom_call.1} parent=1 // pred_check_branch
      %34 = sbr.rel (0) target = $region13
    $region12: #{tpu_custom_call.1} parent=1 // pred_region
      %s36 = ssub.s32 96, 96
      %37 = vsyncadd [#allocation6], %s36
      %s39 = sshll.u32 [#allocation7], 4
      %s40 = int_to_ptr.vmem [resolvable:$true] %s39
      %42 = dma.hbm_to_vmem [thread:$0]  %s2, 96, %s40, [#allocation6]
    $region13: #{tpu_custom_call.1} parent=1 // pred_fallthru
      _
    // Predicated region
    $region14: #{tpu_custom_call.1} parent=1 // pred_check
      _
    $region15: #{tpu_custom_call.1} parent=1 // pred_check_branch
      %44 = sbr.rel (0) target = $region17
    $region16: #{tpu_custom_call.1} parent=1 // pred_region
      %45 = dma.done [#allocation3], 608
    $region17: #{tpu_custom_call.1} parent=1 // pred_fallthru
      _
    // Predicated region
    $region18: #{tpu_custom_call.1} parent=1 // pred_check
      _
    $region19: #{tpu_custom_call.1} parent=1 // pred_check_branch
      %47 = sbr.rel (0) target = $region21
    $region20: #{tpu_custom_call.1} parent=1 // pred_region
      %48 = dma.done [#allocation6], 116736
    $region21: #{tpu_custom_call.1} parent=1 // pred_fallthru
      _
    // Predicated region
    $region22: #{tpu_custom_call.1} parent=1 // pred_check
      _
    $region23: #{tpu_custom_call.1} parent=1 // pred_check_branch
      %50 = sbr.rel (0) target = $region25
    $region24: #{tpu_custom_call.1} parent=1 // pred_region
      %51 = dma.done [#allocation6], 96
    $region25: #{tpu_custom_call.1} parent=1 // pred_fallthru
      _
    %v53 = vld [vmem:[#allocation2] sm:$0xff]
    %v54 = vld [vmem:[#allocation2 + $0x8] sm:$0xff]
    %v55 = vld [vmem:[#allocation2 + $0x10] sm:$0xff]
    %v56 = vld [vmem:[#allocation2 + $0x18] sm:$0xff]
    %v57 = vld [vmem:[#allocation2 + $0x20] sm:$0x3f]
    %v63 = vcombine.high %v53, %v53
    %v65 = vunpack.c.l.s4 1983009808
    %v66 = vunpack.c.0.s8 %v65
    %v67 = vlaneseq
    %v68 = vshrl.u32 %v67, 7
    %v69 = vsub.s32 %v66, %v68
    %v70 = vrot.slane %v53, %v69
    %v72 = vunpack.c.l.s4 1983009808
    %v73 = vunpack.c.0.s8 %v72
    %v74 = vlaneseq
    %v75 = vshrl.u32 %v74, 7
    %v76 = vsub.s32 %v73, %v75
    %v77 = vrot.slane %v63, %v76
    %v78 = vcombine.high %v70, %v70
    %v79 = vcombine.high %v77, %v77
    %v80 = vcombine.high %v54, %v54
    %v82 = vunpack.c.l.s4 1983009808
    %v83 = vunpack.c.0.s8 %v82
    %v84 = vlaneseq
    %v85 = vshrl.u32 %v84, 7
    %v86 = vsub.s32 %v83, %v85
    %v87 = vrot.slane %v54, %v86
    %v89 = vunpack.c.l.s4 1983009808
    %v90 = vunpack.c.0.s8 %v89
    %v91 = vlaneseq
    %v92 = vshrl.u32 %v91, 7
    %v93 = vsub.s32 %v90, %v92
    %v94 = vrot.slane %v80, %v93
    %v95 = vcombine.high %v87, %v87
    %v96 = vcombine.high %v94, %v94
    %v97 = vcombine.high %v55, %v55
    %v99 = vunpack.c.l.s4 1983009808
    %v100 = vunpack.c.0.s8 %v99
    %v101 = vlaneseq
    %v102 = vshrl.u32 %v101, 7
    %v103 = vsub.s32 %v100, %v102
    %v104 = vrot.slane %v55, %v103
    %v106 = vunpack.c.l.s4 1983009808
    %v107 = vunpack.c.0.s8 %v106
    %v108 = vlaneseq
    %v109 = vshrl.u32 %v108, 7
    %v110 = vsub.s32 %v107, %v109
    %v111 = vrot.slane %v97, %v110
    %v112 = vcombine.high %v104, %v104
    %v113 = vcombine.high %v111, %v111
    %v114 = vcombine.high %v56, %v56
    %v116 = vunpack.c.l.s4 1983009808
    %v117 = vunpack.c.0.s8 %v116
    %v118 = vlaneseq
    %v119 = vshrl.u32 %v118, 7
    %v120 = vsub.s32 %v117, %v119
    %v121 = vrot.slane %v56, %v120
    %v123 = vunpack.c.l.s4 1983009808
    %v124 = vunpack.c.0.s8 %v123
    %v125 = vlaneseq
    %v126 = vshrl.u32 %v125, 7
    %v127 = vsub.s32 %v124, %v126
    %v128 = vrot.slane %v114, %v127
    %v129 = vcombine.high %v121, %v121
    %v130 = vcombine.high %v128, %v128
    %v131 = vcombine.high %v57, %v57
    %v133 = vunpack.c.l.s4 1983009808
    %v134 = vunpack.c.0.s8 %v133
    %v135 = vlaneseq
    %v136 = vshrl.u32 %v135, 7
    %v137 = vsub.s32 %v134, %v136
    %v138 = vrot.slane %v57, %v137
    %v140 = vunpack.c.l.s4 1983009808
    %v141 = vunpack.c.0.s8 %v140
    %v142 = vlaneseq
    %v143 = vshrl.u32 %v142, 7
    %v144 = vsub.s32 %v141, %v143
    %v145 = vrot.slane %v131, %v144
    %v146 = vcombine.high %v138, %v138
    %v166 = vpack.c.bf16 %v70, %v70
    %v167 = vpack.c.bf16 %v78, %v78
    %v168 = vpack.c.bf16 %v77, %v77
    %v169 = vpack.c.bf16 %v79, %v79
    %v170 = vpack.c.bf16 %v87, %v87
    %v171 = vpack.c.bf16 %v95, %v95
    %v172 = vpack.c.bf16 %v94, %v94
    %v173 = vpack.c.bf16 %v96, %v96
    %v174 = vpack.c.bf16 %v104, %v104
    %v175 = vpack.c.bf16 %v112, %v112
    %v176 = vpack.c.bf16 %v111, %v111
    %v177 = vpack.c.bf16 %v113, %v113
    %v178 = vpack.c.bf16 %v121, %v121
    %v179 = vpack.c.bf16 %v129, %v129
    %v180 = vpack.c.bf16 %v128, %v128
    %v181 = vpack.c.bf16 %v130, %v130
    %v182 = vpack.c.bf16 %v138, %v138
    %v183 = vpack.c.bf16 %v146, %v146
    %v184 = vpack.c.bf16 %v145, %v145
    %v185 = vld [vmem:[#allocation5] sm:$0xff]
    %v186 = vld [vmem:[#allocation5 + $0x8] sm:$0xff]
    %v187 = vld [vmem:[#allocation5 + $0x10] sm:$0xff]
    %v188 = vld [vmem:[#allocation5 + $0x18] sm:$0xff]
    %v189 = vld [vmem:[#allocation5 + $0x20] sm:$0xff]
    %v190 = vld [vmem:[#allocation5 + $0x28] sm:$0xff]
    %v191 = vld [vmem:[#allocation5 + $0x30] sm:$0xff]
    %v192 = vld [vmem:[#allocation5 + $0x38] sm:$0xff]
    %v193 = vld [vmem:[#allocation5 + $0x40] sm:$0xff]
    %v194 = vld [vmem:[#allocation5 + $0x48] sm:$0xff]
    %v195 = vld [vmem:[#allocation5 + $0x50] sm:$0xff]
    %v196 = vld [vmem:[#allocation5 + $0x58] sm:$0xff]
    %v197 = vld [vmem:[#allocation5 + $0x60] sm:$0xff]
    %v198 = vld [vmem:[#allocation5 + $0x68] sm:$0xff]
    %v199 = vld [vmem:[#allocation5 + $0x70] sm:$0xff]
    %v200 = vld [vmem:[#allocation5 + $0x78] sm:$0xff]
    %v201 = vld [vmem:[#allocation5 + $0x80] sm:$0xff]
    %v202 = vld [vmem:[#allocation5 + $0x88] sm:$0xff]
    %v203 = vld [vmem:[#allocation5 + $0x90] sm:$0xff]
    %v204 = vld [vmem:[#allocation5 + $0x98] sm:$0xff]
    %v205 = vld [vmem:[#allocation5 + $0xa0] sm:$0xff]
    %v206 = vld [vmem:[#allocation5 + $0xa8] sm:$0xff]
    %v207 = vld [vmem:[#allocation5 + $0xb0] sm:$0xff]
    %v208 = vld [vmem:[#allocation5 + $0xb8] sm:$0xff]
    %v209 = vld [vmem:[#allocation5 + $0xc0] sm:$0xff]
    %v210 = vld [vmem:[#allocation5 + $0xc8] sm:$0xff]
    %v211 = vld [vmem:[#allocation5 + $0xd0] sm:$0xff]
    %v212 = vld [vmem:[#allocation5 + $0xd8] sm:$0xff]
    %v213 = vld [vmem:[#allocation5 + $0xe0] sm:$0xff]
    %v214 = vld [vmem:[#allocation5 + $0xe8] sm:$0xff]
    %v215 = vld [vmem:[#allocation5 + $0xf0] sm:$0xff]
    %v216 = vld [vmem:[#allocation5 + $0xf8] sm:$0xff]
    %v217 = vld [vmem:[#allocation5 + $0x100] sm:$0xff]
    %v218 = vld [vmem:[#allocation5 + $0x108] sm:$0xff]
    %v219 = vld [vmem:[#allocation5 + $0x110] sm:$0xff]
    %v220 = vld [vmem:[#allocation5 + $0x118] sm:$0xff]
    %v221 = vld [vmem:[#allocation5 + $0x120] sm:$0xff]
    %v222 = vld [vmem:[#allocation5 + $0x128] sm:$0xff]
    %v223 = vld [vmem:[#allocation5 + $0x130] sm:$0xff]
    %v224 = vld [vmem:[#allocation5 + $0x138] sm:$0xff]
    %v225 = vld [vmem:[#allocation5 + $0x140] sm:$0xff]
    %v226 = vld [vmem:[#allocation5 + $0x148] sm:$0xff]
    %v227 = vld [vmem:[#allocation5 + $0x150] sm:$0xff]
    %v228 = vld [vmem:[#allocation5 + $0x158] sm:$0xff]
    %v229 = vld [vmem:[#allocation5 + $0x160] sm:$0xff]
    %v230 = vld [vmem:[#allocation5 + $0x168] sm:$0xff]
    %v231 = vld [vmem:[#allocation5 + $0x170] sm:$0xff]
    %v232 = vld [vmem:[#allocation5 + $0x178] sm:$0xff]
    %v233 = vld [vmem:[#allocation5 + $0x180] sm:$0xff]
    %v234 = vld [vmem:[#allocation5 + $0x188] sm:$0xff]
    %v235 = vld [vmem:[#allocation5 + $0x190] sm:$0xff]
    %v236 = vld [vmem:[#allocation5 + $0x198] sm:$0xff]
    %v237 = vld [vmem:[#allocation5 + $0x1a0] sm:$0xff]
    %v238 = vld [vmem:[#allocation5 + $0x1a8] sm:$0xff]
    %v239 = vld [vmem:[#allocation5 + $0x1b0] sm:$0xff]
    %v240 = vld [vmem:[#allocation5 + $0x1b8] sm:$0xff]
    %v241 = vld [vmem:[#allocation5 + $0x1c0] sm:$0xff]
    %v242 = vld [vmem:[#allocation5 + $0x1c8] sm:$0xff]
    %v243 = vld [vmem:[#allocation5 + $0x1d0] sm:$0xff]
    %v244 = vld [vmem:[#allocation5 + $0x1d8] sm:$0xff]
    %v245 = vld [vmem:[#allocation5 + $0x1e0] sm:$0xff]
    %v246 = vld [vmem:[#allocation5 + $0x1e8] sm:$0xff]
    %v247 = vld [vmem:[#allocation5 + $0x1f0] sm:$0xff]
    %v248 = vld [vmem:[#allocation5 + $0x1f8] sm:$0xff]
    %v249 = vld [vmem:[#allocation5 + $0x200] sm:$0xff]
    %v250 = vld [vmem:[#allocation5 + $0x208] sm:$0xff]
    %v251 = vld [vmem:[#allocation5 + $0x210] sm:$0xff]
    %v252 = vld [vmem:[#allocation5 + $0x218] sm:$0xff]
    %v253 = vld [vmem:[#allocation5 + $0x220] sm:$0xff]
    %v254 = vld [vmem:[#allocation5 + $0x228] sm:$0xff]
    %v255 = vld [vmem:[#allocation5 + $0x230] sm:$0xff]
    %v256 = vld [vmem:[#allocation5 + $0x238] sm:$0xff]
    %v257 = vld [vmem:[#allocation5 + $0x240] sm:$0xff]
    %v258 = vld [vmem:[#allocation5 + $0x248] sm:$0xff]
    %v259 = vld [vmem:[#allocation5 + $0x250] sm:$0xff]
    %v260 = vld [vmem:[#allocation5 + $0x258] sm:$0xff]
    %v261 = vld [vmem:[#allocation5 + $0x260] sm:$0xff]
    %v262 = vld [vmem:[#allocation5 + $0x268] sm:$0xff]
    %v263 = vld [vmem:[#allocation5 + $0x270] sm:$0xff]
    %v264 = vld [vmem:[#allocation5 + $0x278] sm:$0xff]
    %v265 = vld [vmem:[#allocation5 + $0x280] sm:$0xff]
    %v266 = vld [vmem:[#allocation5 + $0x288] sm:$0xff]
    %v267 = vld [vmem:[#allocation5 + $0x290] sm:$0xff]
    %v268 = vld [vmem:[#allocation5 + $0x298] sm:$0xff]
    %v269 = vld [vmem:[#allocation5 + $0x2a0] sm:$0xff]
    %v270 = vld [vmem:[#allocation5 + $0x2a8] sm:$0xff]
    %v271 = vld [vmem:[#allocation5 + $0x2b0] sm:$0xff]
    %v272 = vld [vmem:[#allocation5 + $0x2b8] sm:$0xff]
    %v273 = vld [vmem:[#allocation5 + $0x2c0] sm:$0xff]
    %v274 = vld [vmem:[#allocation5 + $0x2c8] sm:$0xff]
    %v275 = vld [vmem:[#allocation5 + $0x2d0] sm:$0xff]
    %v276 = vld [vmem:[#allocation5 + $0x2d8] sm:$0xff]
    %v277 = vld [vmem:[#allocation5 + $0x2e0] sm:$0xff]
    %v278 = vld [vmem:[#allocation5 + $0x2e8] sm:$0xff]
    %v279 = vld [vmem:[#allocation5 + $0x2f0] sm:$0xff]
    %v280 = vld [vmem:[#allocation5 + $0x2f8] sm:$0xff]
    %v281 = vld [vmem:[#allocation5 + $0x300] sm:$0xff]
    %v282 = vld [vmem:[#allocation5 + $0x308] sm:$0xff]
    %v283 = vld [vmem:[#allocation5 + $0x310] sm:$0xff]
    %v284 = vld [vmem:[#allocation5 + $0x318] sm:$0xff]
    %v285 = vld [vmem:[#allocation5 + $0x320] sm:$0xff]
    %v286 = vld [vmem:[#allocation5 + $0x328] sm:$0xff]
    %v287 = vld [vmem:[#allocation5 + $0x330] sm:$0xff]
    %v288 = vld [vmem:[#allocation5 + $0x338] sm:$0xff]
    %v289 = vld [vmem:[#allocation5 + $0x340] sm:$0xff]
    %v290 = vld [vmem:[#allocation5 + $0x348] sm:$0xff]
    %v291 = vld [vmem:[#allocation5 + $0x350] sm:$0xff]
    %v292 = vld [vmem:[#allocation5 + $0x358] sm:$0xff]
    %v293 = vld [vmem:[#allocation5 + $0x360] sm:$0xff]
    %v294 = vld [vmem:[#allocation5 + $0x368] sm:$0xff]
    %v295 = vld [vmem:[#allocation5 + $0x370] sm:$0xff]
    %v296 = vld [vmem:[#allocation5 + $0x378] sm:$0xff]
    %v297 = vld [vmem:[#allocation5 + $0x380] sm:$0xff]
    %v298 = vld [vmem:[#allocation5 + $0x388] sm:$0xff]
    %v299 = vld [vmem:[#allocation5 + $0x390] sm:$0xff]
    %v300 = vld [vmem:[#allocation5 + $0x398] sm:$0xff]
    %v301 = vld [vmem:[#allocation5 + $0x3a0] sm:$0xff]
    %v302 = vld [vmem:[#allocation5 + $0x3a8] sm:$0xff]
    %v303 = vld [vmem:[#allocation5 + $0x3b0] sm:$0xff]
    %v304 = vld [vmem:[#allocation5 + $0x3b8] sm:$0xff]
    %v305 = vld [vmem:[#allocation5 + $0x3c0] sm:$0xff]
    %v306 = vld [vmem:[#allocation5 + $0x3c8] sm:$0xff]
    %v307 = vld [vmem:[#allocation5 + $0x3d0] sm:$0xff]
    %v308 = vld [vmem:[#allocation5 + $0x3d8] sm:$0xff]
    %v309 = vld [vmem:[#allocation5 + $0x3e0] sm:$0xff]
    %v310 = vld [vmem:[#allocation5 + $0x3e8] sm:$0xff]
    %v311 = vld [vmem:[#allocation5 + $0x3f0] sm:$0xff]
    %v312 = vld [vmem:[#allocation5 + $0x3f8] sm:$0xff]
    %v313 = vld [vmem:[#allocation5 + $0x400] sm:$0xff]
    %v314 = vld [vmem:[#allocation5 + $0x408] sm:$0xff]
    %v315 = vld [vmem:[#allocation5 + $0x410] sm:$0xff]
    %v316 = vld [vmem:[#allocation5 + $0x418] sm:$0xff]
    %v317 = vld [vmem:[#allocation5 + $0x420] sm:$0xff]
    %v318 = vld [vmem:[#allocation5 + $0x428] sm:$0xff]
    %v319 = vld [vmem:[#allocation5 + $0x430] sm:$0xff]
    %v320 = vld [vmem:[#allocation5 + $0x438] sm:$0xff]
    %v321 = vld [vmem:[#allocation5 + $0x440] sm:$0xff]
    %v322 = vld [vmem:[#allocation5 + $0x448] sm:$0xff]
    %v323 = vld [vmem:[#allocation5 + $0x450] sm:$0xff]
    %v324 = vld [vmem:[#allocation5 + $0x458] sm:$0xff]
    %v325 = vld [vmem:[#allocation5 + $0x460] sm:$0xff]
    %v326 = vld [vmem:[#allocation5 + $0x468] sm:$0xff]
    %v327 = vld [vmem:[#allocation5 + $0x470] sm:$0xff]
    %v328 = vld [vmem:[#allocation5 + $0x478] sm:$0xff]
    %v329 = vld [vmem:[#allocation5 + $0x480] sm:$0xff]
    %v330 = vld [vmem:[#allocation5 + $0x488] sm:$0xff]
    %v331 = vld [vmem:[#allocation5 + $0x490] sm:$0xff]
    %v332 = vld [vmem:[#allocation5 + $0x498] sm:$0xff]
    %v333 = vld [vmem:[#allocation5 + $0x4a0] sm:$0xff]
    %v334 = vld [vmem:[#allocation5 + $0x4a8] sm:$0xff]
    %v335 = vld [vmem:[#allocation5 + $0x4b0] sm:$0xff]
    %v336 = vld [vmem:[#allocation5 + $0x4b8] sm:$0xff]
    %v337 = vld [vmem:[#allocation5 + $0x4c0] sm:$0xff]
    %v338 = vld [vmem:[#allocation5 + $0x4c8] sm:$0xff]
    %v339 = vld [vmem:[#allocation5 + $0x4d0] sm:$0xff]
    %v340 = vld [vmem:[#allocation5 + $0x4d8] sm:$0xff]
    %v341 = vld [vmem:[#allocation5 + $0x4e0] sm:$0xff]
    %v342 = vld [vmem:[#allocation5 + $0x4e8] sm:$0xff]
    %v343 = vld [vmem:[#allocation5 + $0x4f0] sm:$0xff]
    %v344 = vld [vmem:[#allocation5 + $0x4f8] sm:$0xff]
    %v345 = vld [vmem:[#allocation5 + $0x500] sm:$0xff]
    %v346 = vld [vmem:[#allocation5 + $0x508] sm:$0xff]
    %v347 = vld [vmem:[#allocation5 + $0x510] sm:$0xff]
    %v348 = vld [vmem:[#allocation5 + $0x518] sm:$0xff]
    %v349 = vld [vmem:[#allocation5 + $0x520] sm:$0xff]
    %v350 = vld [vmem:[#allocation5 + $0x528] sm:$0xff]
    %v351 = vld [vmem:[#allocation5 + $0x530] sm:$0xff]
    %v352 = vld [vmem:[#allocation5 + $0x538] sm:$0xff]
    %v353 = vld [vmem:[#allocation5 + $0x540] sm:$0xff]
    %v354 = vld [vmem:[#allocation5 + $0x548] sm:$0xff]
    %v355 = vld [vmem:[#allocation5 + $0x550] sm:$0xff]
    %v356 = vld [vmem:[#allocation5 + $0x558] sm:$0xff]
    %v357 = vld [vmem:[#allocation5 + $0x560] sm:$0xff]
    %v358 = vld [vmem:[#allocation5 + $0x568] sm:$0xff]
    %v359 = vld [vmem:[#allocation5 + $0x570] sm:$0xff]
    %v360 = vld [vmem:[#allocation5 + $0x578] sm:$0xff]
    %v361 = vld [vmem:[#allocation5 + $0x580] sm:$0xff]
    %v362 = vld [vmem:[#allocation5 + $0x588] sm:$0xff]
    %v363 = vld [vmem:[#allocation5 + $0x590] sm:$0xff]
    %v364 = vld [vmem:[#allocation5 + $0x598] sm:$0xff]
    %v365 = vld [vmem:[#allocation5 + $0x5a0] sm:$0xff]
    %v366 = vld [vmem:[#allocation5 + $0x5a8] sm:$0xff]
    %v367 = vld [vmem:[#allocation5 + $0x5b0] sm:$0xff]
    %v368 = vld [vmem:[#allocation5 + $0x5b8] sm:$0xff]
    %v369 = vld [vmem:[#allocation5 + $0x5c0] sm:$0xff]
    %v370 = vld [vmem:[#allocation5 + $0x5c8] sm:$0xff]
    %v371 = vld [vmem:[#allocation5 + $0x5d0] sm:$0xff]
    %v372 = vld [vmem:[#allocation5 + $0x5d8] sm:$0xff]
    %v373 = vld [vmem:[#allocation5 + $0x5e0] sm:$0xff]
    %v374 = vld [vmem:[#allocation5 + $0x5e8] sm:$0xff]
    %v375 = vld [vmem:[#allocation5 + $0x5f0] sm:$0xff]
    %v376 = vld [vmem:[#allocation5 + $0x5f8] sm:$0xff]
    %v377 = vld [vmem:[#allocation5 + $0x600] sm:$0xff]
    %v378 = vld [vmem:[#allocation5 + $0x608] sm:$0xff]
    %v379 = vld [vmem:[#allocation5 + $0x610] sm:$0xff]
    %v380 = vld [vmem:[#allocation5 + $0x618] sm:$0xff]
    %v381 = vld [vmem:[#allocation5 + $0x620] sm:$0xff]
    %v382 = vld [vmem:[#allocation5 + $0x628] sm:$0xff]
    %v383 = vld [vmem:[#allocation5 + $0x630] sm:$0xff]
    %v384 = vld [vmem:[#allocation5 + $0x638] sm:$0xff]
    %v385 = vld [vmem:[#allocation5 + $0x640] sm:$0xff]
    %v386 = vld [vmem:[#allocation5 + $0x648] sm:$0xff]
    %v387 = vld [vmem:[#allocation5 + $0x650] sm:$0xff]
    %v388 = vld [vmem:[#allocation5 + $0x658] sm:$0xff]
    %v389 = vld [vmem:[#allocation5 + $0x660] sm:$0xff]
    %v390 = vld [vmem:[#allocation5 + $0x668] sm:$0xff]
    %v391 = vld [vmem:[#allocation5 + $0x670] sm:$0xff]
    %v392 = vld [vmem:[#allocation5 + $0x678] sm:$0xff]
    %v393 = vld [vmem:[#allocation5 + $0x680] sm:$0xff]
    %v394 = vld [vmem:[#allocation5 + $0x688] sm:$0xff]
    %v395 = vld [vmem:[#allocation5 + $0x690] sm:$0xff]
    %v396 = vld [vmem:[#allocation5 + $0x698] sm:$0xff]
    %v397 = vld [vmem:[#allocation5 + $0x6a0] sm:$0xff]
    %v398 = vld [vmem:[#allocation5 + $0x6a8] sm:$0xff]
    %v399 = vld [vmem:[#allocation5 + $0x6b0] sm:$0xff]
    %v400 = vld [vmem:[#allocation5 + $0x6b8] sm:$0xff]
    %v401 = vld [vmem:[#allocation5 + $0x6c0] sm:$0xff]
    %v402 = vld [vmem:[#allocation5 + $0x6c8] sm:$0xff]
    %v403 = vld [vmem:[#allocation5 + $0x6d0] sm:$0xff]
    %v404 = vld [vmem:[#allocation5 + $0x6d8] sm:$0xff]
    %v405 = vld [vmem:[#allocation5 + $0x6e0] sm:$0xff]
    %v406 = vld [vmem:[#allocation5 + $0x6e8] sm:$0xff]
    %v407 = vld [vmem:[#allocation5 + $0x6f0] sm:$0xff]
    %v408 = vld [vmem:[#allocation5 + $0x6f8] sm:$0xff]
    %v409 = vld [vmem:[#allocation5 + $0x700] sm:$0xff]
    %v410 = vld [vmem:[#allocation5 + $0x708] sm:$0xff]
    %v411 = vld [vmem:[#allocation5 + $0x710] sm:$0xff]
    %v412 = vld [vmem:[#allocation5 + $0x718] sm:$0xff]
    %v413 = vld [vmem:[#allocation5 + $0x720] sm:$0xff]
    %v414 = vld [vmem:[#allocation5 + $0x728] sm:$0xff]
    %v415 = vld [vmem:[#allocation5 + $0x730] sm:$0xff]
    %v416 = vld [vmem:[#allocation5 + $0x738] sm:$0xff]
    %v417 = vld [vmem:[#allocation5 + $0x740] sm:$0xff]
    %v418 = vld [vmem:[#allocation5 + $0x748] sm:$0xff]
    %v419 = vld [vmem:[#allocation5 + $0x750] sm:$0xff]
    %v420 = vld [vmem:[#allocation5 + $0x758] sm:$0xff]
    %v421 = vld [vmem:[#allocation5 + $0x760] sm:$0xff]
    %v422 = vld [vmem:[#allocation5 + $0x768] sm:$0xff]
    %v423 = vld [vmem:[#allocation5 + $0x770] sm:$0xff]
    %v424 = vld [vmem:[#allocation5 + $0x778] sm:$0xff]
    %v425 = vld [vmem:[#allocation5 + $0x780] sm:$0xff]
    %v426 = vld [vmem:[#allocation5 + $0x788] sm:$0xff]
    %v427 = vld [vmem:[#allocation5 + $0x790] sm:$0xff]
    %v428 = vld [vmem:[#allocation5 + $0x798] sm:$0xff]
    %v429 = vld [vmem:[#allocation5 + $0x7a0] sm:$0xff]
    %v430 = vld [vmem:[#allocation5 + $0x7a8] sm:$0xff]
    %v431 = vld [vmem:[#allocation5 + $0x7b0] sm:$0xff]
    %v432 = vld [vmem:[#allocation5 + $0x7b8] sm:$0xff]
    %v433 = vld [vmem:[#allocation5 + $0x7c0] sm:$0xff]
    %v434 = vld [vmem:[#allocation5 + $0x7c8] sm:$0xff]
    %v435 = vld [vmem:[#allocation5 + $0x7d0] sm:$0xff]
    %v436 = vld [vmem:[#allocation5 + $0x7d8] sm:$0xff]
    %v437 = vld [vmem:[#allocation5 + $0x7e0] sm:$0xff]
    %v438 = vld [vmem:[#allocation5 + $0x7e8] sm:$0xff]
    %v439 = vld [vmem:[#allocation5 + $0x7f0] sm:$0xff]
    %v440 = vld [vmem:[#allocation5 + $0x7f8] sm:$0xff]
    %v441 = vld [vmem:[#allocation5 + $0x800] sm:$0xff]
    %v442 = vld [vmem:[#allocation5 + $0x808] sm:$0xff]
    %v443 = vld [vmem:[#allocation5 + $0x810] sm:$0xff]
    %v444 = vld [vmem:[#allocation5 + $0x818] sm:$0xff]
    %v445 = vld [vmem:[#allocation5 + $0x820] sm:$0xff]
    %v446 = vld [vmem:[#allocation5 + $0x828] sm:$0xff]
    %v447 = vld [vmem:[#allocation5 + $0x830] sm:$0xff]
    %v448 = vld [vmem:[#allocation5 + $0x838] sm:$0xff]
    %v449 = vld [vmem:[#allocation5 + $0x840] sm:$0xff]
    %v450 = vld [vmem:[#allocation5 + $0x848] sm:$0xff]
    %v451 = vld [vmem:[#allocation5 + $0x850] sm:$0xff]
    %v452 = vld [vmem:[#allocation5 + $0x858] sm:$0xff]
    %v453 = vld [vmem:[#allocation5 + $0x860] sm:$0xff]
    %v454 = vld [vmem:[#allocation5 + $0x868] sm:$0xff]
    %v455 = vld [vmem:[#allocation5 + $0x870] sm:$0xff]
    %v456 = vld [vmem:[#allocation5 + $0x878] sm:$0xff]
    %v457 = vld [vmem:[#allocation5 + $0x880] sm:$0xff]
    %v458 = vld [vmem:[#allocation5 + $0x888] sm:$0xff]
    %v459 = vld [vmem:[#allocation5 + $0x890] sm:$0xff]
    %v460 = vld [vmem:[#allocation5 + $0x898] sm:$0xff]
    %v461 = vld [vmem:[#allocation5 + $0x8a0] sm:$0xff]
    %v462 = vld [vmem:[#allocation5 + $0x8a8] sm:$0xff]
    %v463 = vld [vmem:[#allocation5 + $0x8b0] sm:$0xff]
    %v464 = vld [vmem:[#allocation5 + $0x8b8] sm:$0xff]
    %v465 = vld [vmem:[#allocation5 + $0x8c0] sm:$0xff]
    %v466 = vld [vmem:[#allocation5 + $0x8c8] sm:$0xff]
    %v467 = vld [vmem:[#allocation5 + $0x8d0] sm:$0xff]
    %v468 = vld [vmem:[#allocation5 + $0x8d8] sm:$0xff]
    %v469 = vld [vmem:[#allocation5 + $0x8e0] sm:$0xff]
    %v470 = vld [vmem:[#allocation5 + $0x8e8] sm:$0xff]
    %v471 = vld [vmem:[#allocation5 + $0x8f0] sm:$0xff]
    %v472 = vld [vmem:[#allocation5 + $0x8f8] sm:$0xff]
    %v473 = vld [vmem:[#allocation5 + $0x900] sm:$0xff]
    %v474 = vld [vmem:[#allocation5 + $0x908] sm:$0xff]
    %v475 = vld [vmem:[#allocation5 + $0x910] sm:$0xff]
    %v476 = vld [vmem:[#allocation5 + $0x918] sm:$0xff]
    %v477 = vld [vmem:[#allocation5 + $0x920] sm:$0xff]
    %v478 = vld [vmem:[#allocation5 + $0x928] sm:$0xff]
    %v479 = vld [vmem:[#allocation5 + $0x930] sm:$0xff]
    %v480 = vld [vmem:[#allocation5 + $0x938] sm:$0xff]
    %v481 = vld [vmem:[#allocation5 + $0x940] sm:$0xff]
    %v482 = vld [vmem:[#allocation5 + $0x948] sm:$0xff]
    %v483 = vld [vmem:[#allocation5 + $0x950] sm:$0xff]
    %v484 = vld [vmem:[#allocation5 + $0x958] sm:$0xff]
    %v485 = vld [vmem:[#allocation5 + $0x960] sm:$0xff]
    %v486 = vld [vmem:[#allocation5 + $0x968] sm:$0xff]
    %v487 = vld [vmem:[#allocation5 + $0x970] sm:$0xff]
    %v488 = vld [vmem:[#allocation5 + $0x978] sm:$0xff]
    %v489 = vld [vmem:[#allocation5 + $0x980] sm:$0xff]
    %v490 = vld [vmem:[#allocation5 + $0x988] sm:$0xff]
    %v491 = vld [vmem:[#allocation5 + $0x990] sm:$0xff]
    %v492 = vld [vmem:[#allocation5 + $0x998] sm:$0xff]
    %v493 = vld [vmem:[#allocation5 + $0x9a0] sm:$0xff]
    %v494 = vld [vmem:[#allocation5 + $0x9a8] sm:$0xff]
    %v495 = vld [vmem:[#allocation5 + $0x9b0] sm:$0xff]
    %v496 = vld [vmem:[#allocation5 + $0x9b8] sm:$0xff]
    %v497 = vld [vmem:[#allocation5 + $0x9c0] sm:$0xff]
    %v498 = vld [vmem:[#allocation5 + $0x9c8] sm:$0xff]
    %v499 = vld [vmem:[#allocation5 + $0x9d0] sm:$0xff]
    %v500 = vld [vmem:[#allocation5 + $0x9d8] sm:$0xff]
    %v501 = vld [vmem:[#allocation5 + $0x9e0] sm:$0xff]
    %v502 = vld [vmem:[#allocation5 + $0x9e8] sm:$0xff]
    %v503 = vld [vmem:[#allocation5 + $0x9f0] sm:$0xff]
    %v504 = vld [vmem:[#allocation5 + $0x9f8] sm:$0xff]
    %v505 = vld [vmem:[#allocation5 + $0xa00] sm:$0xff]
    %v506 = vld [vmem:[#allocation5 + $0xa08] sm:$0xff]
    %v507 = vld [vmem:[#allocation5 + $0xa10] sm:$0xff]
    %v508 = vld [vmem:[#allocation5 + $0xa18] sm:$0xff]
    %v509 = vld [vmem:[#allocation5 + $0xa20] sm:$0xff]
    %v510 = vld [vmem:[#allocation5 + $0xa28] sm:$0xff]
    %v511 = vld [vmem:[#allocation5 + $0xa30] sm:$0xff]
    %v512 = vld [vmem:[#allocation5 + $0xa38] sm:$0xff]
    %v513 = vld [vmem:[#allocation5 + $0xa40] sm:$0xff]
    %v514 = vld [vmem:[#allocation5 + $0xa48] sm:$0xff]
    %v515 = vld [vmem:[#allocation5 + $0xa50] sm:$0xff]
    %v516 = vld [vmem:[#allocation5 + $0xa58] sm:$0xff]
    %v517 = vld [vmem:[#allocation5 + $0xa60] sm:$0xff]
    %v518 = vld [vmem:[#allocation5 + $0xa68] sm:$0xff]
    %v519 = vld [vmem:[#allocation5 + $0xa70] sm:$0xff]
    %v520 = vld [vmem:[#allocation5 + $0xa78] sm:$0xff]
    %v521 = vld [vmem:[#allocation5 + $0xa80] sm:$0xff]
    %v522 = vld [vmem:[#allocation5 + $0xa88] sm:$0xff]
    %v523 = vld [vmem:[#allocation5 + $0xa90] sm:$0xff]
    %v524 = vld [vmem:[#allocation5 + $0xa98] sm:$0xff]
    %v525 = vld [vmem:[#allocation5 + $0xaa0] sm:$0xff]
    %v526 = vld [vmem:[#allocation5 + $0xaa8] sm:$0xff]
    %v527 = vld [vmem:[#allocation5 + $0xab0] sm:$0xff]
    %v528 = vld [vmem:[#allocation5 + $0xab8] sm:$0xff]
    %v529 = vld [vmem:[#allocation5 + $0xac0] sm:$0xff]
    %v530 = vld [vmem:[#allocation5 + $0xac8] sm:$0xff]
    %v531 = vld [vmem:[#allocation5 + $0xad0] sm:$0xff]
    %v532 = vld [vmem:[#allocation5 + $0xad8] sm:$0xff]
    %v533 = vld [vmem:[#allocation5 + $0xae0] sm:$0xff]
    %v534 = vld [vmem:[#allocation5 + $0xae8] sm:$0xff]
    %v535 = vld [vmem:[#allocation5 + $0xaf0] sm:$0xff]
    %v536 = vld [vmem:[#allocation5 + $0xaf8] sm:$0xff]
    %v537 = vld [vmem:[#allocation5 + $0xb00] sm:$0xff]
    %v538 = vld [vmem:[#allocation5 + $0xb08] sm:$0xff]
    %v539 = vld [vmem:[#allocation5 + $0xb10] sm:$0xff]
    %v540 = vld [vmem:[#allocation5 + $0xb18] sm:$0xff]
    %v541 = vld [vmem:[#allocation5 + $0xb20] sm:$0xff]
    %v542 = vld [vmem:[#allocation5 + $0xb28] sm:$0xff]
    %v543 = vld [vmem:[#allocation5 + $0xb30] sm:$0xff]
    %v544 = vld [vmem:[#allocation5 + $0xb38] sm:$0xff]
    %v545 = vld [vmem:[#allocation5 + $0xb40] sm:$0xff]
    %v546 = vld [vmem:[#allocation5 + $0xb48] sm:$0xff]
    %v547 = vld [vmem:[#allocation5 + $0xb50] sm:$0xff]
    %v548 = vld [vmem:[#allocation5 + $0xb58] sm:$0xff]
    %v549 = vld [vmem:[#allocation5 + $0xb60] sm:$0xff]
    %v550 = vld [vmem:[#allocation5 + $0xb68] sm:$0xff]
    %v551 = vld [vmem:[#allocation5 + $0xb70] sm:$0xff]
    %v552 = vld [vmem:[#allocation5 + $0xb78] sm:$0xff]
    %v553 = vld [vmem:[#allocation5 + $0xb80] sm:$0xff]
    %v554 = vld [vmem:[#allocation5 + $0xb88] sm:$0xff]
    %v555 = vld [vmem:[#allocation5 + $0xb90] sm:$0xff]
    %v556 = vld [vmem:[#allocation5 + $0xb98] sm:$0xff]
    %v557 = vld [vmem:[#allocation5 + $0xba0] sm:$0xff]
    %v558 = vld [vmem:[#allocation5 + $0xba8] sm:$0xff]
    %v559 = vld [vmem:[#allocation5 + $0xbb0] sm:$0xff]
    %v560 = vld [vmem:[#allocation5 + $0xbb8] sm:$0xff]
    %v561 = vld [vmem:[#allocation5 + $0xbc0] sm:$0xff]
    %v562 = vld [vmem:[#allocation5 + $0xbc8] sm:$0xff]
    %v563 = vld [vmem:[#allocation5 + $0xbd0] sm:$0xff]
    %v564 = vld [vmem:[#allocation5 + $0xbd8] sm:$0xff]
    %v565 = vld [vmem:[#allocation5 + $0xbe0] sm:$0xff]
    %v566 = vld [vmem:[#allocation5 + $0xbe8] sm:$0xff]
    %v567 = vld [vmem:[#allocation5 + $0xbf0] sm:$0xff]
    %v568 = vld [vmem:[#allocation5 + $0xbf8] sm:$0xff]
    %v569 = vld [vmem:[#allocation5 + $0xc00] sm:$0xff]
    %v570 = vld [vmem:[#allocation5 + $0xc08] sm:$0xff]
    %v571 = vld [vmem:[#allocation5 + $0xc10] sm:$0xff]
    %v572 = vld [vmem:[#allocation5 + $0xc18] sm:$0xff]
    %v573 = vld [vmem:[#allocation5 + $0xc20] sm:$0xff]
    %v574 = vld [vmem:[#allocation5 + $0xc28] sm:$0xff]
    %v575 = vld [vmem:[#allocation5 + $0xc30] sm:$0xff]
    %v576 = vld [vmem:[#allocation5 + $0xc38] sm:$0xff]
    %v577 = vld [vmem:[#allocation5 + $0xc40] sm:$0xff]
    %v578 = vld [vmem:[#allocation5 + $0xc48] sm:$0xff]
    %v579 = vld [vmem:[#allocation5 + $0xc50] sm:$0xff]
    %v580 = vld [vmem:[#allocation5 + $0xc58] sm:$0xff]
    %v581 = vld [vmem:[#allocation5 + $0xc60] sm:$0xff]
    %v582 = vld [vmem:[#allocation5 + $0xc68] sm:$0xff]
    %v583 = vld [vmem:[#allocation5 + $0xc70] sm:$0xff]
    %v584 = vld [vmem:[#allocation5 + $0xc78] sm:$0xff]
    %v585 = vld [vmem:[#allocation5 + $0xc80] sm:$0xff]
    %v586 = vld [vmem:[#allocation5 + $0xc88] sm:$0xff]
    %v587 = vld [vmem:[#allocation5 + $0xc90] sm:$0xff]
    %v588 = vld [vmem:[#allocation5 + $0xc98] sm:$0xff]
    %v589 = vld [vmem:[#allocation5 + $0xca0] sm:$0xff]
    %v590 = vld [vmem:[#allocation5 + $0xca8] sm:$0xff]
    %v591 = vld [vmem:[#allocation5 + $0xcb0] sm:$0xff]
    %v592 = vld [vmem:[#allocation5 + $0xcb8] sm:$0xff]
    %v593 = vld [vmem:[#allocation5 + $0xcc0] sm:$0xff]
    %v594 = vld [vmem:[#allocation5 + $0xcc8] sm:$0xff]
    %v595 = vld [vmem:[#allocation5 + $0xcd0] sm:$0xff]
    %v596 = vld [vmem:[#allocation5 + $0xcd8] sm:$0xff]
    %v597 = vld [vmem:[#allocation5 + $0xce0] sm:$0xff]
    %v598 = vld [vmem:[#allocation5 + $0xce8] sm:$0xff]
    %v599 = vld [vmem:[#allocation5 + $0xcf0] sm:$0xff]
    %v600 = vld [vmem:[#allocation5 + $0xcf8] sm:$0xff]
    %v601 = vld [vmem:[#allocation5 + $0xd00] sm:$0xff]
    %v602 = vld [vmem:[#allocation5 + $0xd08] sm:$0xff]
    %v603 = vld [vmem:[#allocation5 + $0xd10] sm:$0xff]
    %v604 = vld [vmem:[#allocation5 + $0xd18] sm:$0xff]
    %v605 = vld [vmem:[#allocation5 + $0xd20] sm:$0xff]
    %v606 = vld [vmem:[#allocation5 + $0xd28] sm:$0xff]
    %v607 = vld [vmem:[#allocation5 + $0xd30] sm:$0xff]
    %v608 = vld [vmem:[#allocation5 + $0xd38] sm:$0xff]
    %v609 = vld [vmem:[#allocation5 + $0xd40] sm:$0xff]
    %v610 = vld [vmem:[#allocation5 + $0xd48] sm:$0xff]
    %v611 = vld [vmem:[#allocation5 + $0xd50] sm:$0xff]
    %v612 = vld [vmem:[#allocation5 + $0xd58] sm:$0xff]
    %v613 = vld [vmem:[#allocation5 + $0xd60] sm:$0xff]
    %v614 = vld [vmem:[#allocation5 + $0xd68] sm:$0xff]
    %v615 = vld [vmem:[#allocation5 + $0xd70] sm:$0xff]
    %v616 = vld [vmem:[#allocation5 + $0xd78] sm:$0xff]
    %v617 = vld [vmem:[#allocation5 + $0xd80] sm:$0xff]
    %v618 = vld [vmem:[#allocation5 + $0xd88] sm:$0xff]
    %v619 = vld [vmem:[#allocation5 + $0xd90] sm:$0xff]
    %v620 = vld [vmem:[#allocation5 + $0xd98] sm:$0xff]
    %v621 = vld [vmem:[#allocation5 + $0xda0] sm:$0xff]
    %v622 = vld [vmem:[#allocation5 + $0xda8] sm:$0xff]
    %v623 = vld [vmem:[#allocation5 + $0xdb0] sm:$0xff]
    %v624 = vld [vmem:[#allocation5 + $0xdb8] sm:$0xff]
    %v625 = vld [vmem:[#allocation5 + $0xdc0] sm:$0xff]
    %v626 = vld [vmem:[#allocation5 + $0xdc8] sm:$0xff]
    %v627 = vld [vmem:[#allocation5 + $0xdd0] sm:$0xff]
    %v628 = vld [vmem:[#allocation5 + $0xdd8] sm:$0xff]
    %v629 = vld [vmem:[#allocation5 + $0xde0] sm:$0xff]
    %v630 = vld [vmem:[#allocation5 + $0xde8] sm:$0xff]
    %v631 = vld [vmem:[#allocation5 + $0xdf0] sm:$0xff]
    %v632 = vld [vmem:[#allocation5 + $0xdf8] sm:$0xff]
    %v633 = vld [vmem:[#allocation5 + $0xe00] sm:$0xff]
    %v634 = vld [vmem:[#allocation5 + $0xe08] sm:$0xff]
    %v635 = vld [vmem:[#allocation5 + $0xe10] sm:$0xff]
    %v636 = vld [vmem:[#allocation5 + $0xe18] sm:$0xff]
    %v637 = vld [vmem:[#allocation5 + $0xe20] sm:$0xff]
    %v638 = vld [vmem:[#allocation5 + $0xe28] sm:$0xff]
    %v639 = vld [vmem:[#allocation5 + $0xe30] sm:$0xff]
    %v640 = vld [vmem:[#allocation5 + $0xe38] sm:$0xff]
    %v641 = vld [vmem:[#allocation5 + $0xe40] sm:$0xff]
    %v642 = vld [vmem:[#allocation5 + $0xe48] sm:$0xff]
    %v643 = vld [vmem:[#allocation5 + $0xe50] sm:$0xff]
    %v644 = vld [vmem:[#allocation5 + $0xe58] sm:$0xff]
    %v645 = vld [vmem:[#allocation5 + $0xe60] sm:$0xff]
    %v646 = vld [vmem:[#allocation5 + $0xe68] sm:$0xff]
    %v647 = vld [vmem:[#allocation5 + $0xe70] sm:$0xff]
    %v648 = vld [vmem:[#allocation5 + $0xe78] sm:$0xff]
    %v649 = vld [vmem:[#allocation5 + $0xe80] sm:$0xff]
    %v650 = vld [vmem:[#allocation5 + $0xe88] sm:$0xff]
    %v651 = vld [vmem:[#allocation5 + $0xe90] sm:$0xff]
    %v652 = vld [vmem:[#allocation5 + $0xe98] sm:$0xff]
    %v653 = vld [vmem:[#allocation5 + $0xea0] sm:$0xff]
    %v654 = vld [vmem:[#allocation5 + $0xea8] sm:$0xff]
    %v655 = vld [vmem:[#allocation5 + $0xeb0] sm:$0xff]
    %v656 = vld [vmem:[#allocation5 + $0xeb8] sm:$0xff]
    %v657 = vld [vmem:[#allocation5 + $0xec0] sm:$0xff]
    %v658 = vld [vmem:[#allocation5 + $0xec8] sm:$0xff]
    %v659 = vld [vmem:[#allocation5 + $0xed0] sm:$0xff]
    %v660 = vld [vmem:[#allocation5 + $0xed8] sm:$0xff]
    %v661 = vld [vmem:[#allocation5 + $0xee0] sm:$0xff]
    %v662 = vld [vmem:[#allocation5 + $0xee8] sm:$0xff]
    %v663 = vld [vmem:[#allocation5 + $0xef0] sm:$0xff]
    %v664 = vld [vmem:[#allocation5 + $0xef8] sm:$0xff]
    %v665 = vld [vmem:[#allocation5 + $0xf00] sm:$0xff]
    %v666 = vld [vmem:[#allocation5 + $0xf08] sm:$0xff]
    %v667 = vld [vmem:[#allocation5 + $0xf10] sm:$0xff]
    %v668 = vld [vmem:[#allocation5 + $0xf18] sm:$0xff]
    %v669 = vld [vmem:[#allocation5 + $0xf20] sm:$0xff]
    %v670 = vld [vmem:[#allocation5 + $0xf28] sm:$0xff]
    %v671 = vld [vmem:[#allocation5 + $0xf30] sm:$0xff]
    %v672 = vld [vmem:[#allocation5 + $0xf38] sm:$0xff]
    %v673 = vld [vmem:[#allocation5 + $0xf40] sm:$0xff]
    %v674 = vld [vmem:[#allocation5 + $0xf48] sm:$0xff]
    %v675 = vld [vmem:[#allocation5 + $0xf50] sm:$0xff]
    %v676 = vld [vmem:[#allocation5 + $0xf58] sm:$0xff]
    %v677 = vld [vmem:[#allocation5 + $0xf60] sm:$0xff]
    %v678 = vld [vmem:[#allocation5 + $0xf68] sm:$0xff]
    %v679 = vld [vmem:[#allocation5 + $0xf70] sm:$0xff]
    %v680 = vld [vmem:[#allocation5 + $0xf78] sm:$0xff]
    %v681 = vld [vmem:[#allocation5 + $0xf80] sm:$0xff]
    %v682 = vld [vmem:[#allocation5 + $0xf88] sm:$0xff]
    %v683 = vld [vmem:[#allocation5 + $0xf90] sm:$0xff]
    %v684 = vld [vmem:[#allocation5 + $0xf98] sm:$0xff]
    %v685 = vld [vmem:[#allocation5 + $0xfa0] sm:$0xff]
    %v686 = vld [vmem:[#allocation5 + $0xfa8] sm:$0xff]
    %v687 = vld [vmem:[#allocation5 + $0xfb0] sm:$0xff]
    %v688 = vld [vmem:[#allocation5 + $0xfb8] sm:$0xff]
    %v689 = vld [vmem:[#allocation5 + $0xfc0] sm:$0xff]
    %v690 = vld [vmem:[#allocation5 + $0xfc8] sm:$0xff]
    %v691 = vld [vmem:[#allocation5 + $0xfd0] sm:$0xff]
    %v692 = vld [vmem:[#allocation5 + $0xfd8] sm:$0xff]
    %v693 = vld [vmem:[#allocation5 + $0xfe0] sm:$0xff]
    %v694 = vld [vmem:[#allocation5 + $0xfe8] sm:$0xff]
    %v695 = vld [vmem:[#allocation5 + $0xff0] sm:$0xff]
    %v696 = vld [vmem:[#allocation5 + $0xff8] sm:$0xff]
    %v697 = vld [vmem:[#allocation5 + $0x1000] sm:$0xff]
    %v698 = vld [vmem:[#allocation5 + $0x1008] sm:$0xff]
    %v699 = vld [vmem:[#allocation5 + $0x1010] sm:$0xff]
    %v700 = vld [vmem:[#allocation5 + $0x1018] sm:$0xff]
    %v701 = vld [vmem:[#allocation5 + $0x1020] sm:$0xff]
    %v702 = vld [vmem:[#allocation5 + $0x1028] sm:$0xff]
    %v703 = vld [vmem:[#allocation5 + $0x1030] sm:$0xff]
    %v704 = vld [vmem:[#allocation5 + $0x1038] sm:$0xff]
    %v705 = vld [vmem:[#allocation5 + $0x1040] sm:$0xff]
    %v706 = vld [vmem:[#allocation5 + $0x1048] sm:$0xff]
    %v707 = vld [vmem:[#allocation5 + $0x1050] sm:$0xff]
    %v708 = vld [vmem:[#allocation5 + $0x1058] sm:$0xff]
    %v709 = vld [vmem:[#allocation5 + $0x1060] sm:$0xff]
    %v710 = vld [vmem:[#allocation5 + $0x1068] sm:$0xff]
    %v711 = vld [vmem:[#allocation5 + $0x1070] sm:$0xff]
    %v712 = vld [vmem:[#allocation5 + $0x1078] sm:$0xff]
    %v713 = vld [vmem:[#allocation5 + $0x1080] sm:$0xff]
    %v714 = vld [vmem:[#allocation5 + $0x1088] sm:$0xff]
    %v715 = vld [vmem:[#allocation5 + $0x1090] sm:$0xff]
    %v716 = vld [vmem:[#allocation5 + $0x1098] sm:$0xff]
    %v717 = vld [vmem:[#allocation5 + $0x10a0] sm:$0xff]
    %v718 = vld [vmem:[#allocation5 + $0x10a8] sm:$0xff]
    %v719 = vld [vmem:[#allocation5 + $0x10b0] sm:$0xff]
    %v720 = vld [vmem:[#allocation5 + $0x10b8] sm:$0xff]
    %v721 = vld [vmem:[#allocation5 + $0x10c0] sm:$0xff]
    %v722 = vld [vmem:[#allocation5 + $0x10c8] sm:$0xff]
    %v723 = vld [vmem:[#allocation5 + $0x10d0] sm:$0xff]
    %v724 = vld [vmem:[#allocation5 + $0x10d8] sm:$0xff]
    %v725 = vld [vmem:[#allocation5 + $0x10e0] sm:$0xff]
    %v726 = vld [vmem:[#allocation5 + $0x10e8] sm:$0xff]
    %v727 = vld [vmem:[#allocation5 + $0x10f0] sm:$0xff]
    %v728 = vld [vmem:[#allocation5 + $0x10f8] sm:$0xff]
    %v729 = vld [vmem:[#allocation5 + $0x1100] sm:$0xff]
    %v730 = vld [vmem:[#allocation5 + $0x1108] sm:$0xff]
    %v731 = vld [vmem:[#allocation5 + $0x1110] sm:$0xff]
    %v732 = vld [vmem:[#allocation5 + $0x1118] sm:$0xff]
    %v733 = vld [vmem:[#allocation5 + $0x1120] sm:$0xff]
    %v734 = vld [vmem:[#allocation5 + $0x1128] sm:$0xff]
    %v735 = vld [vmem:[#allocation5 + $0x1130] sm:$0xff]
    %v736 = vld [vmem:[#allocation5 + $0x1138] sm:$0xff]
    %v737 = vld [vmem:[#allocation5 + $0x1140] sm:$0xff]
    %v738 = vld [vmem:[#allocation5 + $0x1148] sm:$0xff]
    %v739 = vld [vmem:[#allocation5 + $0x1150] sm:$0xff]
    %v740 = vld [vmem:[#allocation5 + $0x1158] sm:$0xff]
    %v741 = vld [vmem:[#allocation5 + $0x1160] sm:$0xff]
    %v742 = vld [vmem:[#allocation5 + $0x1168] sm:$0xff]
    %v743 = vld [vmem:[#allocation5 + $0x1170] sm:$0xff]
    %v744 = vld [vmem:[#allocation5 + $0x1178] sm:$0xff]
    %v745 = vld [vmem:[#allocation5 + $0x1180] sm:$0xff]
    %v746 = vld [vmem:[#allocation5 + $0x1188] sm:$0xff]
    %v747 = vld [vmem:[#allocation5 + $0x1190] sm:$0xff]
    %v748 = vld [vmem:[#allocation5 + $0x1198] sm:$0xff]
    %v749 = vld [vmem:[#allocation5 + $0x11a0] sm:$0xff]
    %v750 = vld [vmem:[#allocation5 + $0x11a8] sm:$0xff]
    %v751 = vld [vmem:[#allocation5 + $0x11b0] sm:$0xff]
    %v752 = vld [vmem:[#allocation5 + $0x11b8] sm:$0xff]
    %v753 = vld [vmem:[#allocation5 + $0x11c0] sm:$0xff]
    %v754 = vld [vmem:[#allocation5 + $0x11c8] sm:$0xff]
    %v755 = vld [vmem:[#allocation5 + $0x11d0] sm:$0xff]
    %v756 = vld [vmem:[#allocation5 + $0x11d8] sm:$0xff]
    %v757 = vld [vmem:[#allocation5 + $0x11e0] sm:$0xff]
    %v758 = vld [vmem:[#allocation5 + $0x11e8] sm:$0xff]
    %v759 = vld [vmem:[#allocation5 + $0x11f0] sm:$0xff]
    %v760 = vld [vmem:[#allocation5 + $0x11f8] sm:$0xff]
    %v761 = vld [vmem:[#allocation5 + $0x1200] sm:$0xff]
    %v762 = vld [vmem:[#allocation5 + $0x1208] sm:$0xff]
    %v763 = vld [vmem:[#allocation5 + $0x1210] sm:$0xff]
    %v764 = vld [vmem:[#allocation5 + $0x1218] sm:$0xff]
    %v765 = vld [vmem:[#allocation5 + $0x1220] sm:$0xff]
    %v766 = vld [vmem:[#allocation5 + $0x1228] sm:$0xff]
    %v767 = vld [vmem:[#allocation5 + $0x1230] sm:$0xff]
    %v768 = vld [vmem:[#allocation5 + $0x1238] sm:$0xff]
    %v769 = vld [vmem:[#allocation5 + $0x1240] sm:$0xff]
    %v770 = vld [vmem:[#allocation5 + $0x1248] sm:$0xff]
    %v771 = vld [vmem:[#allocation5 + $0x1250] sm:$0xff]
    %v772 = vld [vmem:[#allocation5 + $0x1258] sm:$0xff]
    %v773 = vld [vmem:[#allocation5 + $0x1260] sm:$0xff]
    %v774 = vld [vmem:[#allocation5 + $0x1268] sm:$0xff]
    %v775 = vld [vmem:[#allocation5 + $0x1270] sm:$0xff]
    %v776 = vld [vmem:[#allocation5 + $0x1278] sm:$0xff]
    %v777 = vld [vmem:[#allocation5 + $0x1280] sm:$0xff]
    %v778 = vld [vmem:[#allocation5 + $0x1288] sm:$0xff]
    %v779 = vld [vmem:[#allocation5 + $0x1290] sm:$0xff]
    %v780 = vld [vmem:[#allocation5 + $0x1298] sm:$0xff]
    %v781 = vld [vmem:[#allocation5 + $0x12a0] sm:$0xff]
    %v782 = vld [vmem:[#allocation5 + $0x12a8] sm:$0xff]
    %v783 = vld [vmem:[#allocation5 + $0x12b0] sm:$0xff]
    %v784 = vld [vmem:[#allocation5 + $0x12b8] sm:$0xff]
    %v785 = vld [vmem:[#allocation5 + $0x12c0] sm:$0xff]
    %v786 = vld [vmem:[#allocation5 + $0x12c8] sm:$0xff]
    %v787 = vld [vmem:[#allocation5 + $0x12d0] sm:$0xff]
    %v788 = vld [vmem:[#allocation5 + $0x12d8] sm:$0xff]
    %v789 = vld [vmem:[#allocation5 + $0x12e0] sm:$0xff]
    %v790 = vld [vmem:[#allocation5 + $0x12e8] sm:$0xff]
    %v791 = vld [vmem:[#allocation5 + $0x12f0] sm:$0xff]
    %v792 = vld [vmem:[#allocation5 + $0x12f8] sm:$0xff]
    %v793 = vld [vmem:[#allocation5 + $0x1300] sm:$0xff]
    %v794 = vld [vmem:[#allocation5 + $0x1308] sm:$0xff]
    %v795 = vld [vmem:[#allocation5 + $0x1310] sm:$0xff]
    %v796 = vld [vmem:[#allocation5 + $0x1318] sm:$0xff]
    %v797 = vld [vmem:[#allocation5 + $0x1320] sm:$0xff]
    %v798 = vld [vmem:[#allocation5 + $0x1328] sm:$0xff]
    %v799 = vld [vmem:[#allocation5 + $0x1330] sm:$0xff]
    %v800 = vld [vmem:[#allocation5 + $0x1338] sm:$0xff]
    %v801 = vld [vmem:[#allocation5 + $0x1340] sm:$0xff]
    %v802 = vld [vmem:[#allocation5 + $0x1348] sm:$0xff]
    %v803 = vld [vmem:[#allocation5 + $0x1350] sm:$0xff]
    %v804 = vld [vmem:[#allocation5 + $0x1358] sm:$0xff]
    %v805 = vld [vmem:[#allocation5 + $0x1360] sm:$0xff]
    %v806 = vld [vmem:[#allocation5 + $0x1368] sm:$0xff]
    %v807 = vld [vmem:[#allocation5 + $0x1370] sm:$0xff]
    %v808 = vld [vmem:[#allocation5 + $0x1378] sm:$0xff]
    %v809 = vld [vmem:[#allocation5 + $0x1380] sm:$0xff]
    %v810 = vld [vmem:[#allocation5 + $0x1388] sm:$0xff]
    %v811 = vld [vmem:[#allocation5 + $0x1390] sm:$0xff]
    %v812 = vld [vmem:[#allocation5 + $0x1398] sm:$0xff]
    %v813 = vld [vmem:[#allocation5 + $0x13a0] sm:$0xff]
    %v814 = vld [vmem:[#allocation5 + $0x13a8] sm:$0xff]
    %v815 = vld [vmem:[#allocation5 + $0x13b0] sm:$0xff]
    %v816 = vld [vmem:[#allocation5 + $0x13b8] sm:$0xff]
    %v817 = vld [vmem:[#allocation5 + $0x13c0] sm:$0xff]
    %v818 = vld [vmem:[#allocation5 + $0x13c8] sm:$0xff]
    %v819 = vld [vmem:[#allocation5 + $0x13d0] sm:$0xff]
    %v820 = vld [vmem:[#allocation5 + $0x13d8] sm:$0xff]
    %v821 = vld [vmem:[#allocation5 + $0x13e0] sm:$0xff]
    %v822 = vld [vmem:[#allocation5 + $0x13e8] sm:$0xff]
    %v823 = vld [vmem:[#allocation5 + $0x13f0] sm:$0xff]
    %v824 = vld [vmem:[#allocation5 + $0x13f8] sm:$0xff]
    %v825 = vld [vmem:[#allocation5 + $0x1400] sm:$0xff]
    %v826 = vld [vmem:[#allocation5 + $0x1408] sm:$0xff]
    %v827 = vld [vmem:[#allocation5 + $0x1410] sm:$0xff]
    %v828 = vld [vmem:[#allocation5 + $0x1418] sm:$0xff]
    %v829 = vld [vmem:[#allocation5 + $0x1420] sm:$0xff]
    %v830 = vld [vmem:[#allocation5 + $0x1428] sm:$0xff]
    %v831 = vld [vmem:[#allocation5 + $0x1430] sm:$0xff]
    %v832 = vld [vmem:[#allocation5 + $0x1438] sm:$0xff]
    %v833 = vld [vmem:[#allocation5 + $0x1440] sm:$0xff]
    %v834 = vld [vmem:[#allocation5 + $0x1448] sm:$0xff]
    %v835 = vld [vmem:[#allocation5 + $0x1450] sm:$0xff]
    %v836 = vld [vmem:[#allocation5 + $0x1458] sm:$0xff]
    %v837 = vld [vmem:[#allocation5 + $0x1460] sm:$0xff]
    %v838 = vld [vmem:[#allocation5 + $0x1468] sm:$0xff]
    %v839 = vld [vmem:[#allocation5 + $0x1470] sm:$0xff]
    %v840 = vld [vmem:[#allocation5 + $0x1478] sm:$0xff]
    %v841 = vld [vmem:[#allocation5 + $0x1480] sm:$0xff]
    %v842 = vld [vmem:[#allocation5 + $0x1488] sm:$0xff]
    %v843 = vld [vmem:[#allocation5 + $0x1490] sm:$0xff]
    %v844 = vld [vmem:[#allocation5 + $0x1498] sm:$0xff]
    %v845 = vld [vmem:[#allocation5 + $0x14a0] sm:$0xff]
    %v846 = vld [vmem:[#allocation5 + $0x14a8] sm:$0xff]
    %v847 = vld [vmem:[#allocation5 + $0x14b0] sm:$0xff]
    %v848 = vld [vmem:[#allocation5 + $0x14b8] sm:$0xff]
    %v849 = vld [vmem:[#allocation5 + $0x14c0] sm:$0xff]
    %v850 = vld [vmem:[#allocation5 + $0x14c8] sm:$0xff]
    %v851 = vld [vmem:[#allocation5 + $0x14d0] sm:$0xff]
    %v852 = vld [vmem:[#allocation5 + $0x14d8] sm:$0xff]
    %v853 = vld [vmem:[#allocation5 + $0x14e0] sm:$0xff]
    %v854 = vld [vmem:[#allocation5 + $0x14e8] sm:$0xff]
    %v855 = vld [vmem:[#allocation5 + $0x14f0] sm:$0xff]
    %v856 = vld [vmem:[#allocation5 + $0x14f8] sm:$0xff]
    %v857 = vld [vmem:[#allocation5 + $0x1500] sm:$0xff]
    %v858 = vld [vmem:[#allocation5 + $0x1508] sm:$0xff]
    %v859 = vld [vmem:[#allocation5 + $0x1510] sm:$0xff]
    %v860 = vld [vmem:[#allocation5 + $0x1518] sm:$0xff]
    %v861 = vld [vmem:[#allocation5 + $0x1520] sm:$0xff]
    %v862 = vld [vmem:[#allocation5 + $0x1528] sm:$0xff]
    %v863 = vld [vmem:[#allocation5 + $0x1530] sm:$0xff]
    %v864 = vld [vmem:[#allocation5 + $0x1538] sm:$0xff]
    %v865 = vld [vmem:[#allocation5 + $0x1540] sm:$0xff]
    %v866 = vld [vmem:[#allocation5 + $0x1548] sm:$0xff]
    %v867 = vld [vmem:[#allocation5 + $0x1550] sm:$0xff]
    %v868 = vld [vmem:[#allocation5 + $0x1558] sm:$0xff]
    %v869 = vld [vmem:[#allocation5 + $0x1560] sm:$0xff]
    %v870 = vld [vmem:[#allocation5 + $0x1568] sm:$0xff]
    %v871 = vld [vmem:[#allocation5 + $0x1570] sm:$0xff]
    %v872 = vld [vmem:[#allocation5 + $0x1578] sm:$0xff]
    %v873 = vld [vmem:[#allocation5 + $0x1580] sm:$0xff]
    %v874 = vld [vmem:[#allocation5 + $0x1588] sm:$0xff]
    %v875 = vld [vmem:[#allocation5 + $0x1590] sm:$0xff]
    %v876 = vld [vmem:[#allocation5 + $0x1598] sm:$0xff]
    %v877 = vld [vmem:[#allocation5 + $0x15a0] sm:$0xff]
    %v878 = vld [vmem:[#allocation5 + $0x15a8] sm:$0xff]
    %v879 = vld [vmem:[#allocation5 + $0x15b0] sm:$0xff]
    %v880 = vld [vmem:[#allocation5 + $0x15b8] sm:$0xff]
    %v881 = vld [vmem:[#allocation5 + $0x15c0] sm:$0xff]
    %v882 = vld [vmem:[#allocation5 + $0x15c8] sm:$0xff]
    %v883 = vld [vmem:[#allocation5 + $0x15d0] sm:$0xff]
    %v884 = vld [vmem:[#allocation5 + $0x15d8] sm:$0xff]
    %v885 = vld [vmem:[#allocation5 + $0x15e0] sm:$0xff]
    %v886 = vld [vmem:[#allocation5 + $0x15e8] sm:$0xff]
    %v887 = vld [vmem:[#allocation5 + $0x15f0] sm:$0xff]
    %v888 = vld [vmem:[#allocation5 + $0x15f8] sm:$0xff]
    %v889 = vld [vmem:[#allocation5 + $0x1600] sm:$0xff]
    %v890 = vld [vmem:[#allocation5 + $0x1608] sm:$0xff]
    %v891 = vld [vmem:[#allocation5 + $0x1610] sm:$0xff]
    %v892 = vld [vmem:[#allocation5 + $0x1618] sm:$0xff]
    %v893 = vld [vmem:[#allocation5 + $0x1620] sm:$0xff]
    %v894 = vld [vmem:[#allocation5 + $0x1628] sm:$0xff]
    %v895 = vld [vmem:[#allocation5 + $0x1630] sm:$0xff]
    %v896 = vld [vmem:[#allocation5 + $0x1638] sm:$0xff]
    %v897 = vld [vmem:[#allocation5 + $0x1640] sm:$0xff]
    %v898 = vld [vmem:[#allocation5 + $0x1648] sm:$0xff]
    %v899 = vld [vmem:[#allocation5 + $0x1650] sm:$0xff]
    %v900 = vld [vmem:[#allocation5 + $0x1658] sm:$0xff]
    %v901 = vld [vmem:[#allocation5 + $0x1660] sm:$0xff]
    %v902 = vld [vmem:[#allocation5 + $0x1668] sm:$0xff]
    %v903 = vld [vmem:[#allocation5 + $0x1670] sm:$0xff]
    %v904 = vld [vmem:[#allocation5 + $0x1678] sm:$0xff]
    %v905 = vld [vmem:[#allocation5 + $0x1680] sm:$0xff]
    %v906 = vld [vmem:[#allocation5 + $0x1688] sm:$0xff]
    %v907 = vld [vmem:[#allocation5 + $0x1690] sm:$0xff]
    %v908 = vld [vmem:[#allocation5 + $0x1698] sm:$0xff]
    %v909 = vld [vmem:[#allocation5 + $0x16a0] sm:$0xff]
    %v910 = vld [vmem:[#allocation5 + $0x16a8] sm:$0xff]
    %v911 = vld [vmem:[#allocation5 + $0x16b0] sm:$0xff]
    %v912 = vld [vmem:[#allocation5 + $0x16b8] sm:$0xff]
    %v913 = vld [vmem:[#allocation5 + $0x16c0] sm:$0xff]
    %v914 = vld [vmem:[#allocation5 + $0x16c8] sm:$0xff]
    %v915 = vld [vmem:[#allocation5 + $0x16d0] sm:$0xff]
    %v916 = vld [vmem:[#allocation5 + $0x16d8] sm:$0xff]
    %v917 = vld [vmem:[#allocation5 + $0x16e0] sm:$0xff]
    %v918 = vld [vmem:[#allocation5 + $0x16e8] sm:$0xff]
    %v919 = vld [vmem:[#allocation5 + $0x16f0] sm:$0xff]
    %v920 = vld [vmem:[#allocation5 + $0x16f8] sm:$0xff]
    %v921 = vld [vmem:[#allocation5 + $0x1700] sm:$0xff]
    %v922 = vld [vmem:[#allocation5 + $0x1708] sm:$0xff]
    %v923 = vld [vmem:[#allocation5 + $0x1710] sm:$0xff]
    %v924 = vld [vmem:[#allocation5 + $0x1718] sm:$0xff]
    %v925 = vld [vmem:[#allocation5 + $0x1720] sm:$0xff]
    %v926 = vld [vmem:[#allocation5 + $0x1728] sm:$0xff]
    %v927 = vld [vmem:[#allocation5 + $0x1730] sm:$0xff]
    %v928 = vld [vmem:[#allocation5 + $0x1738] sm:$0xff]
    %v929 = vld [vmem:[#allocation5 + $0x1740] sm:$0xff]
    %v930 = vld [vmem:[#allocation5 + $0x1748] sm:$0xff]
    %v931 = vld [vmem:[#allocation5 + $0x1750] sm:$0xff]
    %v932 = vld [vmem:[#allocation5 + $0x1758] sm:$0xff]
    %v933 = vld [vmem:[#allocation5 + $0x1760] sm:$0xff]
    %v934 = vld [vmem:[#allocation5 + $0x1768] sm:$0xff]
    %v935 = vld [vmem:[#allocation5 + $0x1770] sm:$0xff]
    %v936 = vld [vmem:[#allocation5 + $0x1778] sm:$0xff]
    %v937 = vld [vmem:[#allocation5 + $0x1780] sm:$0xff]
    %v938 = vld [vmem:[#allocation5 + $0x1788] sm:$0xff]
    %v939 = vld [vmem:[#allocation5 + $0x1790] sm:$0xff]
    %v940 = vld [vmem:[#allocation5 + $0x1798] sm:$0xff]
    %v941 = vld [vmem:[#allocation5 + $0x17a0] sm:$0xff]
    %v942 = vld [vmem:[#allocation5 + $0x17a8] sm:$0xff]
    %v943 = vld [vmem:[#allocation5 + $0x17b0] sm:$0xff]
    %v944 = vld [vmem:[#allocation5 + $0x17b8] sm:$0xff]
    %v945 = vld [vmem:[#allocation5 + $0x17c0] sm:$0xff]
    %v946 = vld [vmem:[#allocation5 + $0x17c8] sm:$0xff]
    %v947 = vld [vmem:[#allocation5 + $0x17d0] sm:$0xff]
    %v948 = vld [vmem:[#allocation5 + $0x17d8] sm:$0xff]
    %v949 = vld [vmem:[#allocation5 + $0x17e0] sm:$0xff]
    %v950 = vld [vmem:[#allocation5 + $0x17e8] sm:$0xff]
    %v951 = vld [vmem:[#allocation5 + $0x17f0] sm:$0xff]
    %v952 = vld [vmem:[#allocation5 + $0x17f8] sm:$0xff]
    %v953 = vld [vmem:[#allocation5 + $0x1800] sm:$0xff]
    %v954 = vld [vmem:[#allocation5 + $0x1808] sm:$0xff]
    %v955 = vld [vmem:[#allocation5 + $0x1810] sm:$0xff]
    %v956 = vld [vmem:[#allocation5 + $0x1818] sm:$0xff]
    %v957 = vld [vmem:[#allocation5 + $0x1820] sm:$0xff]
    %v958 = vld [vmem:[#allocation5 + $0x1828] sm:$0xff]
    %v959 = vld [vmem:[#allocation5 + $0x1830] sm:$0xff]
    %v960 = vld [vmem:[#allocation5 + $0x1838] sm:$0xff]
    %v961 = vld [vmem:[#allocation5 + $0x1840] sm:$0xff]
    %v962 = vld [vmem:[#allocation5 + $0x1848] sm:$0xff]
    %v963 = vld [vmem:[#allocation5 + $0x1850] sm:$0xff]
    %v964 = vld [vmem:[#allocation5 + $0x1858] sm:$0xff]
    %v965 = vld [vmem:[#allocation5 + $0x1860] sm:$0xff]
    %v966 = vld [vmem:[#allocation5 + $0x1868] sm:$0xff]
    %v967 = vld [vmem:[#allocation5 + $0x1870] sm:$0xff]
    %v968 = vld [vmem:[#allocation5 + $0x1878] sm:$0xff]
    %v969 = vld [vmem:[#allocation5 + $0x1880] sm:$0xff]
    %v970 = vld [vmem:[#allocation5 + $0x1888] sm:$0xff]
    %v971 = vld [vmem:[#allocation5 + $0x1890] sm:$0xff]
    %v972 = vld [vmem:[#allocation5 + $0x1898] sm:$0xff]
    %v973 = vld [vmem:[#allocation5 + $0x18a0] sm:$0xff]
    %v974 = vld [vmem:[#allocation5 + $0x18a8] sm:$0xff]
    %v975 = vld [vmem:[#allocation5 + $0x18b0] sm:$0xff]
    %v976 = vld [vmem:[#allocation5 + $0x18b8] sm:$0xff]
    %v977 = vld [vmem:[#allocation5 + $0x18c0] sm:$0xff]
    %v978 = vld [vmem:[#allocation5 + $0x18c8] sm:$0xff]
    %v979 = vld [vmem:[#allocation5 + $0x18d0] sm:$0xff]
    %v980 = vld [vmem:[#allocation5 + $0x18d8] sm:$0xff]
    %v981 = vld [vmem:[#allocation5 + $0x18e0] sm:$0xff]
    %v982 = vld [vmem:[#allocation5 + $0x18e8] sm:$0xff]
    %v983 = vld [vmem:[#allocation5 + $0x18f0] sm:$0xff]
    %v984 = vld [vmem:[#allocation5 + $0x18f8] sm:$0xff]
    %v985 = vld [vmem:[#allocation5 + $0x1900] sm:$0xff]
    %v986 = vld [vmem:[#allocation5 + $0x1908] sm:$0xff]
    %v987 = vld [vmem:[#allocation5 + $0x1910] sm:$0xff]
    %v988 = vld [vmem:[#allocation5 + $0x1918] sm:$0xff]
    %v989 = vld [vmem:[#allocation5 + $0x1920] sm:$0xff]
    %v990 = vld [vmem:[#allocation5 + $0x1928] sm:$0xff]
    %v991 = vld [vmem:[#allocation5 + $0x1930] sm:$0xff]
    %v992 = vld [vmem:[#allocation5 + $0x1938] sm:$0xff]
    %v993 = vld [vmem:[#allocation5 + $0x1940] sm:$0xff]
    %v994 = vld [vmem:[#allocation5 + $0x1948] sm:$0xff]
    %v995 = vld [vmem:[#allocation5 + $0x1950] sm:$0xff]
    %v996 = vld [vmem:[#allocation5 + $0x1958] sm:$0xff]
    %v997 = vld [vmem:[#allocation5 + $0x1960] sm:$0xff]
    %v998 = vld [vmem:[#allocation5 + $0x1968] sm:$0xff]
    %v999 = vld [vmem:[#allocation5 + $0x1970] sm:$0xff]
    %v1000 = vld [vmem:[#allocation5 + $0x1978] sm:$0xff]
    %v1001 = vld [vmem:[#allocation5 + $0x1980] sm:$0xff]
    %v1002 = vld [vmem:[#allocation5 + $0x1988] sm:$0xff]
    %v1003 = vld [vmem:[#allocation5 + $0x1990] sm:$0xff]
    %v1004 = vld [vmem:[#allocation5 + $0x1998] sm:$0xff]
    %v1005 = vld [vmem:[#allocation5 + $0x19a0] sm:$0xff]
    %v1006 = vld [vmem:[#allocation5 + $0x19a8] sm:$0xff]
    %v1007 = vld [vmem:[#allocation5 + $0x19b0] sm:$0xff]
    %v1008 = vld [vmem:[#allocation5 + $0x19b8] sm:$0xff]
    %v1009 = vld [vmem:[#allocation5 + $0x19c0] sm:$0xff]
    %v1010 = vld [vmem:[#allocation5 + $0x19c8] sm:$0xff]
    %v1011 = vld [vmem:[#allocation5 + $0x19d0] sm:$0xff]
    %v1012 = vld [vmem:[#allocation5 + $0x19d8] sm:$0xff]
    %v1013 = vld [vmem:[#allocation5 + $0x19e0] sm:$0xff]
    %v1014 = vld [vmem:[#allocation5 + $0x19e8] sm:$0xff]
    %v1015 = vld [vmem:[#allocation5 + $0x19f0] sm:$0xff]
    %v1016 = vld [vmem:[#allocation5 + $0x19f8] sm:$0xff]
    %v1017 = vld [vmem:[#allocation5 + $0x1a00] sm:$0xff]
    %v1018 = vld [vmem:[#allocation5 + $0x1a08] sm:$0xff]
    %v1019 = vld [vmem:[#allocation5 + $0x1a10] sm:$0xff]
    %v1020 = vld [vmem:[#allocation5 + $0x1a18] sm:$0xff]
    %v1021 = vld [vmem:[#allocation5 + $0x1a20] sm:$0xff]
    %v1022 = vld [vmem:[#allocation5 + $0x1a28] sm:$0xff]
    %v1023 = vld [vmem:[#allocation5 + $0x1a30] sm:$0xff]
    %v1024 = vld [vmem:[#allocation5 + $0x1a38] sm:$0xff]
    %v1025 = vld [vmem:[#allocation5 + $0x1a40] sm:$0xff]
    %v1026 = vld [vmem:[#allocation5 + $0x1a48] sm:$0xff]
    %v1027 = vld [vmem:[#allocation5 + $0x1a50] sm:$0xff]
    %v1028 = vld [vmem:[#allocation5 + $0x1a58] sm:$0xff]
    %v1029 = vld [vmem:[#allocation5 + $0x1a60] sm:$0xff]
    %v1030 = vld [vmem:[#allocation5 + $0x1a68] sm:$0xff]
    %v1031 = vld [vmem:[#allocation5 + $0x1a70] sm:$0xff]
    %v1032 = vld [vmem:[#allocation5 + $0x1a78] sm:$0xff]
    %v1033 = vld [vmem:[#allocation5 + $0x1a80] sm:$0xff]
    %v1034 = vld [vmem:[#allocation5 + $0x1a88] sm:$0xff]
    %v1035 = vld [vmem:[#allocation5 + $0x1a90] sm:$0xff]
    %v1036 = vld [vmem:[#allocation5 + $0x1a98] sm:$0xff]
    %v1037 = vld [vmem:[#allocation5 + $0x1aa0] sm:$0xff]
    %v1038 = vld [vmem:[#allocation5 + $0x1aa8] sm:$0xff]
    %v1039 = vld [vmem:[#allocation5 + $0x1ab0] sm:$0xff]
    %v1040 = vld [vmem:[#allocation5 + $0x1ab8] sm:$0xff]
    %v1041 = vld [vmem:[#allocation5 + $0x1ac0] sm:$0xff]
    %v1042 = vld [vmem:[#allocation5 + $0x1ac8] sm:$0xff]
    %v1043 = vld [vmem:[#allocation5 + $0x1ad0] sm:$0xff]
    %v1044 = vld [vmem:[#allocation5 + $0x1ad8] sm:$0xff]
    %v1045 = vld [vmem:[#allocation5 + $0x1ae0] sm:$0xff]
    %v1046 = vld [vmem:[#allocation5 + $0x1ae8] sm:$0xff]
    %v1047 = vld [vmem:[#allocation5 + $0x1af0] sm:$0xff]
    %v1048 = vld [vmem:[#allocation5 + $0x1af8] sm:$0xff]
    %v1049 = vld [vmem:[#allocation5 + $0x1b00] sm:$0xff]
    %v1050 = vld [vmem:[#allocation5 + $0x1b08] sm:$0xff]
    %v1051 = vld [vmem:[#allocation5 + $0x1b10] sm:$0xff]
    %v1052 = vld [vmem:[#allocation5 + $0x1b18] sm:$0xff]
    %v1053 = vld [vmem:[#allocation5 + $0x1b20] sm:$0xff]
    %v1054 = vld [vmem:[#allocation5 + $0x1b28] sm:$0xff]
    %v1055 = vld [vmem:[#allocation5 + $0x1b30] sm:$0xff]
    %v1056 = vld [vmem:[#allocation5 + $0x1b38] sm:$0xff]
    %v1057 = vld [vmem:[#allocation5 + $0x1b40] sm:$0xff]
    %v1058 = vld [vmem:[#allocation5 + $0x1b48] sm:$0xff]
    %v1059 = vld [vmem:[#allocation5 + $0x1b50] sm:$0xff]
    %v1060 = vld [vmem:[#allocation5 + $0x1b58] sm:$0xff]
    %v1061 = vld [vmem:[#allocation5 + $0x1b60] sm:$0xff]
    %v1062 = vld [vmem:[#allocation5 + $0x1b68] sm:$0xff]
    %v1063 = vld [vmem:[#allocation5 + $0x1b70] sm:$0xff]
    %v1064 = vld [vmem:[#allocation5 + $0x1b78] sm:$0xff]
    %v1065 = vld [vmem:[#allocation5 + $0x1b80] sm:$0xff]
    %v1066 = vld [vmem:[#allocation5 + $0x1b88] sm:$0xff]
    %v1067 = vld [vmem:[#allocation5 + $0x1b90] sm:$0xff]
    %v1068 = vld [vmem:[#allocation5 + $0x1b98] sm:$0xff]
    %v1069 = vld [vmem:[#allocation5 + $0x1ba0] sm:$0xff]
    %v1070 = vld [vmem:[#allocation5 + $0x1ba8] sm:$0xff]
    %v1071 = vld [vmem:[#allocation5 + $0x1bb0] sm:$0xff]
    %v1072 = vld [vmem:[#allocation5 + $0x1bb8] sm:$0xff]
    %v1073 = vld [vmem:[#allocation5 + $0x1bc0] sm:$0xff]
    %v1074 = vld [vmem:[#allocation5 + $0x1bc8] sm:$0xff]
    %v1075 = vld [vmem:[#allocation5 + $0x1bd0] sm:$0xff]
    %v1076 = vld [vmem:[#allocation5 + $0x1bd8] sm:$0xff]
    %v1077 = vld [vmem:[#allocation5 + $0x1be0] sm:$0xff]
    %v1078 = vld [vmem:[#allocation5 + $0x1be8] sm:$0xff]
    %v1079 = vld [vmem:[#allocation5 + $0x1bf0] sm:$0xff]
    %v1080 = vld [vmem:[#allocation5 + $0x1bf8] sm:$0xff]
    %v1081 = vld [vmem:[#allocation5 + $0x1c00] sm:$0xff]
    %v1082 = vld [vmem:[#allocation5 + $0x1c08] sm:$0xff]
    %v1083 = vld [vmem:[#allocation5 + $0x1c10] sm:$0xff]
    %v1084 = vld [vmem:[#allocation5 + $0x1c18] sm:$0xff]
    %v1085 = vld [vmem:[#allocation5 + $0x1c20] sm:$0xff]
    %v1086 = vld [vmem:[#allocation5 + $0x1c28] sm:$0xff]
    %v1087 = vld [vmem:[#allocation5 + $0x1c30] sm:$0xff]
    %v1088 = vld [vmem:[#allocation5 + $0x1c38] sm:$0xff]
    %v1089 = vld [vmem:[#allocation5 + $0x1c40] sm:$0xff]
    %v1090 = vld [vmem:[#allocation5 + $0x1c48] sm:$0xff]
    %v1091 = vld [vmem:[#allocation5 + $0x1c50] sm:$0xff]
    %v1092 = vld [vmem:[#allocation5 + $0x1c58] sm:$0xff]
    %v1093 = vld [vmem:[#allocation5 + $0x1c60] sm:$0xff]
    %v1094 = vld [vmem:[#allocation5 + $0x1c68] sm:$0xff]
    %v1095 = vld [vmem:[#allocation5 + $0x1c70] sm:$0xff]
    %v1096 = vld [vmem:[#allocation5 + $0x1c78] sm:$0xff]
    %v1097 = vld [vmem:[#allocation7] sm:$0x3f]
    %v1099 = vlaneseq
    %v1100 = vshrl.u32 %v1099, 7
    %v1101 = vsub.s32 0, %v1100
    %v1102 = vrot.slane %v1097, %v1101
    %v1103 = vlaneseq
    %v1104 = vshrl.u32 %v1103, 7
    %v1105 = vsub.s32 1, %v1104
    %v1106 = vrot.slane %v1097, %v1105
    %v1107 = vlaneseq
    %v1108 = vshrl.u32 %v1107, 7
    %v1109 = vsub.s32 2, %v1108
    %v1110 = vrot.slane %v1097, %v1109
    %v1111 = vlaneseq
    %v1112 = vshrl.u32 %v1111, 7
    %v1113 = vsub.s32 3, %v1112
    %v1114 = vrot.slane %v1097, %v1113
    %v1115 = vlaneseq
    %v1116 = vshrl.u32 %v1115, 7
    %v1117 = vsub.s32 4, %v1116
    %v1118 = vrot.slane %v1097, %v1117
    %v1119 = vlaneseq
    %v1120 = vshrl.u32 %v1119, 7
    %v1121 = vsub.s32 5, %v1120
    %v1122 = vrot.slane %v1097, %v1121
    %v2041 = vunpack.c.l.b16 %v185
    %v2042 = vunpack.c.h.b16 %v185
    %v2043 = vunpack.c.l.b16 %v186
    %v2044 = vunpack.c.h.b16 %v186
    %v2045 = vunpack.c.l.b16 %v187
    %v2046 = vunpack.c.h.b16 %v187
    %v2047 = vunpack.c.l.b16 %v188
    %v2048 = vunpack.c.h.b16 %v188
    %v2049 = vunpack.c.l.b16 %v189
    %v2050 = vunpack.c.h.b16 %v189
    %v2051 = vunpack.c.l.b16 %v190
    %v2052 = vunpack.c.h.b16 %v190
    %v2053 = vunpack.c.l.b16 %v191
    %v2054 = vunpack.c.h.b16 %v191
    %v2055 = vunpack.c.l.b16 %v192
    %v2056 = vunpack.c.h.b16 %v192
    %v2057 = vunpack.c.l.b16 %v193
    %v2058 = vunpack.c.h.b16 %v193
    %v2059 = vunpack.c.l.b16 %v194
    %v2060 = vunpack.c.h.b16 %v194
    %v2061 = vunpack.c.l.b16 %v195
    %v2062 = vunpack.c.h.b16 %v195
    %v2063 = vunpack.c.l.b16 %v196
    %v2064 = vunpack.c.h.b16 %v196
    %v2065 = vunpack.c.l.b16 %v197
    %v2066 = vunpack.c.h.b16 %v197
    %v2067 = vunpack.c.l.b16 %v198
    %v2068 = vunpack.c.h.b16 %v198
    %v2069 = vunpack.c.l.b16 %v199
    %v2070 = vunpack.c.h.b16 %v199
    %v2071 = vunpack.c.l.b16 %v200
    %v2072 = vunpack.c.h.b16 %v200
    %v2073 = vunpack.c.l.b16 %v201
    %v2074 = vunpack.c.h.b16 %v201
    %v2075 = vunpack.c.l.b16 %v202
    %v2076 = vunpack.c.h.b16 %v202
    %v2077 = vunpack.c.l.b16 %v203
    %v2078 = vunpack.c.h.b16 %v203
    %v2079 = vunpack.c.l.b16 %v204
    %v2080 = vunpack.c.h.b16 %v204
    %v2081 = vunpack.c.l.b16 %v205
    %v2082 = vunpack.c.h.b16 %v205
    %v2083 = vunpack.c.l.b16 %v206
    %v2084 = vunpack.c.h.b16 %v206
    %v2085 = vunpack.c.l.b16 %v207
    %v2086 = vunpack.c.h.b16 %v207
    %v2087 = vunpack.c.l.b16 %v208
    %v2088 = vunpack.c.h.b16 %v208
    %v2089 = vunpack.c.l.b16 %v209
    %v2090 = vunpack.c.h.b16 %v209
    %v2091 = vunpack.c.l.b16 %v210
    %v2092 = vunpack.c.h.b16 %v210
    %v2093 = vunpack.c.l.b16 %v211
    %v2094 = vunpack.c.h.b16 %v211
    %v2095 = vunpack.c.l.b16 %v212
    %v2096 = vunpack.c.h.b16 %v212
    %v2097 = vunpack.c.l.b16 %v213
    %v2098 = vunpack.c.h.b16 %v213
    %v2099 = vunpack.c.l.b16 %v214
    %v2100 = vunpack.c.h.b16 %v214
    %v2101 = vunpack.c.l.b16 %v215
    %v2102 = vunpack.c.h.b16 %v215
    %v2103 = vunpack.c.l.b16 %v216
    %v2104 = vunpack.c.h.b16 %v216
    %v2105 = vunpack.c.l.b16 %v217
    %v2106 = vunpack.c.h.b16 %v217
    %v2107 = vunpack.c.l.b16 %v218
    %v2108 = vunpack.c.h.b16 %v218
    %v2109 = vunpack.c.l.b16 %v219
    %v2110 = vunpack.c.h.b16 %v219
    %v2111 = vunpack.c.l.b16 %v220
    %v2112 = vunpack.c.h.b16 %v220
    %v2113 = vunpack.c.l.b16 %v221
    %v2114 = vunpack.c.h.b16 %v221
    %v2115 = vunpack.c.l.b16 %v222
    %v2116 = vunpack.c.h.b16 %v222
    %v2117 = vunpack.c.l.b16 %v223
    %v2118 = vunpack.c.h.b16 %v223
    %v2119 = vunpack.c.l.b16 %v224
    %v2120 = vunpack.c.h.b16 %v224
    %v2121 = vunpack.c.l.b16 %v225
    %v2122 = vunpack.c.h.b16 %v225
    %v2123 = vunpack.c.l.b16 %v226
    %v2124 = vunpack.c.h.b16 %v226
    %v2125 = vunpack.c.l.b16 %v227
    %v2126 = vunpack.c.h.b16 %v227
    %v2127 = vunpack.c.l.b16 %v228
    %v2128 = vunpack.c.h.b16 %v228
    %v2129 = vunpack.c.l.b16 %v229
    %v2130 = vunpack.c.h.b16 %v229
    %v2131 = vunpack.c.l.b16 %v230
    %v2132 = vunpack.c.h.b16 %v230
    %v2133 = vunpack.c.l.b16 %v231
    %v2134 = vunpack.c.h.b16 %v231
    %v2135 = vunpack.c.l.b16 %v232
    %v2136 = vunpack.c.h.b16 %v232
    %v2137 = vunpack.c.l.b16 %v233
    %v2138 = vunpack.c.h.b16 %v233
    %v2139 = vunpack.c.l.b16 %v234
    %v2140 = vunpack.c.h.b16 %v234
    %v2141 = vunpack.c.l.b16 %v235
    %v2142 = vunpack.c.h.b16 %v235
    %v2143 = vunpack.c.l.b16 %v236
    %v2144 = vunpack.c.h.b16 %v236
    %v2145 = vunpack.c.l.b16 %v237
    %v2146 = vunpack.c.h.b16 %v237
    %v2147 = vunpack.c.l.b16 %v238
    %v2148 = vunpack.c.h.b16 %v238
    %v2149 = vunpack.c.l.b16 %v239
    %v2150 = vunpack.c.h.b16 %v239
    %v2151 = vunpack.c.l.b16 %v240
    %v2152 = vunpack.c.h.b16 %v240
    %v2153 = vunpack.c.l.b16 %v241
    %v2154 = vunpack.c.h.b16 %v241
    %v2155 = vunpack.c.l.b16 %v242
    %v2156 = vunpack.c.h.b16 %v242
    %v2157 = vunpack.c.l.b16 %v243
    %v2158 = vunpack.c.h.b16 %v243
    %v2159 = vunpack.c.l.b16 %v244
    %v2160 = vunpack.c.h.b16 %v244
    %v2161 = vunpack.c.l.b16 %v245
    %v2162 = vunpack.c.h.b16 %v245
    %v2163 = vunpack.c.l.b16 %v246
    %v2164 = vunpack.c.h.b16 %v246
    %v2165 = vunpack.c.l.b16 %v247
    %v2166 = vunpack.c.h.b16 %v247
    %v2167 = vunpack.c.l.b16 %v248
    %v2168 = vunpack.c.h.b16 %v248
    %v2169 = vunpack.c.l.b16 %v249
    %v2170 = vunpack.c.h.b16 %v249
    %v2171 = vunpack.c.l.b16 %v250
    %v2172 = vunpack.c.h.b16 %v250
    %v2173 = vunpack.c.l.b16 %v251
    %v2174 = vunpack.c.h.b16 %v251
    %v2175 = vunpack.c.l.b16 %v252
    %v2176 = vunpack.c.h.b16 %v252
    %v2177 = vunpack.c.l.b16 %v253
    %v2178 = vunpack.c.h.b16 %v253
    %v2179 = vunpack.c.l.b16 %v254
    %v2180 = vunpack.c.h.b16 %v254
    %v2181 = vunpack.c.l.b16 %v255
    %v2182 = vunpack.c.h.b16 %v255
    %v2183 = vunpack.c.l.b16 %v256
    %v2184 = vunpack.c.h.b16 %v256
    %v2185 = vunpack.c.l.b16 %v257
    %v2186 = vunpack.c.h.b16 %v257
    %v2187 = vunpack.c.l.b16 %v258
    %v2188 = vunpack.c.h.b16 %v258
    %v2189 = vunpack.c.l.b16 %v259
    %v2190 = vunpack.c.h.b16 %v259
    %v2191 = vunpack.c.l.b16 %v260
    %v2192 = vunpack.c.h.b16 %v260
    %v2193 = vunpack.c.l.b16 %v261
    %v2194 = vunpack.c.h.b16 %v261
    %v2195 = vunpack.c.l.b16 %v262
    %v2196 = vunpack.c.h.b16 %v262
    %v2197 = vunpack.c.l.b16 %v263
    %v2198 = vunpack.c.h.b16 %v263
    %v2199 = vunpack.c.l.b16 %v264
    %v2200 = vunpack.c.h.b16 %v264
    %v2201 = vunpack.c.l.b16 %v265
    %v2202 = vunpack.c.h.b16 %v265
    %v2203 = vunpack.c.l.b16 %v266
    %v2204 = vunpack.c.h.b16 %v266
    %v2205 = vunpack.c.l.b16 %v267
    %v2206 = vunpack.c.h.b16 %v267
    %v2207 = vunpack.c.l.b16 %v268
    %v2208 = vunpack.c.h.b16 %v268
    %v2209 = vunpack.c.l.b16 %v269
    %v2210 = vunpack.c.h.b16 %v269
    %v2211 = vunpack.c.l.b16 %v270
    %v2212 = vunpack.c.h.b16 %v270
    %v2213 = vunpack.c.l.b16 %v271
    %v2214 = vunpack.c.h.b16 %v271
    %v2215 = vunpack.c.l.b16 %v272
    %v2216 = vunpack.c.h.b16 %v272
    %v2217 = vunpack.c.l.b16 %v273
    %v2218 = vunpack.c.h.b16 %v273
    %v2219 = vunpack.c.l.b16 %v274
    %v2220 = vunpack.c.h.b16 %v274
    %v2221 = vunpack.c.l.b16 %v275
    %v2222 = vunpack.c.h.b16 %v275
    %v2223 = vunpack.c.l.b16 %v276
    %v2224 = vunpack.c.h.b16 %v276
    %v2225 = vunpack.c.l.b16 %v277
    %v2226 = vunpack.c.h.b16 %v277
    %v2227 = vunpack.c.l.b16 %v278
    %v2228 = vunpack.c.h.b16 %v278
    %v2229 = vunpack.c.l.b16 %v279
    %v2230 = vunpack.c.h.b16 %v279
    %v2231 = vunpack.c.l.b16 %v280
    %v2232 = vunpack.c.h.b16 %v280
    %v2233 = vunpack.c.l.b16 %v281
    %v2234 = vunpack.c.h.b16 %v281
    %v2235 = vunpack.c.l.b16 %v282
    %v2236 = vunpack.c.h.b16 %v282
    %v2237 = vunpack.c.l.b16 %v283
    %v2238 = vunpack.c.h.b16 %v283
    %v2239 = vunpack.c.l.b16 %v284
    %v2240 = vunpack.c.h.b16 %v284
    %v2241 = vunpack.c.l.b16 %v285
    %v2242 = vunpack.c.h.b16 %v285
    %v2243 = vunpack.c.l.b16 %v286
    %v2244 = vunpack.c.h.b16 %v286
    %v2245 = vunpack.c.l.b16 %v287
    %v2246 = vunpack.c.h.b16 %v287
    %v2247 = vunpack.c.l.b16 %v288
    %v2248 = vunpack.c.h.b16 %v288
    %v2249 = vunpack.c.l.b16 %v289
    %v2250 = vunpack.c.h.b16 %v289
    %v2251 = vunpack.c.l.b16 %v290
    %v2252 = vunpack.c.h.b16 %v290
    %v2253 = vunpack.c.l.b16 %v291
    %v2254 = vunpack.c.h.b16 %v291
    %v2255 = vunpack.c.l.b16 %v292
    %v2256 = vunpack.c.h.b16 %v292
    %v2257 = vunpack.c.l.b16 %v293
    %v2258 = vunpack.c.h.b16 %v293
    %v2259 = vunpack.c.l.b16 %v294
    %v2260 = vunpack.c.h.b16 %v294
    %v2261 = vunpack.c.l.b16 %v295
    %v2262 = vunpack.c.h.b16 %v295
    %v2263 = vunpack.c.l.b16 %v296
    %v2264 = vunpack.c.h.b16 %v296
    %v2265 = vunpack.c.l.b16 %v297
    %v2266 = vunpack.c.h.b16 %v297
    %v2267 = vunpack.c.l.b16 %v298
    %v2268 = vunpack.c.h.b16 %v298
    %v2269 = vunpack.c.l.b16 %v299
    %v2270 = vunpack.c.h.b16 %v299
    %v2271 = vunpack.c.l.b16 %v300
    %v2272 = vunpack.c.h.b16 %v300
    %v2273 = vunpack.c.l.b16 %v301
    %v2274 = vunpack.c.h.b16 %v301
    %v2275 = vunpack.c.l.b16 %v302
    %v2276 = vunpack.c.h.b16 %v302
    %v2277 = vunpack.c.l.b16 %v303
    %v2278 = vunpack.c.h.b16 %v303
    %v2279 = vunpack.c.l.b16 %v304
    %v2280 = vunpack.c.h.b16 %v304
    %v2281 = vunpack.c.l.b16 %v305
    %v2282 = vunpack.c.h.b16 %v305
    %v2283 = vunpack.c.l.b16 %v306
    %v2284 = vunpack.c.h.b16 %v306
    %v2285 = vunpack.c.l.b16 %v307
    %v2286 = vunpack.c.h.b16 %v307
    %v2287 = vunpack.c.l.b16 %v308
    %v2288 = vunpack.c.h.b16 %v308
    %v2289 = vunpack.c.l.b16 %v309
    %v2290 = vunpack.c.h.b16 %v309
    %v2291 = vunpack.c.l.b16 %v310
    %v2292 = vunpack.c.h.b16 %v310
    %v2293 = vunpack.c.l.b16 %v311
    %v2294 = vunpack.c.h.b16 %v311
    %v2295 = vunpack.c.l.b16 %v312
    %v2296 = vunpack.c.h.b16 %v312
    %v2297 = vunpack.c.l.b16 %v313
    %v2298 = vunpack.c.h.b16 %v313
    %v2299 = vunpack.c.l.b16 %v314
    %v2300 = vunpack.c.h.b16 %v314
    %v2301 = vunpack.c.l.b16 %v315
    %v2302 = vunpack.c.h.b16 %v315
    %v2303 = vunpack.c.l.b16 %v316
    %v2304 = vunpack.c.h.b16 %v316
    %v2305 = vunpack.c.l.b16 %v317
    %v2306 = vunpack.c.h.b16 %v317
    %v2307 = vunpack.c.l.b16 %v318
    %v2308 = vunpack.c.h.b16 %v318
    %v2309 = vunpack.c.l.b16 %v319
    %v2310 = vunpack.c.h.b16 %v319
    %v2311 = vunpack.c.l.b16 %v320
    %v2312 = vunpack.c.h.b16 %v320
    %v2313 = vunpack.c.l.b16 %v321
    %v2314 = vunpack.c.h.b16 %v321
    %v2315 = vunpack.c.l.b16 %v322
    %v2316 = vunpack.c.h.b16 %v322
    %v2317 = vunpack.c.l.b16 %v323
    %v2318 = vunpack.c.h.b16 %v323
    %v2319 = vunpack.c.l.b16 %v324
    %v2320 = vunpack.c.h.b16 %v324
    %v2321 = vunpack.c.l.b16 %v325
    %v2322 = vunpack.c.h.b16 %v325
    %v2323 = vunpack.c.l.b16 %v326
    %v2324 = vunpack.c.h.b16 %v326
    %v2325 = vunpack.c.l.b16 %v327
    %v2326 = vunpack.c.h.b16 %v327
    %v2327 = vunpack.c.l.b16 %v328
    %v2328 = vunpack.c.h.b16 %v328
    %v2329 = vunpack.c.l.b16 %v329
    %v2330 = vunpack.c.h.b16 %v329
    %v2331 = vunpack.c.l.b16 %v330
    %v2332 = vunpack.c.h.b16 %v330
    %v2333 = vunpack.c.l.b16 %v331
    %v2334 = vunpack.c.h.b16 %v331
    %v2335 = vunpack.c.l.b16 %v332
    %v2336 = vunpack.c.h.b16 %v332
    %v2337 = vunpack.c.l.b16 %v333
    %v2338 = vunpack.c.h.b16 %v333
    %v2339 = vunpack.c.l.b16 %v334
    %v2340 = vunpack.c.h.b16 %v334
    %v2341 = vunpack.c.l.b16 %v335
    %v2342 = vunpack.c.h.b16 %v335
    %v2343 = vunpack.c.l.b16 %v336
    %v2344 = vunpack.c.h.b16 %v336
    %v2345 = vunpack.c.l.b16 %v337
    %v2346 = vunpack.c.h.b16 %v337
    %v2347 = vunpack.c.l.b16 %v338
    %v2348 = vunpack.c.h.b16 %v338
    %v2349 = vunpack.c.l.b16 %v339
    %v2350 = vunpack.c.h.b16 %v339
    %v2351 = vunpack.c.l.b16 %v340
    %v2352 = vunpack.c.h.b16 %v340
    %v2353 = vunpack.c.l.b16 %v341
    %v2354 = vunpack.c.h.b16 %v341
    %v2355 = vunpack.c.l.b16 %v342
    %v2356 = vunpack.c.h.b16 %v342
    %v2357 = vunpack.c.l.b16 %v343
    %v2358 = vunpack.c.h.b16 %v343
    %v2359 = vunpack.c.l.b16 %v344
    %v2360 = vunpack.c.h.b16 %v344
    %v2361 = vunpack.c.l.b16 %v345
    %v2362 = vunpack.c.h.b16 %v345
    %v2363 = vunpack.c.l.b16 %v346
    %v2364 = vunpack.c.h.b16 %v346
    %v2365 = vunpack.c.l.b16 %v347
    %v2366 = vunpack.c.h.b16 %v347
    %v2367 = vunpack.c.l.b16 %v348
    %v2368 = vunpack.c.h.b16 %v348
    %v2369 = vunpack.c.l.b16 %v349
    %v2370 = vunpack.c.h.b16 %v349
    %v2371 = vunpack.c.l.b16 %v350
    %v2372 = vunpack.c.h.b16 %v350
    %v2373 = vunpack.c.l.b16 %v351
    %v2374 = vunpack.c.h.b16 %v351
    %v2375 = vunpack.c.l.b16 %v352
    %v2376 = vunpack.c.h.b16 %v352
    %v2377 = vunpack.c.l.b16 %v353
    %v2378 = vunpack.c.h.b16 %v353
    %v2379 = vunpack.c.l.b16 %v354
    %v2380 = vunpack.c.h.b16 %v354
    %v2381 = vunpack.c.l.b16 %v355
    %v2382 = vunpack.c.h.b16 %v355
    %v2383 = vunpack.c.l.b16 %v356
    %v2384 = vunpack.c.h.b16 %v356
    %v2385 = vunpack.c.l.b16 %v357
    %v2386 = vunpack.c.h.b16 %v357
    %v2387 = vunpack.c.l.b16 %v358
    %v2388 = vunpack.c.h.b16 %v358
    %v2389 = vunpack.c.l.b16 %v359
    %v2390 = vunpack.c.h.b16 %v359
    %v2391 = vunpack.c.l.b16 %v360
    %v2392 = vunpack.c.h.b16 %v360
    %v2393 = vunpack.c.l.b16 %v361
    %v2394 = vunpack.c.h.b16 %v361
    %v2395 = vunpack.c.l.b16 %v362
    %v2396 = vunpack.c.h.b16 %v362
    %v2397 = vunpack.c.l.b16 %v363
    %v2398 = vunpack.c.h.b16 %v363
    %v2399 = vunpack.c.l.b16 %v364
    %v2400 = vunpack.c.h.b16 %v364
    %v2401 = vunpack.c.l.b16 %v365
    %v2402 = vunpack.c.h.b16 %v365
    %v2403 = vunpack.c.l.b16 %v366
    %v2404 = vunpack.c.h.b16 %v366
    %v2405 = vunpack.c.l.b16 %v367
    %v2406 = vunpack.c.h.b16 %v367
    %v2407 = vunpack.c.l.b16 %v368
    %v2408 = vunpack.c.h.b16 %v368
    %v2409 = vunpack.c.l.b16 %v369
    %v2410 = vunpack.c.h.b16 %v369
    %v2411 = vunpack.c.l.b16 %v370
    %v2412 = vunpack.c.h.b16 %v370
    %v2413 = vunpack.c.l.b16 %v371
    %v2414 = vunpack.c.h.b16 %v371
    %v2415 = vunpack.c.l.b16 %v372
    %v2416 = vunpack.c.h.b16 %v372
    %v2417 = vunpack.c.l.b16 %v373
    %v2418 = vunpack.c.h.b16 %v373
    %v2419 = vunpack.c.l.b16 %v374
    %v2420 = vunpack.c.h.b16 %v374
    %v2421 = vunpack.c.l.b16 %v375
    %v2422 = vunpack.c.h.b16 %v375
    %v2423 = vunpack.c.l.b16 %v376
    %v2424 = vunpack.c.h.b16 %v376
    %v2425 = vunpack.c.l.b16 %v377
    %v2426 = vunpack.c.h.b16 %v377
    %v2427 = vunpack.c.l.b16 %v378
    %v2428 = vunpack.c.h.b16 %v378
    %v2429 = vunpack.c.l.b16 %v379
    %v2430 = vunpack.c.h.b16 %v379
    %v2431 = vunpack.c.l.b16 %v380
    %v2432 = vunpack.c.h.b16 %v380
    %v2433 = vunpack.c.l.b16 %v381
    %v2434 = vunpack.c.h.b16 %v381
    %v2435 = vunpack.c.l.b16 %v382
    %v2436 = vunpack.c.h.b16 %v382
    %v2437 = vunpack.c.l.b16 %v383
    %v2438 = vunpack.c.h.b16 %v383
    %v2439 = vunpack.c.l.b16 %v384
    %v2440 = vunpack.c.h.b16 %v384
    %v2441 = vunpack.c.l.b16 %v385
    %v2442 = vunpack.c.h.b16 %v385
    %v2443 = vunpack.c.l.b16 %v386
    %v2444 = vunpack.c.h.b16 %v386
    %v2445 = vunpack.c.l.b16 %v387
    %v2446 = vunpack.c.h.b16 %v387
    %v2447 = vunpack.c.l.b16 %v388
    %v2448 = vunpack.c.h.b16 %v388
    %v2449 = vunpack.c.l.b16 %v389
    %v2450 = vunpack.c.h.b16 %v389
    %v2451 = vunpack.c.l.b16 %v390
    %v2452 = vunpack.c.h.b16 %v390
    %v2453 = vunpack.c.l.b16 %v391
    %v2454 = vunpack.c.h.b16 %v391
    %v2455 = vunpack.c.l.b16 %v392
    %v2456 = vunpack.c.h.b16 %v392
    %v2457 = vunpack.c.l.b16 %v393
    %v2458 = vunpack.c.h.b16 %v393
    %v2459 = vunpack.c.l.b16 %v394
    %v2460 = vunpack.c.h.b16 %v394
    %v2461 = vunpack.c.l.b16 %v395
    %v2462 = vunpack.c.h.b16 %v395
    %v2463 = vunpack.c.l.b16 %v396
    %v2464 = vunpack.c.h.b16 %v396
    %v2465 = vunpack.c.l.b16 %v397
    %v2466 = vunpack.c.h.b16 %v397
    %v2467 = vunpack.c.l.b16 %v398
    %v2468 = vunpack.c.h.b16 %v398
    %v2469 = vunpack.c.l.b16 %v399
    %v2470 = vunpack.c.h.b16 %v399
    %v2471 = vunpack.c.l.b16 %v400
    %v2472 = vunpack.c.h.b16 %v400
    %v2473 = vunpack.c.l.b16 %v401
    %v2474 = vunpack.c.h.b16 %v401
    %v2475 = vunpack.c.l.b16 %v402
    %v2476 = vunpack.c.h.b16 %v402
    %v2477 = vunpack.c.l.b16 %v403
    %v2478 = vunpack.c.h.b16 %v403
    %v2479 = vunpack.c.l.b16 %v404
    %v2480 = vunpack.c.h.b16 %v404
    %v2481 = vunpack.c.l.b16 %v405
    %v2482 = vunpack.c.h.b16 %v405
    %v2483 = vunpack.c.l.b16 %v406
    %v2484 = vunpack.c.h.b16 %v406
    %v2485 = vunpack.c.l.b16 %v407
    %v2486 = vunpack.c.h.b16 %v407
    %v2487 = vunpack.c.l.b16 %v408
    %v2488 = vunpack.c.h.b16 %v408
    %v2489 = vunpack.c.l.b16 %v409
    %v2490 = vunpack.c.h.b16 %v409
    %v2491 = vunpack.c.l.b16 %v410
    %v2492 = vunpack.c.h.b16 %v410
    %v2493 = vunpack.c.l.b16 %v411
    %v2494 = vunpack.c.h.b16 %v411
    %v2495 = vunpack.c.l.b16 %v412
    %v2496 = vunpack.c.h.b16 %v412
    %v2497 = vunpack.c.l.b16 %v413
    %v2498 = vunpack.c.h.b16 %v413
    %v2499 = vunpack.c.l.b16 %v414
    %v2500 = vunpack.c.h.b16 %v414
    %v2501 = vunpack.c.l.b16 %v415
    %v2502 = vunpack.c.h.b16 %v415
    %v2503 = vunpack.c.l.b16 %v416
    %v2504 = vunpack.c.h.b16 %v416
    %v2505 = vunpack.c.l.b16 %v417
    %v2506 = vunpack.c.h.b16 %v417
    %v2507 = vunpack.c.l.b16 %v418
    %v2508 = vunpack.c.h.b16 %v418
    %v2509 = vunpack.c.l.b16 %v419
    %v2510 = vunpack.c.h.b16 %v419
    %v2511 = vunpack.c.l.b16 %v420
    %v2512 = vunpack.c.h.b16 %v420
    %v2513 = vunpack.c.l.b16 %v421
    %v2514 = vunpack.c.h.b16 %v421
    %v2515 = vunpack.c.l.b16 %v422
    %v2516 = vunpack.c.h.b16 %v422
    %v2517 = vunpack.c.l.b16 %v423
    %v2518 = vunpack.c.h.b16 %v423
    %v2519 = vunpack.c.l.b16 %v424
    %v2520 = vunpack.c.h.b16 %v424
    %v2521 = vunpack.c.l.b16 %v425
    %v2522 = vunpack.c.h.b16 %v425
    %v2523 = vunpack.c.l.b16 %v426
    %v2524 = vunpack.c.h.b16 %v426
    %v2525 = vunpack.c.l.b16 %v427
    %v2526 = vunpack.c.h.b16 %v427
    %v2527 = vunpack.c.l.b16 %v428
    %v2528 = vunpack.c.h.b16 %v428
    %v2529 = vunpack.c.l.b16 %v429
    %v2530 = vunpack.c.h.b16 %v429
    %v2531 = vunpack.c.l.b16 %v430
    %v2532 = vunpack.c.h.b16 %v430
    %v2533 = vunpack.c.l.b16 %v431
    %v2534 = vunpack.c.h.b16 %v431
    %v2535 = vunpack.c.l.b16 %v432
    %v2536 = vunpack.c.h.b16 %v432
    %v2537 = vunpack.c.l.b16 %v433
    %v2538 = vunpack.c.h.b16 %v433
    %v2539 = vunpack.c.l.b16 %v434
    %v2540 = vunpack.c.h.b16 %v434
    %v2541 = vunpack.c.l.b16 %v435
    %v2542 = vunpack.c.h.b16 %v435
    %v2543 = vunpack.c.l.b16 %v436
    %v2544 = vunpack.c.h.b16 %v436
    %v2545 = vunpack.c.l.b16 %v437
    %v2546 = vunpack.c.h.b16 %v437
    %v2547 = vunpack.c.l.b16 %v438
    %v2548 = vunpack.c.h.b16 %v438
    %v2549 = vunpack.c.l.b16 %v439
    %v2550 = vunpack.c.h.b16 %v439
    %v2551 = vunpack.c.l.b16 %v440
    %v2552 = vunpack.c.h.b16 %v440
    %v2553 = vunpack.c.l.b16 %v441
    %v2554 = vunpack.c.h.b16 %v441
    %v2555 = vunpack.c.l.b16 %v442
    %v2556 = vunpack.c.h.b16 %v442
    %v2557 = vunpack.c.l.b16 %v443
    %v2558 = vunpack.c.h.b16 %v443
    %v2559 = vunpack.c.l.b16 %v444
    %v2560 = vunpack.c.h.b16 %v444
    %v2561 = vunpack.c.l.b16 %v445
    %v2562 = vunpack.c.h.b16 %v445
    %v2563 = vunpack.c.l.b16 %v446
    %v2564 = vunpack.c.h.b16 %v446
    %v2565 = vunpack.c.l.b16 %v447
    %v2566 = vunpack.c.h.b16 %v447
    %v2567 = vunpack.c.l.b16 %v448
    %v2568 = vunpack.c.h.b16 %v448
    %v2569 = vunpack.c.l.b16 %v449
    %v2570 = vunpack.c.h.b16 %v449
    %v2571 = vunpack.c.l.b16 %v450
    %v2572 = vunpack.c.h.b16 %v450
    %v2573 = vunpack.c.l.b16 %v451
    %v2574 = vunpack.c.h.b16 %v451
    %v2575 = vunpack.c.l.b16 %v452
    %v2576 = vunpack.c.h.b16 %v452
    %v2577 = vunpack.c.l.b16 %v453
    %v2578 = vunpack.c.h.b16 %v453
    %v2579 = vunpack.c.l.b16 %v454
    %v2580 = vunpack.c.h.b16 %v454
    %v2581 = vunpack.c.l.b16 %v455
    %v2582 = vunpack.c.h.b16 %v455
    %v2583 = vunpack.c.l.b16 %v456
    %v2584 = vunpack.c.h.b16 %v456
    %v2585 = vunpack.c.l.b16 %v457
    %v2586 = vunpack.c.h.b16 %v457
    %v2587 = vunpack.c.l.b16 %v458
    %v2588 = vunpack.c.h.b16 %v458
    %v2589 = vunpack.c.l.b16 %v459
    %v2590 = vunpack.c.h.b16 %v459
    %v2591 = vunpack.c.l.b16 %v460
    %v2592 = vunpack.c.h.b16 %v460
    %v2593 = vunpack.c.l.b16 %v461
    %v2594 = vunpack.c.h.b16 %v461
    %v2595 = vunpack.c.l.b16 %v462
    %v2596 = vunpack.c.h.b16 %v462
    %v2597 = vunpack.c.l.b16 %v463
    %v2598 = vunpack.c.h.b16 %v463
    %v2599 = vunpack.c.l.b16 %v464
    %v2600 = vunpack.c.h.b16 %v464
    %v2601 = vunpack.c.l.b16 %v465
    %v2602 = vunpack.c.h.b16 %v465
    %v2603 = vunpack.c.l.b16 %v466
    %v2604 = vunpack.c.h.b16 %v466
    %v2605 = vunpack.c.l.b16 %v467
    %v2606 = vunpack.c.h.b16 %v467
    %v2607 = vunpack.c.l.b16 %v468
    %v2608 = vunpack.c.h.b16 %v468
    %v2609 = vunpack.c.l.b16 %v469
    %v2610 = vunpack.c.h.b16 %v469
    %v2611 = vunpack.c.l.b16 %v470
    %v2612 = vunpack.c.h.b16 %v470
    %v2613 = vunpack.c.l.b16 %v471
    %v2614 = vunpack.c.h.b16 %v471
    %v2615 = vunpack.c.l.b16 %v472
    %v2616 = vunpack.c.h.b16 %v472
    %v2617 = vunpack.c.l.b16 %v473
    %v2618 = vunpack.c.h.b16 %v473
    %v2619 = vunpack.c.l.b16 %v474
    %v2620 = vunpack.c.h.b16 %v474
    %v2621 = vunpack.c.l.b16 %v475
    %v2622 = vunpack.c.h.b16 %v475
    %v2623 = vunpack.c.l.b16 %v476
    %v2624 = vunpack.c.h.b16 %v476
    %v2625 = vunpack.c.l.b16 %v477
    %v2626 = vunpack.c.h.b16 %v477
    %v2627 = vunpack.c.l.b16 %v478
    %v2628 = vunpack.c.h.b16 %v478
    %v2629 = vunpack.c.l.b16 %v479
    %v2630 = vunpack.c.h.b16 %v479
    %v2631 = vunpack.c.l.b16 %v480
    %v2632 = vunpack.c.h.b16 %v480
    %v2633 = vunpack.c.l.b16 %v481
    %v2634 = vunpack.c.h.b16 %v481
    %v2635 = vunpack.c.l.b16 %v482
    %v2636 = vunpack.c.h.b16 %v482
    %v2637 = vunpack.c.l.b16 %v483
    %v2638 = vunpack.c.h.b16 %v483
    %v2639 = vunpack.c.l.b16 %v484
    %v2640 = vunpack.c.h.b16 %v484
    %v2641 = vunpack.c.l.b16 %v485
    %v2642 = vunpack.c.h.b16 %v485
    %v2643 = vunpack.c.l.b16 %v486
    %v2644 = vunpack.c.h.b16 %v486
    %v2645 = vunpack.c.l.b16 %v487
    %v2646 = vunpack.c.h.b16 %v487
    %v2647 = vunpack.c.l.b16 %v488
    %v2648 = vunpack.c.h.b16 %v488
    %v2649 = vunpack.c.l.b16 %v489
    %v2650 = vunpack.c.h.b16 %v489
    %v2651 = vunpack.c.l.b16 %v490
    %v2652 = vunpack.c.h.b16 %v490
    %v2653 = vunpack.c.l.b16 %v491
    %v2654 = vunpack.c.h.b16 %v491
    %v2655 = vunpack.c.l.b16 %v492
    %v2656 = vunpack.c.h.b16 %v492
    %v2657 = vunpack.c.l.b16 %v493
    %v2658 = vunpack.c.h.b16 %v493
    %v2659 = vunpack.c.l.b16 %v494
    %v2660 = vunpack.c.h.b16 %v494
    %v2661 = vunpack.c.l.b16 %v495
    %v2662 = vunpack.c.h.b16 %v495
    %v2663 = vunpack.c.l.b16 %v496
    %v2664 = vunpack.c.h.b16 %v496
    %v2665 = vunpack.c.l.b16 %v497
    %v2666 = vunpack.c.h.b16 %v497
    %v2667 = vunpack.c.l.b16 %v498
    %v2668 = vunpack.c.h.b16 %v498
    %v2669 = vunpack.c.l.b16 %v499
    %v2670 = vunpack.c.h.b16 %v499
    %v2671 = vunpack.c.l.b16 %v500
    %v2672 = vunpack.c.h.b16 %v500
    %v2673 = vunpack.c.l.b16 %v501
    %v2674 = vunpack.c.h.b16 %v501
    %v2675 = vunpack.c.l.b16 %v502
    %v2676 = vunpack.c.h.b16 %v502
    %v2677 = vunpack.c.l.b16 %v503
    %v2678 = vunpack.c.h.b16 %v503
    %v2679 = vunpack.c.l.b16 %v504
    %v2680 = vunpack.c.h.b16 %v504
    %v2681 = vunpack.c.l.b16 %v505
    %v2682 = vunpack.c.h.b16 %v505
    %v2683 = vunpack.c.l.b16 %v506
    %v2684 = vunpack.c.h.b16 %v506
    %v2685 = vunpack.c.l.b16 %v507
    %v2686 = vunpack.c.h.b16 %v507
    %v2687 = vunpack.c.l.b16 %v508
    %v2688 = vunpack.c.h.b16 %v508
    %v2689 = vunpack.c.l.b16 %v509
    %v2690 = vunpack.c.h.b16 %v509
    %v2691 = vunpack.c.l.b16 %v510
    %v2692 = vunpack.c.h.b16 %v510
    %v2693 = vunpack.c.l.b16 %v511
    %v2694 = vunpack.c.h.b16 %v511
    %v2695 = vunpack.c.l.b16 %v512
    %v2696 = vunpack.c.h.b16 %v512
    %v2697 = vunpack.c.l.b16 %v513
    %v2698 = vunpack.c.h.b16 %v513
    %v2699 = vunpack.c.l.b16 %v514
    %v2700 = vunpack.c.h.b16 %v514
    %v2701 = vunpack.c.l.b16 %v515
    %v2702 = vunpack.c.h.b16 %v515
    %v2703 = vunpack.c.l.b16 %v516
    %v2704 = vunpack.c.h.b16 %v516
    %v2705 = vunpack.c.l.b16 %v517
    %v2706 = vunpack.c.h.b16 %v517
    %v2707 = vunpack.c.l.b16 %v518
    %v2708 = vunpack.c.h.b16 %v518
    %v2709 = vunpack.c.l.b16 %v519
    %v2710 = vunpack.c.h.b16 %v519
    %v2711 = vunpack.c.l.b16 %v520
    %v2712 = vunpack.c.h.b16 %v520
    %v2713 = vunpack.c.l.b16 %v521
    %v2714 = vunpack.c.h.b16 %v521
    %v2715 = vunpack.c.l.b16 %v522
    %v2716 = vunpack.c.h.b16 %v522
    %v2717 = vunpack.c.l.b16 %v523
    %v2718 = vunpack.c.h.b16 %v523
    %v2719 = vunpack.c.l.b16 %v524
    %v2720 = vunpack.c.h.b16 %v524
    %v2721 = vunpack.c.l.b16 %v525
    %v2722 = vunpack.c.h.b16 %v525
    %v2723 = vunpack.c.l.b16 %v526
    %v2724 = vunpack.c.h.b16 %v526
    %v2725 = vunpack.c.l.b16 %v527
    %v2726 = vunpack.c.h.b16 %v527
    %v2727 = vunpack.c.l.b16 %v528
    %v2728 = vunpack.c.h.b16 %v528
    %v2729 = vunpack.c.l.b16 %v529
    %v2730 = vunpack.c.h.b16 %v529
    %v2731 = vunpack.c.l.b16 %v530
    %v2732 = vunpack.c.h.b16 %v530
    %v2733 = vunpack.c.l.b16 %v531
    %v2734 = vunpack.c.h.b16 %v531
    %v2735 = vunpack.c.l.b16 %v532
    %v2736 = vunpack.c.h.b16 %v532
    %v2737 = vunpack.c.l.b16 %v533
    %v2738 = vunpack.c.h.b16 %v533
    %v2739 = vunpack.c.l.b16 %v534
    %v2740 = vunpack.c.h.b16 %v534
    %v2741 = vunpack.c.l.b16 %v535
    %v2742 = vunpack.c.h.b16 %v535
    %v2743 = vunpack.c.l.b16 %v536
    %v2744 = vunpack.c.h.b16 %v536
    %v2745 = vunpack.c.l.b16 %v537
    %v2746 = vunpack.c.h.b16 %v537
    %v2747 = vunpack.c.l.b16 %v538
    %v2748 = vunpack.c.h.b16 %v538
    %v2749 = vunpack.c.l.b16 %v539
    %v2750 = vunpack.c.h.b16 %v539
    %v2751 = vunpack.c.l.b16 %v540
    %v2752 = vunpack.c.h.b16 %v540
    %v2753 = vunpack.c.l.b16 %v541
    %v2754 = vunpack.c.h.b16 %v541
    %v2755 = vunpack.c.l.b16 %v542
    %v2756 = vunpack.c.h.b16 %v542
    %v2757 = vunpack.c.l.b16 %v543
    %v2758 = vunpack.c.h.b16 %v543
    %v2759 = vunpack.c.l.b16 %v544
    %v2760 = vunpack.c.h.b16 %v544
    %v2761 = vunpack.c.l.b16 %v545
    %v2762 = vunpack.c.h.b16 %v545
    %v2763 = vunpack.c.l.b16 %v546
    %v2764 = vunpack.c.h.b16 %v546
    %v2765 = vunpack.c.l.b16 %v547
    %v2766 = vunpack.c.h.b16 %v547
    %v2767 = vunpack.c.l.b16 %v548
    %v2768 = vunpack.c.h.b16 %v548
    %v2769 = vunpack.c.l.b16 %v549
    %v2770 = vunpack.c.h.b16 %v549
    %v2771 = vunpack.c.l.b16 %v550
    %v2772 = vunpack.c.h.b16 %v550
    %v2773 = vunpack.c.l.b16 %v551
    %v2774 = vunpack.c.h.b16 %v551
    %v2775 = vunpack.c.l.b16 %v552
    %v2776 = vunpack.c.h.b16 %v552
    %v2777 = vunpack.c.l.b16 %v553
    %v2778 = vunpack.c.h.b16 %v553
    %v2779 = vunpack.c.l.b16 %v554
    %v2780 = vunpack.c.h.b16 %v554
    %v2781 = vunpack.c.l.b16 %v555
    %v2782 = vunpack.c.h.b16 %v555
    %v2783 = vunpack.c.l.b16 %v556
    %v2784 = vunpack.c.h.b16 %v556
    %v2785 = vunpack.c.l.b16 %v557
    %v2786 = vunpack.c.h.b16 %v557
    %v2787 = vunpack.c.l.b16 %v558
    %v2788 = vunpack.c.h.b16 %v558
    %v2789 = vunpack.c.l.b16 %v559
    %v2790 = vunpack.c.h.b16 %v559
    %v2791 = vunpack.c.l.b16 %v560
    %v2792 = vunpack.c.h.b16 %v560
    %v2793 = vunpack.c.l.b16 %v561
    %v2794 = vunpack.c.h.b16 %v561
    %v2795 = vunpack.c.l.b16 %v562
    %v2796 = vunpack.c.h.b16 %v562
    %v2797 = vunpack.c.l.b16 %v563
    %v2798 = vunpack.c.h.b16 %v563
    %v2799 = vunpack.c.l.b16 %v564
    %v2800 = vunpack.c.h.b16 %v564
    %v2801 = vunpack.c.l.b16 %v565
    %v2802 = vunpack.c.h.b16 %v565
    %v2803 = vunpack.c.l.b16 %v566
    %v2804 = vunpack.c.h.b16 %v566
    %v2805 = vunpack.c.l.b16 %v567
    %v2806 = vunpack.c.h.b16 %v567
    %v2807 = vunpack.c.l.b16 %v568
    %v2808 = vunpack.c.h.b16 %v568
    %v2809 = vunpack.c.l.b16 %v569
    %v2810 = vunpack.c.h.b16 %v569
    %v2811 = vunpack.c.l.b16 %v570
    %v2812 = vunpack.c.h.b16 %v570
    %v2813 = vunpack.c.l.b16 %v571
    %v2814 = vunpack.c.h.b16 %v571
    %v2815 = vunpack.c.l.b16 %v572
    %v2816 = vunpack.c.h.b16 %v572
    %v2817 = vunpack.c.l.b16 %v573
    %v2818 = vunpack.c.h.b16 %v573
    %v2819 = vunpack.c.l.b16 %v574
    %v2820 = vunpack.c.h.b16 %v574
    %v2821 = vunpack.c.l.b16 %v575
    %v2822 = vunpack.c.h.b16 %v575
    %v2823 = vunpack.c.l.b16 %v576
    %v2824 = vunpack.c.h.b16 %v576
    %v2825 = vunpack.c.l.b16 %v577
    %v2826 = vunpack.c.h.b16 %v577
    %v2827 = vunpack.c.l.b16 %v578
    %v2828 = vunpack.c.h.b16 %v578
    %v2829 = vunpack.c.l.b16 %v579
    %v2830 = vunpack.c.h.b16 %v579
    %v2831 = vunpack.c.l.b16 %v580
    %v2832 = vunpack.c.h.b16 %v580
    %v2833 = vunpack.c.l.b16 %v581
    %v2834 = vunpack.c.h.b16 %v581
    %v2835 = vunpack.c.l.b16 %v582
    %v2836 = vunpack.c.h.b16 %v582
    %v2837 = vunpack.c.l.b16 %v583
    %v2838 = vunpack.c.h.b16 %v583
    %v2839 = vunpack.c.l.b16 %v584
    %v2840 = vunpack.c.h.b16 %v584
    %v2841 = vunpack.c.l.b16 %v585
    %v2842 = vunpack.c.h.b16 %v585
    %v2843 = vunpack.c.l.b16 %v586
    %v2844 = vunpack.c.h.b16 %v586
    %v2845 = vunpack.c.l.b16 %v587
    %v2846 = vunpack.c.h.b16 %v587
    %v2847 = vunpack.c.l.b16 %v588
    %v2848 = vunpack.c.h.b16 %v588
    %v2849 = vunpack.c.l.b16 %v589
    %v2850 = vunpack.c.h.b16 %v589
    %v2851 = vunpack.c.l.b16 %v590
    %v2852 = vunpack.c.h.b16 %v590
    %v2853 = vunpack.c.l.b16 %v591
    %v2854 = vunpack.c.h.b16 %v591
    %v2855 = vunpack.c.l.b16 %v592
    %v2856 = vunpack.c.h.b16 %v592
    %v2857 = vunpack.c.l.b16 %v593
    %v2858 = vunpack.c.h.b16 %v593
    %v2859 = vunpack.c.l.b16 %v594
    %v2860 = vunpack.c.h.b16 %v594
    %v2861 = vunpack.c.l.b16 %v595
    %v2862 = vunpack.c.h.b16 %v595
    %v2863 = vunpack.c.l.b16 %v596
    %v2864 = vunpack.c.h.b16 %v596
    %v2865 = vunpack.c.l.b16 %v597
    %v2866 = vunpack.c.h.b16 %v597
    %v2867 = vunpack.c.l.b16 %v598
    %v2868 = vunpack.c.h.b16 %v598
    %v2869 = vunpack.c.l.b16 %v599
    %v2870 = vunpack.c.h.b16 %v599
    %v2871 = vunpack.c.l.b16 %v600
    %v2872 = vunpack.c.h.b16 %v600
    %v2873 = vunpack.c.l.b16 %v601
    %v2874 = vunpack.c.h.b16 %v601
    %v2875 = vunpack.c.l.b16 %v602
    %v2876 = vunpack.c.h.b16 %v602
    %v2877 = vunpack.c.l.b16 %v603
    %v2878 = vunpack.c.h.b16 %v603
    %v2879 = vunpack.c.l.b16 %v604
    %v2880 = vunpack.c.h.b16 %v604
    %v2881 = vunpack.c.l.b16 %v605
    %v2882 = vunpack.c.h.b16 %v605
    %v2883 = vunpack.c.l.b16 %v606
    %v2884 = vunpack.c.h.b16 %v606
    %v2885 = vunpack.c.l.b16 %v607
    %v2886 = vunpack.c.h.b16 %v607
    %v2887 = vunpack.c.l.b16 %v608
    %v2888 = vunpack.c.h.b16 %v608
    %v2889 = vunpack.c.l.b16 %v609
    %v2890 = vunpack.c.h.b16 %v609
    %v2891 = vunpack.c.l.b16 %v610
    %v2892 = vunpack.c.h.b16 %v610
    %v2893 = vunpack.c.l.b16 %v611
    %v2894 = vunpack.c.h.b16 %v611
    %v2895 = vunpack.c.l.b16 %v612
    %v2896 = vunpack.c.h.b16 %v612
    %v2897 = vunpack.c.l.b16 %v613
    %v2898 = vunpack.c.h.b16 %v613
    %v2899 = vunpack.c.l.b16 %v614
    %v2900 = vunpack.c.h.b16 %v614
    %v2901 = vunpack.c.l.b16 %v615
    %v2902 = vunpack.c.h.b16 %v615
    %v2903 = vunpack.c.l.b16 %v616
    %v2904 = vunpack.c.h.b16 %v616
    %v2905 = vunpack.c.l.b16 %v617
    %v2906 = vunpack.c.h.b16 %v617
    %v2907 = vunpack.c.l.b16 %v618
    %v2908 = vunpack.c.h.b16 %v618
    %v2909 = vunpack.c.l.b16 %v619
    %v2910 = vunpack.c.h.b16 %v619
    %v2911 = vunpack.c.l.b16 %v620
    %v2912 = vunpack.c.h.b16 %v620
    %v2913 = vunpack.c.l.b16 %v621
    %v2914 = vunpack.c.h.b16 %v621
    %v2915 = vunpack.c.l.b16 %v622
    %v2916 = vunpack.c.h.b16 %v622
    %v2917 = vunpack.c.l.b16 %v623
    %v2918 = vunpack.c.h.b16 %v623
    %v2919 = vunpack.c.l.b16 %v624
    %v2920 = vunpack.c.h.b16 %v624
    %v2921 = vunpack.c.l.b16 %v625
    %v2922 = vunpack.c.h.b16 %v625
    %v2923 = vunpack.c.l.b16 %v626
    %v2924 = vunpack.c.h.b16 %v626
    %v2925 = vunpack.c.l.b16 %v627
    %v2926 = vunpack.c.h.b16 %v627
    %v2927 = vunpack.c.l.b16 %v628
    %v2928 = vunpack.c.h.b16 %v628
    %v2929 = vunpack.c.l.b16 %v629
    %v2930 = vunpack.c.h.b16 %v629
    %v2931 = vunpack.c.l.b16 %v630
    %v2932 = vunpack.c.h.b16 %v630
    %v2933 = vunpack.c.l.b16 %v631
    %v2934 = vunpack.c.h.b16 %v631
    %v2935 = vunpack.c.l.b16 %v632
    %v2936 = vunpack.c.h.b16 %v632
    %v2937 = vunpack.c.l.b16 %v633
    %v2938 = vunpack.c.h.b16 %v633
    %v2939 = vunpack.c.l.b16 %v634
    %v2940 = vunpack.c.h.b16 %v634
    %v2941 = vunpack.c.l.b16 %v635
    %v2942 = vunpack.c.h.b16 %v635
    %v2943 = vunpack.c.l.b16 %v636
    %v2944 = vunpack.c.h.b16 %v636
    %v2945 = vunpack.c.l.b16 %v637
    %v2946 = vunpack.c.h.b16 %v637
    %v2947 = vunpack.c.l.b16 %v638
    %v2948 = vunpack.c.h.b16 %v638
    %v2949 = vunpack.c.l.b16 %v639
    %v2950 = vunpack.c.h.b16 %v639
    %v2951 = vunpack.c.l.b16 %v640
    %v2952 = vunpack.c.h.b16 %v640
    %v2953 = vunpack.c.l.b16 %v641
    %v2954 = vunpack.c.h.b16 %v641
    %v2955 = vunpack.c.l.b16 %v642
    %v2956 = vunpack.c.h.b16 %v642
    %v2957 = vunpack.c.l.b16 %v643
    %v2958 = vunpack.c.h.b16 %v643
    %v2959 = vunpack.c.l.b16 %v644
    %v2960 = vunpack.c.h.b16 %v644
    %v2961 = vunpack.c.l.b16 %v645
    %v2962 = vunpack.c.h.b16 %v645
    %v2963 = vunpack.c.l.b16 %v646
    %v2964 = vunpack.c.h.b16 %v646
    %v2965 = vunpack.c.l.b16 %v647
    %v2966 = vunpack.c.h.b16 %v647
    %v2967 = vunpack.c.l.b16 %v648
    %v2968 = vunpack.c.h.b16 %v648
    %v2969 = vunpack.c.l.b16 %v649
    %v2970 = vunpack.c.h.b16 %v649
    %v2971 = vunpack.c.l.b16 %v650
    %v2972 = vunpack.c.h.b16 %v650
    %v2973 = vunpack.c.l.b16 %v651
    %v2974 = vunpack.c.h.b16 %v651
    %v2975 = vunpack.c.l.b16 %v652
    %v2976 = vunpack.c.h.b16 %v652
    %v2977 = vunpack.c.l.b16 %v653
    %v2978 = vunpack.c.h.b16 %v653
    %v2979 = vunpack.c.l.b16 %v654
    %v2980 = vunpack.c.h.b16 %v654
    %v2981 = vunpack.c.l.b16 %v655
    %v2982 = vunpack.c.h.b16 %v655
    %v2983 = vunpack.c.l.b16 %v656
    %v2984 = vunpack.c.h.b16 %v656
    %v2985 = vunpack.c.l.b16 %v657
    %v2986 = vunpack.c.h.b16 %v657
    %v2987 = vunpack.c.l.b16 %v658
    %v2988 = vunpack.c.h.b16 %v658
    %v2989 = vunpack.c.l.b16 %v659
    %v2990 = vunpack.c.h.b16 %v659
    %v2991 = vunpack.c.l.b16 %v660
    %v2992 = vunpack.c.h.b16 %v660
    %v2993 = vunpack.c.l.b16 %v661
    %v2994 = vunpack.c.h.b16 %v661
    %v2995 = vunpack.c.l.b16 %v662
    %v2996 = vunpack.c.h.b16 %v662
    %v2997 = vunpack.c.l.b16 %v663
    %v2998 = vunpack.c.h.b16 %v663
    %v2999 = vunpack.c.l.b16 %v664
    %v3000 = vunpack.c.h.b16 %v664
    %v3001 = vunpack.c.l.b16 %v665
    %v3002 = vunpack.c.h.b16 %v665
    %v3003 = vunpack.c.l.b16 %v666
    %v3004 = vunpack.c.h.b16 %v666
    %v3005 = vunpack.c.l.b16 %v667
    %v3006 = vunpack.c.h.b16 %v667
    %v3007 = vunpack.c.l.b16 %v668
    %v3008 = vunpack.c.h.b16 %v668
    %v3009 = vunpack.c.l.b16 %v669
    %v3010 = vunpack.c.h.b16 %v669
    %v3011 = vunpack.c.l.b16 %v670
    %v3012 = vunpack.c.h.b16 %v670
    %v3013 = vunpack.c.l.b16 %v671
    %v3014 = vunpack.c.h.b16 %v671
    %v3015 = vunpack.c.l.b16 %v672
    %v3016 = vunpack.c.h.b16 %v672
    %v3017 = vunpack.c.l.b16 %v673
    %v3018 = vunpack.c.h.b16 %v673
    %v3019 = vunpack.c.l.b16 %v674
    %v3020 = vunpack.c.h.b16 %v674
    %v3021 = vunpack.c.l.b16 %v675
    %v3022 = vunpack.c.h.b16 %v675
    %v3023 = vunpack.c.l.b16 %v676
    %v3024 = vunpack.c.h.b16 %v676
    %v3025 = vunpack.c.l.b16 %v677
    %v3026 = vunpack.c.h.b16 %v677
    %v3027 = vunpack.c.l.b16 %v678
    %v3028 = vunpack.c.h.b16 %v678
    %v3029 = vunpack.c.l.b16 %v679
    %v3030 = vunpack.c.h.b16 %v679
    %v3031 = vunpack.c.l.b16 %v680
    %v3032 = vunpack.c.h.b16 %v680
    %v3033 = vunpack.c.l.b16 %v681
    %v3034 = vunpack.c.h.b16 %v681
    %v3035 = vunpack.c.l.b16 %v682
    %v3036 = vunpack.c.h.b16 %v682
    %v3037 = vunpack.c.l.b16 %v683
    %v3038 = vunpack.c.h.b16 %v683
    %v3039 = vunpack.c.l.b16 %v684
    %v3040 = vunpack.c.h.b16 %v684
    %v3041 = vunpack.c.l.b16 %v685
    %v3042 = vunpack.c.h.b16 %v685
    %v3043 = vunpack.c.l.b16 %v686
    %v3044 = vunpack.c.h.b16 %v686
    %v3045 = vunpack.c.l.b16 %v687
    %v3046 = vunpack.c.h.b16 %v687
    %v3047 = vunpack.c.l.b16 %v688
    %v3048 = vunpack.c.h.b16 %v688
    %v3049 = vunpack.c.l.b16 %v689
    %v3050 = vunpack.c.h.b16 %v689
    %v3051 = vunpack.c.l.b16 %v690
    %v3052 = vunpack.c.h.b16 %v690
    %v3053 = vunpack.c.l.b16 %v691
    %v3054 = vunpack.c.h.b16 %v691
    %v3055 = vunpack.c.l.b16 %v692
    %v3056 = vunpack.c.h.b16 %v692
    %v3057 = vunpack.c.l.b16 %v693
    %v3058 = vunpack.c.h.b16 %v693
    %v3059 = vunpack.c.l.b16 %v694
    %v3060 = vunpack.c.h.b16 %v694
    %v3061 = vunpack.c.l.b16 %v695
    %v3062 = vunpack.c.h.b16 %v695
    %v3063 = vunpack.c.l.b16 %v696
    %v3064 = vunpack.c.h.b16 %v696
    %v3065 = vunpack.c.l.b16 %v697
    %v3066 = vunpack.c.h.b16 %v697
    %v3067 = vunpack.c.l.b16 %v698
    %v3068 = vunpack.c.h.b16 %v698
    %v3069 = vunpack.c.l.b16 %v699
    %v3070 = vunpack.c.h.b16 %v699
    %v3071 = vunpack.c.l.b16 %v700
    %v3072 = vunpack.c.h.b16 %v700
    %v3073 = vunpack.c.l.b16 %v701
    %v3074 = vunpack.c.h.b16 %v701
    %v3075 = vunpack.c.l.b16 %v702
    %v3076 = vunpack.c.h.b16 %v702
    %v3077 = vunpack.c.l.b16 %v703
    %v3078 = vunpack.c.h.b16 %v703
    %v3079 = vunpack.c.l.b16 %v704
    %v3080 = vunpack.c.h.b16 %v704
    %v3081 = vunpack.c.l.b16 %v705
    %v3082 = vunpack.c.h.b16 %v705
    %v3083 = vunpack.c.l.b16 %v706
    %v3084 = vunpack.c.h.b16 %v706
    %v3085 = vunpack.c.l.b16 %v707
    %v3086 = vunpack.c.h.b16 %v707
    %v3087 = vunpack.c.l.b16 %v708
    %v3088 = vunpack.c.h.b16 %v708
    %v3089 = vunpack.c.l.b16 %v709
    %v3090 = vunpack.c.h.b16 %v709
    %v3091 = vunpack.c.l.b16 %v710
    %v3092 = vunpack.c.h.b16 %v710
    %v3093 = vunpack.c.l.b16 %v711
    %v3094 = vunpack.c.h.b16 %v711
    %v3095 = vunpack.c.l.b16 %v712
    %v3096 = vunpack.c.h.b16 %v712
    %v3097 = vunpack.c.l.b16 %v713
    %v3098 = vunpack.c.h.b16 %v713
    %v3099 = vunpack.c.l.b16 %v714
    %v3100 = vunpack.c.h.b16 %v714
    %v3101 = vunpack.c.l.b16 %v715
    %v3102 = vunpack.c.h.b16 %v715
    %v3103 = vunpack.c.l.b16 %v716
    %v3104 = vunpack.c.h.b16 %v716
    %v3105 = vunpack.c.l.b16 %v717
    %v3106 = vunpack.c.h.b16 %v717
    %v3107 = vunpack.c.l.b16 %v718
    %v3108 = vunpack.c.h.b16 %v718
    %v3109 = vunpack.c.l.b16 %v719
    %v3110 = vunpack.c.h.b16 %v719
    %v3111 = vunpack.c.l.b16 %v720
    %v3112 = vunpack.c.h.b16 %v720
    %v3113 = vunpack.c.l.b16 %v721
    %v3114 = vunpack.c.h.b16 %v721
    %v3115 = vunpack.c.l.b16 %v722
    %v3116 = vunpack.c.h.b16 %v722
    %v3117 = vunpack.c.l.b16 %v723
    %v3118 = vunpack.c.h.b16 %v723
    %v3119 = vunpack.c.l.b16 %v724
    %v3120 = vunpack.c.h.b16 %v724
    %v3121 = vunpack.c.l.b16 %v725
    %v3122 = vunpack.c.h.b16 %v725
    %v3123 = vunpack.c.l.b16 %v726
    %v3124 = vunpack.c.h.b16 %v726
    %v3125 = vunpack.c.l.b16 %v727
    %v3126 = vunpack.c.h.b16 %v727
    %v3127 = vunpack.c.l.b16 %v728
    %v3128 = vunpack.c.h.b16 %v728
    %v3129 = vunpack.c.l.b16 %v729
    %v3130 = vunpack.c.h.b16 %v729
    %v3131 = vunpack.c.l.b16 %v730
    %v3132 = vunpack.c.h.b16 %v730
    %v3133 = vunpack.c.l.b16 %v731
    %v3134 = vunpack.c.h.b16 %v731
    %v3135 = vunpack.c.l.b16 %v732
    %v3136 = vunpack.c.h.b16 %v732
    %v3137 = vunpack.c.l.b16 %v733
    %v3138 = vunpack.c.h.b16 %v733
    %v3139 = vunpack.c.l.b16 %v734
    %v3140 = vunpack.c.h.b16 %v734
    %v3141 = vunpack.c.l.b16 %v735
    %v3142 = vunpack.c.h.b16 %v735
    %v3143 = vunpack.c.l.b16 %v736
    %v3144 = vunpack.c.h.b16 %v736
    %v3145 = vunpack.c.l.b16 %v737
    %v3146 = vunpack.c.h.b16 %v737
    %v3147 = vunpack.c.l.b16 %v738
    %v3148 = vunpack.c.h.b16 %v738
    %v3149 = vunpack.c.l.b16 %v739
    %v3150 = vunpack.c.h.b16 %v739
    %v3151 = vunpack.c.l.b16 %v740
    %v3152 = vunpack.c.h.b16 %v740
    %v3153 = vunpack.c.l.b16 %v741
    %v3154 = vunpack.c.h.b16 %v741
    %v3155 = vunpack.c.l.b16 %v742
    %v3156 = vunpack.c.h.b16 %v742
    %v3157 = vunpack.c.l.b16 %v743
    %v3158 = vunpack.c.h.b16 %v743
    %v3159 = vunpack.c.l.b16 %v744
    %v3160 = vunpack.c.h.b16 %v744
    %v3161 = vunpack.c.l.b16 %v745
    %v3162 = vunpack.c.h.b16 %v745
    %v3163 = vunpack.c.l.b16 %v746
    %v3164 = vunpack.c.h.b16 %v746
    %v3165 = vunpack.c.l.b16 %v747
    %v3166 = vunpack.c.h.b16 %v747
    %v3167 = vunpack.c.l.b16 %v748
    %v3168 = vunpack.c.h.b16 %v748
    %v3169 = vunpack.c.l.b16 %v749
    %v3170 = vunpack.c.h.b16 %v749
    %v3171 = vunpack.c.l.b16 %v750
    %v3172 = vunpack.c.h.b16 %v750
    %v3173 = vunpack.c.l.b16 %v751
    %v3174 = vunpack.c.h.b16 %v751
    %v3175 = vunpack.c.l.b16 %v752
    %v3176 = vunpack.c.h.b16 %v752
    %v3177 = vunpack.c.l.b16 %v753
    %v3178 = vunpack.c.h.b16 %v753
    %v3179 = vunpack.c.l.b16 %v754
    %v3180 = vunpack.c.h.b16 %v754
    %v3181 = vunpack.c.l.b16 %v755
    %v3182 = vunpack.c.h.b16 %v755
    %v3183 = vunpack.c.l.b16 %v756
    %v3184 = vunpack.c.h.b16 %v756
    %v3185 = vunpack.c.l.b16 %v757
    %v3186 = vunpack.c.h.b16 %v757
    %v3187 = vunpack.c.l.b16 %v758
    %v3188 = vunpack.c.h.b16 %v758
    %v3189 = vunpack.c.l.b16 %v759
    %v3190 = vunpack.c.h.b16 %v759
    %v3191 = vunpack.c.l.b16 %v760
    %v3192 = vunpack.c.h.b16 %v760
    %v3193 = vunpack.c.l.b16 %v761
    %v3194 = vunpack.c.h.b16 %v761
    %v3195 = vunpack.c.l.b16 %v762
    %v3196 = vunpack.c.h.b16 %v762
    %v3197 = vunpack.c.l.b16 %v763
    %v3198 = vunpack.c.h.b16 %v763
    %v3199 = vunpack.c.l.b16 %v764
    %v3200 = vunpack.c.h.b16 %v764
    %v3201 = vunpack.c.l.b16 %v765
    %v3202 = vunpack.c.h.b16 %v765
    %v3203 = vunpack.c.l.b16 %v766
    %v3204 = vunpack.c.h.b16 %v766
    %v3205 = vunpack.c.l.b16 %v767
    %v3206 = vunpack.c.h.b16 %v767
    %v3207 = vunpack.c.l.b16 %v768
    %v3208 = vunpack.c.h.b16 %v768
    %v3209 = vunpack.c.l.b16 %v769
    %v3210 = vunpack.c.h.b16 %v769
    %v3211 = vunpack.c.l.b16 %v770
    %v3212 = vunpack.c.h.b16 %v770
    %v3213 = vunpack.c.l.b16 %v771
    %v3214 = vunpack.c.h.b16 %v771
    %v3215 = vunpack.c.l.b16 %v772
    %v3216 = vunpack.c.h.b16 %v772
    %v3217 = vunpack.c.l.b16 %v773
    %v3218 = vunpack.c.h.b16 %v773
    %v3219 = vunpack.c.l.b16 %v774
    %v3220 = vunpack.c.h.b16 %v774
    %v3221 = vunpack.c.l.b16 %v775
    %v3222 = vunpack.c.h.b16 %v775
    %v3223 = vunpack.c.l.b16 %v776
    %v3224 = vunpack.c.h.b16 %v776
    %v3225 = vunpack.c.l.b16 %v777
    %v3226 = vunpack.c.h.b16 %v777
    %v3227 = vunpack.c.l.b16 %v778
    %v3228 = vunpack.c.h.b16 %v778
    %v3229 = vunpack.c.l.b16 %v779
    %v3230 = vunpack.c.h.b16 %v779
    %v3231 = vunpack.c.l.b16 %v780
    %v3232 = vunpack.c.h.b16 %v780
    %v3233 = vunpack.c.l.b16 %v781
    %v3234 = vunpack.c.h.b16 %v781
    %v3235 = vunpack.c.l.b16 %v782
    %v3236 = vunpack.c.h.b16 %v782
    %v3237 = vunpack.c.l.b16 %v783
    %v3238 = vunpack.c.h.b16 %v783
    %v3239 = vunpack.c.l.b16 %v784
    %v3240 = vunpack.c.h.b16 %v784
    %v3241 = vunpack.c.l.b16 %v785
    %v3242 = vunpack.c.h.b16 %v785
    %v3243 = vunpack.c.l.b16 %v786
    %v3244 = vunpack.c.h.b16 %v786
    %v3245 = vunpack.c.l.b16 %v787
    %v3246 = vunpack.c.h.b16 %v787
    %v3247 = vunpack.c.l.b16 %v788
    %v3248 = vunpack.c.h.b16 %v788
    %v3249 = vunpack.c.l.b16 %v789
    %v3250 = vunpack.c.h.b16 %v789
    %v3251 = vunpack.c.l.b16 %v790
    %v3252 = vunpack.c.h.b16 %v790
    %v3253 = vunpack.c.l.b16 %v791
    %v3254 = vunpack.c.h.b16 %v791
    %v3255 = vunpack.c.l.b16 %v792
    %v3256 = vunpack.c.h.b16 %v792
    %v3257 = vunpack.c.l.b16 %v793
    %v3258 = vunpack.c.h.b16 %v793
    %v3259 = vunpack.c.l.b16 %v794
    %v3260 = vunpack.c.h.b16 %v794
    %v3261 = vunpack.c.l.b16 %v795
    %v3262 = vunpack.c.h.b16 %v795
    %v3263 = vunpack.c.l.b16 %v796
    %v3264 = vunpack.c.h.b16 %v796
    %v3265 = vunpack.c.l.b16 %v797
    %v3266 = vunpack.c.h.b16 %v797
    %v3267 = vunpack.c.l.b16 %v798
    %v3268 = vunpack.c.h.b16 %v798
    %v3269 = vunpack.c.l.b16 %v799
    %v3270 = vunpack.c.h.b16 %v799
    %v3271 = vunpack.c.l.b16 %v800
    %v3272 = vunpack.c.h.b16 %v800
    %v3273 = vunpack.c.l.b16 %v801
    %v3274 = vunpack.c.h.b16 %v801
    %v3275 = vunpack.c.l.b16 %v802
    %v3276 = vunpack.c.h.b16 %v802
    %v3277 = vunpack.c.l.b16 %v803
    %v3278 = vunpack.c.h.b16 %v803
    %v3279 = vunpack.c.l.b16 %v804
    %v3280 = vunpack.c.h.b16 %v804
    %v3281 = vunpack.c.l.b16 %v805
    %v3282 = vunpack.c.h.b16 %v805
    %v3283 = vunpack.c.l.b16 %v806
    %v3284 = vunpack.c.h.b16 %v806
    %v3285 = vunpack.c.l.b16 %v807
    %v3286 = vunpack.c.h.b16 %v807
    %v3287 = vunpack.c.l.b16 %v808
    %v3288 = vunpack.c.h.b16 %v808
    %v3289 = vunpack.c.l.b16 %v809
    %v3290 = vunpack.c.h.b16 %v809
    %v3291 = vunpack.c.l.b16 %v810
    %v3292 = vunpack.c.h.b16 %v810
    %v3293 = vunpack.c.l.b16 %v811
    %v3294 = vunpack.c.h.b16 %v811
    %v3295 = vunpack.c.l.b16 %v812
    %v3296 = vunpack.c.h.b16 %v812
    %v3297 = vunpack.c.l.b16 %v813
    %v3298 = vunpack.c.h.b16 %v813
    %v3299 = vunpack.c.l.b16 %v814
    %v3300 = vunpack.c.h.b16 %v814
    %v3301 = vunpack.c.l.b16 %v815
    %v3302 = vunpack.c.h.b16 %v815
    %v3303 = vunpack.c.l.b16 %v816
    %v3304 = vunpack.c.h.b16 %v816
    %v3305 = vunpack.c.l.b16 %v817
    %v3306 = vunpack.c.h.b16 %v817
    %v3307 = vunpack.c.l.b16 %v818
    %v3308 = vunpack.c.h.b16 %v818
    %v3309 = vunpack.c.l.b16 %v819
    %v3310 = vunpack.c.h.b16 %v819
    %v3311 = vunpack.c.l.b16 %v820
    %v3312 = vunpack.c.h.b16 %v820
    %v3313 = vunpack.c.l.b16 %v821
    %v3314 = vunpack.c.h.b16 %v821
    %v3315 = vunpack.c.l.b16 %v822
    %v3316 = vunpack.c.h.b16 %v822
    %v3317 = vunpack.c.l.b16 %v823
    %v3318 = vunpack.c.h.b16 %v823
    %v3319 = vunpack.c.l.b16 %v824
    %v3320 = vunpack.c.h.b16 %v824
    %v3321 = vunpack.c.l.b16 %v825
    %v3322 = vunpack.c.h.b16 %v825
    %v3323 = vunpack.c.l.b16 %v826
    %v3324 = vunpack.c.h.b16 %v826
    %v3325 = vunpack.c.l.b16 %v827
    %v3326 = vunpack.c.h.b16 %v827
    %v3327 = vunpack.c.l.b16 %v828
    %v3328 = vunpack.c.h.b16 %v828
    %v3329 = vunpack.c.l.b16 %v829
    %v3330 = vunpack.c.h.b16 %v829
    %v3331 = vunpack.c.l.b16 %v830
    %v3332 = vunpack.c.h.b16 %v830
    %v3333 = vunpack.c.l.b16 %v831
    %v3334 = vunpack.c.h.b16 %v831
    %v3335 = vunpack.c.l.b16 %v832
    %v3336 = vunpack.c.h.b16 %v832
    %v3337 = vunpack.c.l.b16 %v833
    %v3338 = vunpack.c.h.b16 %v833
    %v3339 = vunpack.c.l.b16 %v834
    %v3340 = vunpack.c.h.b16 %v834
    %v3341 = vunpack.c.l.b16 %v835
    %v3342 = vunpack.c.h.b16 %v835
    %v3343 = vunpack.c.l.b16 %v836
    %v3344 = vunpack.c.h.b16 %v836
    %v3345 = vunpack.c.l.b16 %v837
    %v3346 = vunpack.c.h.b16 %v837
    %v3347 = vunpack.c.l.b16 %v838
    %v3348 = vunpack.c.h.b16 %v838
    %v3349 = vunpack.c.l.b16 %v839
    %v3350 = vunpack.c.h.b16 %v839
    %v3351 = vunpack.c.l.b16 %v840
    %v3352 = vunpack.c.h.b16 %v840
    %v3353 = vunpack.c.l.b16 %v841
    %v3354 = vunpack.c.h.b16 %v841
    %v3355 = vunpack.c.l.b16 %v842
    %v3356 = vunpack.c.h.b16 %v842
    %v3357 = vunpack.c.l.b16 %v843
    %v3358 = vunpack.c.h.b16 %v843
    %v3359 = vunpack.c.l.b16 %v844
    %v3360 = vunpack.c.h.b16 %v844
    %v3361 = vunpack.c.l.b16 %v845
    %v3362 = vunpack.c.h.b16 %v845
    %v3363 = vunpack.c.l.b16 %v846
    %v3364 = vunpack.c.h.b16 %v846
    %v3365 = vunpack.c.l.b16 %v847
    %v3366 = vunpack.c.h.b16 %v847
    %v3367 = vunpack.c.l.b16 %v848
    %v3368 = vunpack.c.h.b16 %v848
    %v3369 = vunpack.c.l.b16 %v849
    %v3370 = vunpack.c.h.b16 %v849
    %v3371 = vunpack.c.l.b16 %v850
    %v3372 = vunpack.c.h.b16 %v850
    %v3373 = vunpack.c.l.b16 %v851
    %v3374 = vunpack.c.h.b16 %v851
    %v3375 = vunpack.c.l.b16 %v852
    %v3376 = vunpack.c.h.b16 %v852
    %v3377 = vunpack.c.l.b16 %v853
    %v3378 = vunpack.c.h.b16 %v853
    %v3379 = vunpack.c.l.b16 %v854
    %v3380 = vunpack.c.h.b16 %v854
    %v3381 = vunpack.c.l.b16 %v855
    %v3382 = vunpack.c.h.b16 %v855
    %v3383 = vunpack.c.l.b16 %v856
    %v3384 = vunpack.c.h.b16 %v856
    %v3385 = vunpack.c.l.b16 %v857
    %v3386 = vunpack.c.h.b16 %v857
    %v3387 = vunpack.c.l.b16 %v858
    %v3388 = vunpack.c.h.b16 %v858
    %v3389 = vunpack.c.l.b16 %v859
    %v3390 = vunpack.c.h.b16 %v859
    %v3391 = vunpack.c.l.b16 %v860
    %v3392 = vunpack.c.h.b16 %v860
    %v3393 = vunpack.c.l.b16 %v861
    %v3394 = vunpack.c.h.b16 %v861
    %v3395 = vunpack.c.l.b16 %v862
    %v3396 = vunpack.c.h.b16 %v862
    %v3397 = vunpack.c.l.b16 %v863
    %v3398 = vunpack.c.h.b16 %v863
    %v3399 = vunpack.c.l.b16 %v864
    %v3400 = vunpack.c.h.b16 %v864
    %v3401 = vunpack.c.l.b16 %v865
    %v3402 = vunpack.c.h.b16 %v865
    %v3403 = vunpack.c.l.b16 %v866
    %v3404 = vunpack.c.h.b16 %v866
    %v3405 = vunpack.c.l.b16 %v867
    %v3406 = vunpack.c.h.b16 %v867
    %v3407 = vunpack.c.l.b16 %v868
    %v3408 = vunpack.c.h.b16 %v868
    %v3409 = vunpack.c.l.b16 %v869
    %v3410 = vunpack.c.h.b16 %v869
    %v3411 = vunpack.c.l.b16 %v870
    %v3412 = vunpack.c.h.b16 %v870
    %v3413 = vunpack.c.l.b16 %v871
    %v3414 = vunpack.c.h.b16 %v871
    %v3415 = vunpack.c.l.b16 %v872
    %v3416 = vunpack.c.h.b16 %v872
    %v3417 = vunpack.c.l.b16 %v873
    %v3418 = vunpack.c.h.b16 %v873
    %v3419 = vunpack.c.l.b16 %v874
    %v3420 = vunpack.c.h.b16 %v874
    %v3421 = vunpack.c.l.b16 %v875
    %v3422 = vunpack.c.h.b16 %v875
    %v3423 = vunpack.c.l.b16 %v876
    %v3424 = vunpack.c.h.b16 %v876
    %v3425 = vunpack.c.l.b16 %v877
    %v3426 = vunpack.c.h.b16 %v877
    %v3427 = vunpack.c.l.b16 %v878
    %v3428 = vunpack.c.h.b16 %v878
    %v3429 = vunpack.c.l.b16 %v879
    %v3430 = vunpack.c.h.b16 %v879
    %v3431 = vunpack.c.l.b16 %v880
    %v3432 = vunpack.c.h.b16 %v880
    %v3433 = vunpack.c.l.b16 %v881
    %v3434 = vunpack.c.h.b16 %v881
    %v3435 = vunpack.c.l.b16 %v882
    %v3436 = vunpack.c.h.b16 %v882
    %v3437 = vunpack.c.l.b16 %v883
    %v3438 = vunpack.c.h.b16 %v883
    %v3439 = vunpack.c.l.b16 %v884
    %v3440 = vunpack.c.h.b16 %v884
    %v3441 = vunpack.c.l.b16 %v885
    %v3442 = vunpack.c.h.b16 %v885
    %v3443 = vunpack.c.l.b16 %v886
    %v3444 = vunpack.c.h.b16 %v886
    %v3445 = vunpack.c.l.b16 %v887
    %v3446 = vunpack.c.h.b16 %v887
    %v3447 = vunpack.c.l.b16 %v888
    %v3448 = vunpack.c.h.b16 %v888
    %v3449 = vunpack.c.l.b16 %v889
    %v3450 = vunpack.c.h.b16 %v889
    %v3451 = vunpack.c.l.b16 %v890
    %v3452 = vunpack.c.h.b16 %v890
    %v3453 = vunpack.c.l.b16 %v891
    %v3454 = vunpack.c.h.b16 %v891
    %v3455 = vunpack.c.l.b16 %v892
    %v3456 = vunpack.c.h.b16 %v892
    %v3457 = vunpack.c.l.b16 %v893
    %v3458 = vunpack.c.h.b16 %v893
    %v3459 = vunpack.c.l.b16 %v894
    %v3460 = vunpack.c.h.b16 %v894
    %v3461 = vunpack.c.l.b16 %v895
    %v3462 = vunpack.c.h.b16 %v895
    %v3463 = vunpack.c.l.b16 %v896
    %v3464 = vunpack.c.h.b16 %v896
    %v3465 = vunpack.c.l.b16 %v897
    %v3466 = vunpack.c.h.b16 %v897
    %v3467 = vunpack.c.l.b16 %v898
    %v3468 = vunpack.c.h.b16 %v898
    %v3469 = vunpack.c.l.b16 %v899
    %v3470 = vunpack.c.h.b16 %v899
    %v3471 = vunpack.c.l.b16 %v900
    %v3472 = vunpack.c.h.b16 %v900
    %v3473 = vunpack.c.l.b16 %v901
    %v3474 = vunpack.c.h.b16 %v901
    %v3475 = vunpack.c.l.b16 %v902
    %v3476 = vunpack.c.h.b16 %v902
    %v3477 = vunpack.c.l.b16 %v903
    %v3478 = vunpack.c.h.b16 %v903
    %v3479 = vunpack.c.l.b16 %v904
    %v3480 = vunpack.c.h.b16 %v904
    %v3481 = vunpack.c.l.b16 %v905
    %v3482 = vunpack.c.h.b16 %v905
    %v3483 = vunpack.c.l.b16 %v906
    %v3484 = vunpack.c.h.b16 %v906
    %v3485 = vunpack.c.l.b16 %v907
    %v3486 = vunpack.c.h.b16 %v907
    %v3487 = vunpack.c.l.b16 %v908
    %v3488 = vunpack.c.h.b16 %v908
    %v3489 = vunpack.c.l.b16 %v909
    %v3490 = vunpack.c.h.b16 %v909
    %v3491 = vunpack.c.l.b16 %v910
    %v3492 = vunpack.c.h.b16 %v910
    %v3493 = vunpack.c.l.b16 %v911
    %v3494 = vunpack.c.h.b16 %v911
    %v3495 = vunpack.c.l.b16 %v912
    %v3496 = vunpack.c.h.b16 %v912
    %v3497 = vunpack.c.l.b16 %v913
    %v3498 = vunpack.c.h.b16 %v913
    %v3499 = vunpack.c.l.b16 %v914
    %v3500 = vunpack.c.h.b16 %v914
    %v3501 = vunpack.c.l.b16 %v915
    %v3502 = vunpack.c.h.b16 %v915
    %v3503 = vunpack.c.l.b16 %v916
    %v3504 = vunpack.c.h.b16 %v916
    %v3505 = vunpack.c.l.b16 %v917
    %v3506 = vunpack.c.h.b16 %v917
    %v3507 = vunpack.c.l.b16 %v918
    %v3508 = vunpack.c.h.b16 %v918
    %v3509 = vunpack.c.l.b16 %v919
    %v3510 = vunpack.c.h.b16 %v919
    %v3511 = vunpack.c.l.b16 %v920
    %v3512 = vunpack.c.h.b16 %v920
    %v3513 = vunpack.c.l.b16 %v921
    %v3514 = vunpack.c.h.b16 %v921
    %v3515 = vunpack.c.l.b16 %v922
    %v3516 = vunpack.c.h.b16 %v922
    %v3517 = vunpack.c.l.b16 %v923
    %v3518 = vunpack.c.h.b16 %v923
    %v3519 = vunpack.c.l.b16 %v924
    %v3520 = vunpack.c.h.b16 %v924
    %v3521 = vunpack.c.l.b16 %v925
    %v3522 = vunpack.c.h.b16 %v925
    %v3523 = vunpack.c.l.b16 %v926
    %v3524 = vunpack.c.h.b16 %v926
    %v3525 = vunpack.c.l.b16 %v927
    %v3526 = vunpack.c.h.b16 %v927
    %v3527 = vunpack.c.l.b16 %v928
    %v3528 = vunpack.c.h.b16 %v928
    %v3529 = vunpack.c.l.b16 %v929
    %v3530 = vunpack.c.h.b16 %v929
    %v3531 = vunpack.c.l.b16 %v930
    %v3532 = vunpack.c.h.b16 %v930
    %v3533 = vunpack.c.l.b16 %v931
    %v3534 = vunpack.c.h.b16 %v931
    %v3535 = vunpack.c.l.b16 %v932
    %v3536 = vunpack.c.h.b16 %v932
    %v3537 = vunpack.c.l.b16 %v933
    %v3538 = vunpack.c.h.b16 %v933
    %v3539 = vunpack.c.l.b16 %v934
    %v3540 = vunpack.c.h.b16 %v934
    %v3541 = vunpack.c.l.b16 %v935
    %v3542 = vunpack.c.h.b16 %v935
    %v3543 = vunpack.c.l.b16 %v936
    %v3544 = vunpack.c.h.b16 %v936
    %v3545 = vunpack.c.l.b16 %v937
    %v3546 = vunpack.c.h.b16 %v937
    %v3547 = vunpack.c.l.b16 %v938
    %v3548 = vunpack.c.h.b16 %v938
    %v3549 = vunpack.c.l.b16 %v939
    %v3550 = vunpack.c.h.b16 %v939
    %v3551 = vunpack.c.l.b16 %v940
    %v3552 = vunpack.c.h.b16 %v940
    %v3553 = vunpack.c.l.b16 %v941
    %v3554 = vunpack.c.h.b16 %v941
    %v3555 = vunpack.c.l.b16 %v942
    %v3556 = vunpack.c.h.b16 %v942
    %v3557 = vunpack.c.l.b16 %v943
    %v3558 = vunpack.c.h.b16 %v943
    %v3559 = vunpack.c.l.b16 %v944
    %v3560 = vunpack.c.h.b16 %v944
    %v3561 = vunpack.c.l.b16 %v945
    %v3562 = vunpack.c.h.b16 %v945
    %v3563 = vunpack.c.l.b16 %v946
    %v3564 = vunpack.c.h.b16 %v946
    %v3565 = vunpack.c.l.b16 %v947
    %v3566 = vunpack.c.h.b16 %v947
    %v3567 = vunpack.c.l.b16 %v948
    %v3568 = vunpack.c.h.b16 %v948
    %v3569 = vunpack.c.l.b16 %v949
    %v3570 = vunpack.c.h.b16 %v949
    %v3571 = vunpack.c.l.b16 %v950
    %v3572 = vunpack.c.h.b16 %v950
    %v3573 = vunpack.c.l.b16 %v951
    %v3574 = vunpack.c.h.b16 %v951
    %v3575 = vunpack.c.l.b16 %v952
    %v3576 = vunpack.c.h.b16 %v952
    %v3577 = vunpack.c.l.b16 %v953
    %v3578 = vunpack.c.h.b16 %v953
    %v3579 = vunpack.c.l.b16 %v954
    %v3580 = vunpack.c.h.b16 %v954
    %v3581 = vunpack.c.l.b16 %v955
    %v3582 = vunpack.c.h.b16 %v955
    %v3583 = vunpack.c.l.b16 %v956
    %v3584 = vunpack.c.h.b16 %v956
    %v3585 = vunpack.c.l.b16 %v957
    %v3586 = vunpack.c.h.b16 %v957
    %v3587 = vunpack.c.l.b16 %v958
    %v3588 = vunpack.c.h.b16 %v958
    %v3589 = vunpack.c.l.b16 %v959
    %v3590 = vunpack.c.h.b16 %v959
    %v3591 = vunpack.c.l.b16 %v960
    %v3592 = vunpack.c.h.b16 %v960
    %v3593 = vunpack.c.l.b16 %v961
    %v3594 = vunpack.c.h.b16 %v961
    %v3595 = vunpack.c.l.b16 %v962
    %v3596 = vunpack.c.h.b16 %v962
    %v3597 = vunpack.c.l.b16 %v963
    %v3598 = vunpack.c.h.b16 %v963
    %v3599 = vunpack.c.l.b16 %v964
    %v3600 = vunpack.c.h.b16 %v964
    %v3601 = vunpack.c.l.b16 %v965
    %v3602 = vunpack.c.h.b16 %v965
    %v3603 = vunpack.c.l.b16 %v966
    %v3604 = vunpack.c.h.b16 %v966
    %v3605 = vunpack.c.l.b16 %v967
    %v3606 = vunpack.c.h.b16 %v967
    %v3607 = vunpack.c.l.b16 %v968
    %v3608 = vunpack.c.h.b16 %v968
    %v3609 = vunpack.c.l.b16 %v969
    %v3610 = vunpack.c.h.b16 %v969
    %v3611 = vunpack.c.l.b16 %v970
    %v3612 = vunpack.c.h.b16 %v970
    %v3613 = vunpack.c.l.b16 %v971
    %v3614 = vunpack.c.h.b16 %v971
    %v3615 = vunpack.c.l.b16 %v972
    %v3616 = vunpack.c.h.b16 %v972
    %v3617 = vunpack.c.l.b16 %v973
    %v3618 = vunpack.c.h.b16 %v973
    %v3619 = vunpack.c.l.b16 %v974
    %v3620 = vunpack.c.h.b16 %v974
    %v3621 = vunpack.c.l.b16 %v975
    %v3622 = vunpack.c.h.b16 %v975
    %v3623 = vunpack.c.l.b16 %v976
    %v3624 = vunpack.c.h.b16 %v976
    %v3625 = vunpack.c.l.b16 %v977
    %v3626 = vunpack.c.h.b16 %v977
    %v3627 = vunpack.c.l.b16 %v978
    %v3628 = vunpack.c.h.b16 %v978
    %v3629 = vunpack.c.l.b16 %v979
    %v3630 = vunpack.c.h.b16 %v979
    %v3631 = vunpack.c.l.b16 %v980
    %v3632 = vunpack.c.h.b16 %v980
    %v3633 = vunpack.c.l.b16 %v981
    %v3634 = vunpack.c.h.b16 %v981
    %v3635 = vunpack.c.l.b16 %v982
    %v3636 = vunpack.c.h.b16 %v982
    %v3637 = vunpack.c.l.b16 %v983
    %v3638 = vunpack.c.h.b16 %v983
    %v3639 = vunpack.c.l.b16 %v984
    %v3640 = vunpack.c.h.b16 %v984
    %v3641 = vunpack.c.l.b16 %v985
    %v3642 = vunpack.c.h.b16 %v985
    %v3643 = vunpack.c.l.b16 %v986
    %v3644 = vunpack.c.h.b16 %v986
    %v3645 = vunpack.c.l.b16 %v987
    %v3646 = vunpack.c.h.b16 %v987
    %v3647 = vunpack.c.l.b16 %v988
    %v3648 = vunpack.c.h.b16 %v988
    %v3649 = vunpack.c.l.b16 %v989
    %v3650 = vunpack.c.h.b16 %v989
    %v3651 = vunpack.c.l.b16 %v990
    %v3652 = vunpack.c.h.b16 %v990
    %v3653 = vunpack.c.l.b16 %v991
    %v3654 = vunpack.c.h.b16 %v991
    %v3655 = vunpack.c.l.b16 %v992
    %v3656 = vunpack.c.h.b16 %v992
    %v3657 = vunpack.c.l.b16 %v993
    %v3658 = vunpack.c.h.b16 %v993
    %v3659 = vunpack.c.l.b16 %v994
    %v3660 = vunpack.c.h.b16 %v994
    %v3661 = vunpack.c.l.b16 %v995
    %v3662 = vunpack.c.h.b16 %v995
    %v3663 = vunpack.c.l.b16 %v996
    %v3664 = vunpack.c.h.b16 %v996
    %v3665 = vunpack.c.l.b16 %v997
    %v3666 = vunpack.c.h.b16 %v997
    %v3667 = vunpack.c.l.b16 %v998
    %v3668 = vunpack.c.h.b16 %v998
    %v3669 = vunpack.c.l.b16 %v999
    %v3670 = vunpack.c.h.b16 %v999
    %v3671 = vunpack.c.l.b16 %v1000
    %v3672 = vunpack.c.h.b16 %v1000
    %v3673 = vunpack.c.l.b16 %v1001
    %v3674 = vunpack.c.h.b16 %v1001
    %v3675 = vunpack.c.l.b16 %v1002
    %v3676 = vunpack.c.h.b16 %v1002
    %v3677 = vunpack.c.l.b16 %v1003
    %v3678 = vunpack.c.h.b16 %v1003
    %v3679 = vunpack.c.l.b16 %v1004
    %v3680 = vunpack.c.h.b16 %v1004
    %v3681 = vunpack.c.l.b16 %v1005
    %v3682 = vunpack.c.h.b16 %v1005
    %v3683 = vunpack.c.l.b16 %v1006
    %v3684 = vunpack.c.h.b16 %v1006
    %v3685 = vunpack.c.l.b16 %v1007
    %v3686 = vunpack.c.h.b16 %v1007
    %v3687 = vunpack.c.l.b16 %v1008
    %v3688 = vunpack.c.h.b16 %v1008
    %v3689 = vunpack.c.l.b16 %v1009
    %v3690 = vunpack.c.h.b16 %v1009
    %v3691 = vunpack.c.l.b16 %v1010
    %v3692 = vunpack.c.h.b16 %v1010
    %v3693 = vunpack.c.l.b16 %v1011
    %v3694 = vunpack.c.h.b16 %v1011
    %v3695 = vunpack.c.l.b16 %v1012
    %v3696 = vunpack.c.h.b16 %v1012
    %v3697 = vunpack.c.l.b16 %v1013
    %v3698 = vunpack.c.h.b16 %v1013
    %v3699 = vunpack.c.l.b16 %v1014
    %v3700 = vunpack.c.h.b16 %v1014
    %v3701 = vunpack.c.l.b16 %v1015
    %v3702 = vunpack.c.h.b16 %v1015
    %v3703 = vunpack.c.l.b16 %v1016
    %v3704 = vunpack.c.h.b16 %v1016
    %v3705 = vunpack.c.l.b16 %v1017
    %v3706 = vunpack.c.h.b16 %v1017
    %v3707 = vunpack.c.l.b16 %v1018
    %v3708 = vunpack.c.h.b16 %v1018
    %v3709 = vunpack.c.l.b16 %v1019
    %v3710 = vunpack.c.h.b16 %v1019
    %v3711 = vunpack.c.l.b16 %v1020
    %v3712 = vunpack.c.h.b16 %v1020
    %v3713 = vunpack.c.l.b16 %v1021
    %v3714 = vunpack.c.h.b16 %v1021
    %v3715 = vunpack.c.l.b16 %v1022
    %v3716 = vunpack.c.h.b16 %v1022
    %v3717 = vunpack.c.l.b16 %v1023
    %v3718 = vunpack.c.h.b16 %v1023
    %v3719 = vunpack.c.l.b16 %v1024
    %v3720 = vunpack.c.h.b16 %v1024
    %v3721 = vunpack.c.l.b16 %v1025
    %v3722 = vunpack.c.h.b16 %v1025
    %v3723 = vunpack.c.l.b16 %v1026
    %v3724 = vunpack.c.h.b16 %v1026
    %v3725 = vunpack.c.l.b16 %v1027
    %v3726 = vunpack.c.h.b16 %v1027
    %v3727 = vunpack.c.l.b16 %v1028
    %v3728 = vunpack.c.h.b16 %v1028
    %v3729 = vunpack.c.l.b16 %v1029
    %v3730 = vunpack.c.h.b16 %v1029
    %v3731 = vunpack.c.l.b16 %v1030
    %v3732 = vunpack.c.h.b16 %v1030
    %v3733 = vunpack.c.l.b16 %v1031
    %v3734 = vunpack.c.h.b16 %v1031
    %v3735 = vunpack.c.l.b16 %v1032
    %v3736 = vunpack.c.h.b16 %v1032
    %v3737 = vunpack.c.l.b16 %v1033
    %v3738 = vunpack.c.h.b16 %v1033
    %v3739 = vunpack.c.l.b16 %v1034
    %v3740 = vunpack.c.h.b16 %v1034
    %v3741 = vunpack.c.l.b16 %v1035
    %v3742 = vunpack.c.h.b16 %v1035
    %v3743 = vunpack.c.l.b16 %v1036
    %v3744 = vunpack.c.h.b16 %v1036
    %v3745 = vunpack.c.l.b16 %v1037
    %v3746 = vunpack.c.h.b16 %v1037
    %v3747 = vunpack.c.l.b16 %v1038
    %v3748 = vunpack.c.h.b16 %v1038
    %v3749 = vunpack.c.l.b16 %v1039
    %v3750 = vunpack.c.h.b16 %v1039
    %v3751 = vunpack.c.l.b16 %v1040
    %v3752 = vunpack.c.h.b16 %v1040
    %v3753 = vunpack.c.l.b16 %v1041
    %v3754 = vunpack.c.h.b16 %v1041
    %v3755 = vunpack.c.l.b16 %v1042
    %v3756 = vunpack.c.h.b16 %v1042
    %v3757 = vunpack.c.l.b16 %v1043
    %v3758 = vunpack.c.h.b16 %v1043
    %v3759 = vunpack.c.l.b16 %v1044
    %v3760 = vunpack.c.h.b16 %v1044
    %v3761 = vunpack.c.l.b16 %v1045
    %v3762 = vunpack.c.h.b16 %v1045
    %v3763 = vunpack.c.l.b16 %v1046
    %v3764 = vunpack.c.h.b16 %v1046
    %v3765 = vunpack.c.l.b16 %v1047
    %v3766 = vunpack.c.h.b16 %v1047
    %v3767 = vunpack.c.l.b16 %v1048
    %v3768 = vunpack.c.h.b16 %v1048
    %v3769 = vunpack.c.l.b16 %v1049
    %v3770 = vunpack.c.h.b16 %v1049
    %v3771 = vunpack.c.l.b16 %v1050
    %v3772 = vunpack.c.h.b16 %v1050
    %v3773 = vunpack.c.l.b16 %v1051
    %v3774 = vunpack.c.h.b16 %v1051
    %v3775 = vunpack.c.l.b16 %v1052
    %v3776 = vunpack.c.h.b16 %v1052
    %v3777 = vunpack.c.l.b16 %v1053
    %v3778 = vunpack.c.h.b16 %v1053
    %v3779 = vunpack.c.l.b16 %v1054
    %v3780 = vunpack.c.h.b16 %v1054
    %v3781 = vunpack.c.l.b16 %v1055
    %v3782 = vunpack.c.h.b16 %v1055
    %v3783 = vunpack.c.l.b16 %v1056
    %v3784 = vunpack.c.h.b16 %v1056
    %v3785 = vunpack.c.l.b16 %v1057
    %v3786 = vunpack.c.h.b16 %v1057
    %v3787 = vunpack.c.l.b16 %v1058
    %v3788 = vunpack.c.h.b16 %v1058
    %v3789 = vunpack.c.l.b16 %v1059
    %v3790 = vunpack.c.h.b16 %v1059
    %v3791 = vunpack.c.l.b16 %v1060
    %v3792 = vunpack.c.h.b16 %v1060
    %v3793 = vunpack.c.l.b16 %v1061
    %v3794 = vunpack.c.h.b16 %v1061
    %v3795 = vunpack.c.l.b16 %v1062
    %v3796 = vunpack.c.h.b16 %v1062
    %v3797 = vunpack.c.l.b16 %v1063
    %v3798 = vunpack.c.h.b16 %v1063
    %v3799 = vunpack.c.l.b16 %v1064
    %v3800 = vunpack.c.h.b16 %v1064
    %v3801 = vunpack.c.l.b16 %v1065
    %v3802 = vunpack.c.h.b16 %v1065
    %v3803 = vunpack.c.l.b16 %v1066
    %v3804 = vunpack.c.h.b16 %v1066
    %v3805 = vunpack.c.l.b16 %v1067
    %v3806 = vunpack.c.h.b16 %v1067
    %v3807 = vunpack.c.l.b16 %v1068
    %v3808 = vunpack.c.h.b16 %v1068
    %v3809 = vunpack.c.l.b16 %v1069
    %v3810 = vunpack.c.h.b16 %v1069
    %v3811 = vunpack.c.l.b16 %v1070
    %v3812 = vunpack.c.h.b16 %v1070
    %v3813 = vunpack.c.l.b16 %v1071
    %v3814 = vunpack.c.h.b16 %v1071
    %v3815 = vunpack.c.l.b16 %v1072
    %v3816 = vunpack.c.h.b16 %v1072
    %v3817 = vunpack.c.l.b16 %v1073
    %v3818 = vunpack.c.h.b16 %v1073
    %v3819 = vunpack.c.l.b16 %v1074
    %v3820 = vunpack.c.h.b16 %v1074
    %v3821 = vunpack.c.l.b16 %v1075
    %v3822 = vunpack.c.h.b16 %v1075
    %v3823 = vunpack.c.l.b16 %v1076
    %v3824 = vunpack.c.h.b16 %v1076
    %v3825 = vunpack.c.l.b16 %v1077
    %v3826 = vunpack.c.h.b16 %v1077
    %v3827 = vunpack.c.l.b16 %v1078
    %v3828 = vunpack.c.h.b16 %v1078
    %v3829 = vunpack.c.l.b16 %v1079
    %v3830 = vunpack.c.h.b16 %v1079
    %v3831 = vunpack.c.l.b16 %v1080
    %v3832 = vunpack.c.h.b16 %v1080
    %v3833 = vunpack.c.l.b16 %v1081
    %v3834 = vunpack.c.h.b16 %v1081
    %v3835 = vunpack.c.l.b16 %v1082
    %v3836 = vunpack.c.h.b16 %v1082
    %v3837 = vunpack.c.l.b16 %v1083
    %v3838 = vunpack.c.h.b16 %v1083
    %v3839 = vunpack.c.l.b16 %v1084
    %v3840 = vunpack.c.h.b16 %v1084
    %v3841 = vunpack.c.l.b16 %v1085
    %v3842 = vunpack.c.h.b16 %v1085
    %v3843 = vunpack.c.l.b16 %v1086
    %v3844 = vunpack.c.h.b16 %v1086
    %v3845 = vunpack.c.l.b16 %v1087
    %v3846 = vunpack.c.h.b16 %v1087
    %v3847 = vunpack.c.l.b16 %v1088
    %v3848 = vunpack.c.h.b16 %v1088
    %v3849 = vunpack.c.l.b16 %v1089
    %v3850 = vunpack.c.h.b16 %v1089
    %v3851 = vunpack.c.l.b16 %v1090
    %v3852 = vunpack.c.h.b16 %v1090
    %v3853 = vunpack.c.l.b16 %v1091
    %v3854 = vunpack.c.h.b16 %v1091
    %v3855 = vunpack.c.l.b16 %v1092
    %v3856 = vunpack.c.h.b16 %v1092
    %v3857 = vunpack.c.l.b16 %v1093
    %v3858 = vunpack.c.h.b16 %v1093
    %v3859 = vunpack.c.l.b16 %v1094
    %v3860 = vunpack.c.h.b16 %v1094
    %v3861 = vunpack.c.l.b16 %v1095
    %v3862 = vunpack.c.h.b16 %v1095
    %v3863 = vunpack.c.l.b16 %v1096
    %v3864 = vunpack.c.h.b16 %v1096
    %v3865 = vpack.c.b16 %v2047, %v2041
    %v3866 = vpack.c.b16 %v2048, %v2042
    %v3867 = vpack.c.b16 %v2049, %v2043
    %v3868 = vpack.c.b16 %v2050, %v2044
    %v3869 = vpack.c.b16 %v2051, %v2045
    %v3870 = vpack.c.b16 %v2052, %v2046
    %v3871 = vpack.c.b16 %v2059, %v2053
    %v3872 = vpack.c.b16 %v2060, %v2054
    %v3873 = vpack.c.b16 %v2061, %v2055
    %v3874 = vpack.c.b16 %v2062, %v2056
    %v3875 = vpack.c.b16 %v2063, %v2057
    %v3876 = vpack.c.b16 %v2064, %v2058
    %v3877 = vpack.c.b16 %v2071, %v2065
    %v3878 = vpack.c.b16 %v2072, %v2066
    %v3879 = vpack.c.b16 %v2073, %v2067
    %v3880 = vpack.c.b16 %v2074, %v2068
    %v3881 = vpack.c.b16 %v2075, %v2069
    %v3882 = vpack.c.b16 %v2076, %v2070
    %v3883 = vpack.c.b16 %v2083, %v2077
    %v3884 = vpack.c.b16 %v2084, %v2078
    %v3885 = vpack.c.b16 %v2085, %v2079
    %v3886 = vpack.c.b16 %v2086, %v2080
    %v3887 = vpack.c.b16 %v2087, %v2081
    %v3888 = vpack.c.b16 %v2088, %v2082
    %v3889 = vpack.c.b16 %v2095, %v2089
    %v3890 = vpack.c.b16 %v2096, %v2090
    %v3891 = vpack.c.b16 %v2097, %v2091
    %v3892 = vpack.c.b16 %v2098, %v2092
    %v3893 = vpack.c.b16 %v2099, %v2093
    %v3894 = vpack.c.b16 %v2100, %v2094
    %v3895 = vpack.c.b16 %v2107, %v2101
    %v3896 = vpack.c.b16 %v2108, %v2102
    %v3897 = vpack.c.b16 %v2109, %v2103
    %v3898 = vpack.c.b16 %v2110, %v2104
    %v3899 = vpack.c.b16 %v2111, %v2105
    %v3900 = vpack.c.b16 %v2112, %v2106
    %v3901 = vpack.c.b16 %v2119, %v2113
    %v3902 = vpack.c.b16 %v2120, %v2114
    %v3903 = vpack.c.b16 %v2121, %v2115
    %v3904 = vpack.c.b16 %v2122, %v2116
    %v3905 = vpack.c.b16 %v2123, %v2117
    %v3906 = vpack.c.b16 %v2124, %v2118
    %v3907 = vpack.c.b16 %v2131, %v2125
    %v3908 = vpack.c.b16 %v2132, %v2126
    %v3909 = vpack.c.b16 %v2133, %v2127
    %v3910 = vpack.c.b16 %v2134, %v2128
    %v3911 = vpack.c.b16 %v2135, %v2129
    %v3912 = vpack.c.b16 %v2136, %v2130
    %v3913 = vpack.c.b16 %v2143, %v2137
    %v3914 = vpack.c.b16 %v2144, %v2138
    %v3915 = vpack.c.b16 %v2145, %v2139
    %v3916 = vpack.c.b16 %v2146, %v2140
    %v3917 = vpack.c.b16 %v2147, %v2141
    %v3918 = vpack.c.b16 %v2148, %v2142
    %v3919 = vpack.c.b16 %v2155, %v2149
    %v3920 = vpack.c.b16 %v2156, %v2150
    %v3921 = vpack.c.b16 %v2157, %v2151
    %v3922 = vpack.c.b16 %v2158, %v2152
    %v3923 = vpack.c.b16 %v2159, %v2153
    %v3924 = vpack.c.b16 %v2160, %v2154
    %v3925 = vpack.c.b16 %v2167, %v2161
    %v3926 = vpack.c.b16 %v2168, %v2162
    %v3927 = vpack.c.b16 %v2169, %v2163
    %v3928 = vpack.c.b16 %v2170, %v2164
    %v3929 = vpack.c.b16 %v2171, %v2165
    %v3930 = vpack.c.b16 %v2172, %v2166
    %v3931 = vpack.c.b16 %v2179, %v2173
    %v3932 = vpack.c.b16 %v2180, %v2174
    %v3933 = vpack.c.b16 %v2181, %v2175
    %v3934 = vpack.c.b16 %v2182, %v2176
    %v3935 = vpack.c.b16 %v2183, %v2177
    %v3936 = vpack.c.b16 %v2184, %v2178
    %v3937 = vpack.c.b16 %v2191, %v2185
    %v3938 = vpack.c.b16 %v2192, %v2186
    %v3939 = vpack.c.b16 %v2193, %v2187
    %v3940 = vpack.c.b16 %v2194, %v2188
    %v3941 = vpack.c.b16 %v2195, %v2189
    %v3942 = vpack.c.b16 %v2196, %v2190
    %v3943 = vpack.c.b16 %v2203, %v2197
    %v3944 = vpack.c.b16 %v2204, %v2198
    %v3945 = vpack.c.b16 %v2205, %v2199
    %v3946 = vpack.c.b16 %v2206, %v2200
    %v3947 = vpack.c.b16 %v2207, %v2201
    %v3948 = vpack.c.b16 %v2208, %v2202
    %v3949 = vpack.c.b16 %v2215, %v2209
    %v3950 = vpack.c.b16 %v2216, %v2210
    %v3951 = vpack.c.b16 %v2217, %v2211
    %v3952 = vpack.c.b16 %v2218, %v2212
    %v3953 = vpack.c.b16 %v2219, %v2213
    %v3954 = vpack.c.b16 %v2220, %v2214
    %v3955 = vpack.c.b16 %v2227, %v2221
    %v3956 = vpack.c.b16 %v2228, %v2222
    %v3957 = vpack.c.b16 %v2229, %v2223
    %v3958 = vpack.c.b16 %v2230, %v2224
    %v3959 = vpack.c.b16 %v2231, %v2225
    %v3960 = vpack.c.b16 %v2232, %v2226
    %v3961 = vpack.c.b16 %v2239, %v2233
    %v3962 = vpack.c.b16 %v2240, %v2234
    %v3963 = vpack.c.b16 %v2241, %v2235
    %v3964 = vpack.c.b16 %v2242, %v2236
    %v3965 = vpack.c.b16 %v2243, %v2237
    %v3966 = vpack.c.b16 %v2244, %v2238
    %v3967 = vpack.c.b16 %v2251, %v2245
    %v3968 = vpack.c.b16 %v2252, %v2246
    %v3969 = vpack.c.b16 %v2253, %v2247
    %v3970 = vpack.c.b16 %v2254, %v2248
    %v3971 = vpack.c.b16 %v2255, %v2249
    %v3972 = vpack.c.b16 %v2256, %v2250
    %v3973 = vpack.c.b16 %v2263, %v2257
    %v3974 = vpack.c.b16 %v2264, %v2258
    %v3975 = vpack.c.b16 %v2265, %v2259
    %v3976 = vpack.c.b16 %v2266, %v2260
    %v3977 = vpack.c.b16 %v2267, %v2261
    %v3978 = vpack.c.b16 %v2268, %v2262
    %v3979 = vpack.c.b16 %v2275, %v2269
    %v3980 = vpack.c.b16 %v2276, %v2270
    %v3981 = vpack.c.b16 %v2277, %v2271
    %v3982 = vpack.c.b16 %v2278, %v2272
    %v3983 = vpack.c.b16 %v2279, %v2273
    %v3984 = vpack.c.b16 %v2280, %v2274
    %v3985 = vpack.c.b16 %v2287, %v2281
    %v3986 = vpack.c.b16 %v2288, %v2282
    %v3987 = vpack.c.b16 %v2289, %v2283
    %v3988 = vpack.c.b16 %v2290, %v2284
    %v3989 = vpack.c.b16 %v2291, %v2285
    %v3990 = vpack.c.b16 %v2292, %v2286
    %v3991 = vpack.c.b16 %v2299, %v2293
    %v3992 = vpack.c.b16 %v2300, %v2294
    %v3993 = vpack.c.b16 %v2301, %v2295
    %v3994 = vpack.c.b16 %v2302, %v2296
    %v3995 = vpack.c.b16 %v2303, %v2297
    %v3996 = vpack.c.b16 %v2304, %v2298
    %v3997 = vpack.c.b16 %v2311, %v2305
    %v3998 = vpack.c.b16 %v2312, %v2306
    %v3999 = vpack.c.b16 %v2313, %v2307
    %v4000 = vpack.c.b16 %v2314, %v2308
    %v4001 = vpack.c.b16 %v2315, %v2309
    %v4002 = vpack.c.b16 %v2316, %v2310
    %v4003 = vpack.c.b16 %v2323, %v2317
    %v4004 = vpack.c.b16 %v2324, %v2318
    %v4005 = vpack.c.b16 %v2325, %v2319
    %v4006 = vpack.c.b16 %v2326, %v2320
    %v4007 = vpack.c.b16 %v2327, %v2321
    %v4008 = vpack.c.b16 %v2328, %v2322
    %v4009 = vpack.c.b16 %v2335, %v2329
    %v4010 = vpack.c.b16 %v2336, %v2330
    %v4011 = vpack.c.b16 %v2337, %v2331
    %v4012 = vpack.c.b16 %v2338, %v2332
    %v4013 = vpack.c.b16 %v2339, %v2333
    %v4014 = vpack.c.b16 %v2340, %v2334
    %v4015 = vpack.c.b16 %v2347, %v2341
    %v4016 = vpack.c.b16 %v2348, %v2342
    %v4017 = vpack.c.b16 %v2349, %v2343
    %v4018 = vpack.c.b16 %v2350, %v2344
    %v4019 = vpack.c.b16 %v2351, %v2345
    %v4020 = vpack.c.b16 %v2352, %v2346
    %v4021 = vpack.c.b16 %v2359, %v2353
    %v4022 = vpack.c.b16 %v2360, %v2354
    %v4023 = vpack.c.b16 %v2361, %v2355
    %v4024 = vpack.c.b16 %v2362, %v2356
    %v4025 = vpack.c.b16 %v2363, %v2357
    %v4026 = vpack.c.b16 %v2364, %v2358
    %v4027 = vpack.c.b16 %v2371, %v2365
    %v4028 = vpack.c.b16 %v2372, %v2366
    %v4029 = vpack.c.b16 %v2373, %v2367
    %v4030 = vpack.c.b16 %v2374, %v2368
    %v4031 = vpack.c.b16 %v2375, %v2369
    %v4032 = vpack.c.b16 %v2376, %v2370
    %v4033 = vpack.c.b16 %v2383, %v2377
    %v4034 = vpack.c.b16 %v2384, %v2378
    %v4035 = vpack.c.b16 %v2385, %v2379
    %v4036 = vpack.c.b16 %v2386, %v2380
    %v4037 = vpack.c.b16 %v2387, %v2381
    %v4038 = vpack.c.b16 %v2388, %v2382
    %v4039 = vpack.c.b16 %v2395, %v2389
    %v4040 = vpack.c.b16 %v2396, %v2390
    %v4041 = vpack.c.b16 %v2397, %v2391
    %v4042 = vpack.c.b16 %v2398, %v2392
    %v4043 = vpack.c.b16 %v2399, %v2393
    %v4044 = vpack.c.b16 %v2400, %v2394
    %v4045 = vpack.c.b16 %v2407, %v2401
    %v4046 = vpack.c.b16 %v2408, %v2402
    %v4047 = vpack.c.b16 %v2409, %v2403
    %v4048 = vpack.c.b16 %v2410, %v2404
    %v4049 = vpack.c.b16 %v2411, %v2405
    %v4050 = vpack.c.b16 %v2412, %v2406
    %v4051 = vpack.c.b16 %v2419, %v2413
    %v4052 = vpack.c.b16 %v2420, %v2414
    %v4053 = vpack.c.b16 %v2421, %v2415
    %v4054 = vpack.c.b16 %v2422, %v2416
    %v4055 = vpack.c.b16 %v2423, %v2417
    %v4056 = vpack.c.b16 %v2424, %v2418
    %v4057 = vpack.c.b16 %v2431, %v2425
    %v4058 = vpack.c.b16 %v2432, %v2426
    %v4059 = vpack.c.b16 %v2433, %v2427
    %v4060 = vpack.c.b16 %v2434, %v2428
    %v4061 = vpack.c.b16 %v2435, %v2429
    %v4062 = vpack.c.b16 %v2436, %v2430
    %v4063 = vpack.c.b16 %v2443, %v2437
    %v4064 = vpack.c.b16 %v2444, %v2438
    %v4065 = vpack.c.b16 %v2445, %v2439
    %v4066 = vpack.c.b16 %v2446, %v2440
    %v4067 = vpack.c.b16 %v2447, %v2441
    %v4068 = vpack.c.b16 %v2448, %v2442
    %v4069 = vpack.c.b16 %v2455, %v2449
    %v4070 = vpack.c.b16 %v2456, %v2450
    %v4071 = vpack.c.b16 %v2457, %v2451
    %v4072 = vpack.c.b16 %v2458, %v2452
    %v4073 = vpack.c.b16 %v2459, %v2453
    %v4074 = vpack.c.b16 %v2460, %v2454
    %v4075 = vpack.c.b16 %v2467, %v2461
    %v4076 = vpack.c.b16 %v2468, %v2462
    %v4077 = vpack.c.b16 %v2469, %v2463
    %v4078 = vpack.c.b16 %v2470, %v2464
    %v4079 = vpack.c.b16 %v2471, %v2465
    %v4080 = vpack.c.b16 %v2472, %v2466
    %v4081 = vpack.c.b16 %v2479, %v2473
    %v4082 = vpack.c.b16 %v2480, %v2474
    %v4083 = vpack.c.b16 %v2481, %v2475
    %v4084 = vpack.c.b16 %v2482, %v2476
    %v4085 = vpack.c.b16 %v2483, %v2477
    %v4086 = vpack.c.b16 %v2484, %v2478
    %v4087 = vpack.c.b16 %v2491, %v2485
    %v4088 = vpack.c.b16 %v2492, %v2486
    %v4089 = vpack.c.b16 %v2493, %v2487
    %v4090 = vpack.c.b16 %v2494, %v2488
    %v4091 = vpack.c.b16 %v2495, %v2489
    %v4092 = vpack.c.b16 %v2496, %v2490
    %v4093 = vpack.c.b16 %v2503, %v2497
    %v4094 = vpack.c.b16 %v2504, %v2498
    %v4095 = vpack.c.b16 %v2505, %v2499
    %v4096 = vpack.c.b16 %v2506, %v2500
    %v4097 = vpack.c.b16 %v2507, %v2501
    %v4098 = vpack.c.b16 %v2508, %v2502
    %v4099 = vpack.c.b16 %v2515, %v2509
    %v4100 = vpack.c.b16 %v2516, %v2510
    %v4101 = vpack.c.b16 %v2517, %v2511
    %v4102 = vpack.c.b16 %v2518, %v2512
    %v4103 = vpack.c.b16 %v2519, %v2513
    %v4104 = vpack.c.b16 %v2520, %v2514
    %v4105 = vpack.c.b16 %v2527, %v2521
    %v4106 = vpack.c.b16 %v2528, %v2522
    %v4107 = vpack.c.b16 %v2529, %v2523
    %v4108 = vpack.c.b16 %v2530, %v2524
    %v4109 = vpack.c.b16 %v2531, %v2525
    %v4110 = vpack.c.b16 %v2532, %v2526
    %v4111 = vpack.c.b16 %v2539, %v2533
    %v4112 = vpack.c.b16 %v2540, %v2534
    %v4113 = vpack.c.b16 %v2541, %v2535
    %v4114 = vpack.c.b16 %v2542, %v2536
    %v4115 = vpack.c.b16 %v2543, %v2537
    %v4116 = vpack.c.b16 %v2544, %v2538
    %v4117 = vpack.c.b16 %v2551, %v2545
    %v4118 = vpack.c.b16 %v2552, %v2546
    %v4119 = vpack.c.b16 %v2553, %v2547
    %v4120 = vpack.c.b16 %v2554, %v2548
    %v4121 = vpack.c.b16 %v2555, %v2549
    %v4122 = vpack.c.b16 %v2556, %v2550
    %v4123 = vpack.c.b16 %v2563, %v2557
    %v4124 = vpack.c.b16 %v2564, %v2558
    %v4125 = vpack.c.b16 %v2565, %v2559
    %v4126 = vpack.c.b16 %v2566, %v2560
    %v4127 = vpack.c.b16 %v2567, %v2561
    %v4128 = vpack.c.b16 %v2568, %v2562
    %v4129 = vpack.c.b16 %v2575, %v2569
    %v4130 = vpack.c.b16 %v2576, %v2570
    %v4131 = vpack.c.b16 %v2577, %v2571
    %v4132 = vpack.c.b16 %v2578, %v2572
    %v4133 = vpack.c.b16 %v2579, %v2573
    %v4134 = vpack.c.b16 %v2580, %v2574
    %v4135 = vpack.c.b16 %v2587, %v2581
    %v4136 = vpack.c.b16 %v2588, %v2582
    %v4137 = vpack.c.b16 %v2589, %v2583
    %v4138 = vpack.c.b16 %v2590, %v2584
    %v4139 = vpack.c.b16 %v2591, %v2585
    %v4140 = vpack.c.b16 %v2592, %v2586
    %v4141 = vpack.c.b16 %v2599, %v2593
    %v4142 = vpack.c.b16 %v2600, %v2594
    %v4143 = vpack.c.b16 %v2601, %v2595
    %v4144 = vpack.c.b16 %v2602, %v2596
    %v4145 = vpack.c.b16 %v2603, %v2597
    %v4146 = vpack.c.b16 %v2604, %v2598
    %v4147 = vpack.c.b16 %v2611, %v2605
    %v4148 = vpack.c.b16 %v2612, %v2606
    %v4149 = vpack.c.b16 %v2613, %v2607
    %v4150 = vpack.c.b16 %v2614, %v2608
    %v4151 = vpack.c.b16 %v2615, %v2609
    %v4152 = vpack.c.b16 %v2616, %v2610
    %v4153 = vpack.c.b16 %v2623, %v2617
    %v4154 = vpack.c.b16 %v2624, %v2618
    %v4155 = vpack.c.b16 %v2625, %v2619
    %v4156 = vpack.c.b16 %v2626, %v2620
    %v4157 = vpack.c.b16 %v2627, %v2621
    %v4158 = vpack.c.b16 %v2628, %v2622
    %v4159 = vpack.c.b16 %v2635, %v2629
    %v4160 = vpack.c.b16 %v2636, %v2630
    %v4161 = vpack.c.b16 %v2637, %v2631
    %v4162 = vpack.c.b16 %v2638, %v2632
    %v4163 = vpack.c.b16 %v2639, %v2633
    %v4164 = vpack.c.b16 %v2640, %v2634
    %v4165 = vpack.c.b16 %v2647, %v2641
    %v4166 = vpack.c.b16 %v2648, %v2642
    %v4167 = vpack.c.b16 %v2649, %v2643
    %v4168 = vpack.c.b16 %v2650, %v2644
    %v4169 = vpack.c.b16 %v2651, %v2645
    %v4170 = vpack.c.b16 %v2652, %v2646
    %v4171 = vpack.c.b16 %v2659, %v2653
    %v4172 = vpack.c.b16 %v2660, %v2654
    %v4173 = vpack.c.b16 %v2661, %v2655
    %v4174 = vpack.c.b16 %v2662, %v2656
    %v4175 = vpack.c.b16 %v2663, %v2657
    %v4176 = vpack.c.b16 %v2664, %v2658
    %v4177 = vpack.c.b16 %v2671, %v2665
    %v4178 = vpack.c.b16 %v2672, %v2666
    %v4179 = vpack.c.b16 %v2673, %v2667
    %v4180 = vpack.c.b16 %v2674, %v2668
    %v4181 = vpack.c.b16 %v2675, %v2669
    %v4182 = vpack.c.b16 %v2676, %v2670
    %v4183 = vpack.c.b16 %v2683, %v2677
    %v4184 = vpack.c.b16 %v2684, %v2678
    %v4185 = vpack.c.b16 %v2685, %v2679
    %v4186 = vpack.c.b16 %v2686, %v2680
    %v4187 = vpack.c.b16 %v2687, %v2681
    %v4188 = vpack.c.b16 %v2688, %v2682
    %v4189 = vpack.c.b16 %v2695, %v2689
    %v4190 = vpack.c.b16 %v2696, %v2690
    %v4191 = vpack.c.b16 %v2697, %v2691
    %v4192 = vpack.c.b16 %v2698, %v2692
    %v4193 = vpack.c.b16 %v2699, %v2693
    %v4194 = vpack.c.b16 %v2700, %v2694
    %v4195 = vpack.c.b16 %v2707, %v2701
    %v4196 = vpack.c.b16 %v2708, %v2702
    %v4197 = vpack.c.b16 %v2709, %v2703
    %v4198 = vpack.c.b16 %v2710, %v2704
    %v4199 = vpack.c.b16 %v2711, %v2705
    %v4200 = vpack.c.b16 %v2712, %v2706
    %v4201 = vpack.c.b16 %v2719, %v2713
    %v4202 = vpack.c.b16 %v2720, %v2714
    %v4203 = vpack.c.b16 %v2721, %v2715
    %v4204 = vpack.c.b16 %v2722, %v2716
    %v4205 = vpack.c.b16 %v2723, %v2717
    %v4206 = vpack.c.b16 %v2724, %v2718
    %v4207 = vpack.c.b16 %v2731, %v2725
    %v4208 = vpack.c.b16 %v2732, %v2726
    %v4209 = vpack.c.b16 %v2733, %v2727
    %v4210 = vpack.c.b16 %v2734, %v2728
    %v4211 = vpack.c.b16 %v2735, %v2729
    %v4212 = vpack.c.b16 %v2736, %v2730
    %v4213 = vpack.c.b16 %v2743, %v2737
    %v4214 = vpack.c.b16 %v2744, %v2738
    %v4215 = vpack.c.b16 %v2745, %v2739
    %v4216 = vpack.c.b16 %v2746, %v2740
    %v4217 = vpack.c.b16 %v2747, %v2741
    %v4218 = vpack.c.b16 %v2748, %v2742
    %v4219 = vpack.c.b16 %v2755, %v2749
    %v4220 = vpack.c.b16 %v2756, %v2750
    %v4221 = vpack.c.b16 %v2757, %v2751
    %v4222 = vpack.c.b16 %v2758, %v2752
    %v4223 = vpack.c.b16 %v2759, %v2753
    %v4224 = vpack.c.b16 %v2760, %v2754
    %v4225 = vpack.c.b16 %v2767, %v2761
    %v4226 = vpack.c.b16 %v2768, %v2762
    %v4227 = vpack.c.b16 %v2769, %v2763
    %v4228 = vpack.c.b16 %v2770, %v2764
    %v4229 = vpack.c.b16 %v2771, %v2765
    %v4230 = vpack.c.b16 %v2772, %v2766
    %v4231 = vpack.c.b16 %v2779, %v2773
    %v4232 = vpack.c.b16 %v2780, %v2774
    %v4233 = vpack.c.b16 %v2781, %v2775
    %v4234 = vpack.c.b16 %v2782, %v2776
    %v4235 = vpack.c.b16 %v2783, %v2777
    %v4236 = vpack.c.b16 %v2784, %v2778
    %v4237 = vpack.c.b16 %v2791, %v2785
    %v4238 = vpack.c.b16 %v2792, %v2786
    %v4239 = vpack.c.b16 %v2793, %v2787
    %v4240 = vpack.c.b16 %v2794, %v2788
    %v4241 = vpack.c.b16 %v2795, %v2789
    %v4242 = vpack.c.b16 %v2796, %v2790
    %v4243 = vpack.c.b16 %v2803, %v2797
    %v4244 = vpack.c.b16 %v2804, %v2798
    %v4245 = vpack.c.b16 %v2805, %v2799
    %v4246 = vpack.c.b16 %v2806, %v2800
    %v4247 = vpack.c.b16 %v2807, %v2801
    %v4248 = vpack.c.b16 %v2808, %v2802
    %v4249 = vpack.c.b16 %v2815, %v2809
    %v4250 = vpack.c.b16 %v2816, %v2810
    %v4251 = vpack.c.b16 %v2817, %v2811
    %v4252 = vpack.c.b16 %v2818, %v2812
    %v4253 = vpack.c.b16 %v2819, %v2813
    %v4254 = vpack.c.b16 %v2820, %v2814
    %v4255 = vpack.c.b16 %v2827, %v2821
    %v4256 = vpack.c.b16 %v2828, %v2822
    %v4257 = vpack.c.b16 %v2829, %v2823
    %v4258 = vpack.c.b16 %v2830, %v2824
    %v4259 = vpack.c.b16 %v2831, %v2825
    %v4260 = vpack.c.b16 %v2832, %v2826
    %v4261 = vpack.c.b16 %v2839, %v2833
    %v4262 = vpack.c.b16 %v2840, %v2834
    %v4263 = vpack.c.b16 %v2841, %v2835
    %v4264 = vpack.c.b16 %v2842, %v2836
    %v4265 = vpack.c.b16 %v2843, %v2837
    %v4266 = vpack.c.b16 %v2844, %v2838
    %v4267 = vpack.c.b16 %v2851, %v2845
    %v4268 = vpack.c.b16 %v2852, %v2846
    %v4269 = vpack.c.b16 %v2853, %v2847
    %v4270 = vpack.c.b16 %v2854, %v2848
    %v4271 = vpack.c.b16 %v2855, %v2849
    %v4272 = vpack.c.b16 %v2856, %v2850
    %v4273 = vpack.c.b16 %v2863, %v2857
    %v4274 = vpack.c.b16 %v2864, %v2858
    %v4275 = vpack.c.b16 %v2865, %v2859
    %v4276 = vpack.c.b16 %v2866, %v2860
    %v4277 = vpack.c.b16 %v2867, %v2861
    %v4278 = vpack.c.b16 %v2868, %v2862
    %v4279 = vpack.c.b16 %v2875, %v2869
    %v4280 = vpack.c.b16 %v2876, %v2870
    %v4281 = vpack.c.b16 %v2877, %v2871
    %v4282 = vpack.c.b16 %v2878, %v2872
    %v4283 = vpack.c.b16 %v2879, %v2873
    %v4284 = vpack.c.b16 %v2880, %v2874
    %v4285 = vpack.c.b16 %v2887, %v2881
    %v4286 = vpack.c.b16 %v2888, %v2882
    %v4287 = vpack.c.b16 %v2889, %v2883
    %v4288 = vpack.c.b16 %v2890, %v2884
    %v4289 = vpack.c.b16 %v2891, %v2885
    %v4290 = vpack.c.b16 %v2892, %v2886
    %v4291 = vpack.c.b16 %v2899, %v2893
    %v4292 = vpack.c.b16 %v2900, %v2894
    %v4293 = vpack.c.b16 %v2901, %v2895
    %v4294 = vpack.c.b16 %v2902, %v2896
    %v4295 = vpack.c.b16 %v2903, %v2897
    %v4296 = vpack.c.b16 %v2904, %v2898
    %v4297 = vpack.c.b16 %v2911, %v2905
    %v4298 = vpack.c.b16 %v2912, %v2906
    %v4299 = vpack.c.b16 %v2913, %v2907
    %v4300 = vpack.c.b16 %v2914, %v2908
    %v4301 = vpack.c.b16 %v2915, %v2909
    %v4302 = vpack.c.b16 %v2916, %v2910
    %v4303 = vpack.c.b16 %v2923, %v2917
    %v4304 = vpack.c.b16 %v2924, %v2918
    %v4305 = vpack.c.b16 %v2925, %v2919
    %v4306 = vpack.c.b16 %v2926, %v2920
    %v4307 = vpack.c.b16 %v2927, %v2921
    %v4308 = vpack.c.b16 %v2928, %v2922
    %v4309 = vpack.c.b16 %v2935, %v2929
    %v4310 = vpack.c.b16 %v2936, %v2930
    %v4311 = vpack.c.b16 %v2937, %v2931
    %v4312 = vpack.c.b16 %v2938, %v2932
    %v4313 = vpack.c.b16 %v2939, %v2933
    %v4314 = vpack.c.b16 %v2940, %v2934
    %v4315 = vpack.c.b16 %v2947, %v2941
    %v4316 = vpack.c.b16 %v2948, %v2942
    %v4317 = vpack.c.b16 %v2949, %v2943
    %v4318 = vpack.c.b16 %v2950, %v2944
    %v4319 = vpack.c.b16 %v2951, %v2945
    %v4320 = vpack.c.b16 %v2952, %v2946
    %v4321 = vpack.c.b16 %v2959, %v2953
    %v4322 = vpack.c.b16 %v2960, %v2954
    %v4323 = vpack.c.b16 %v2961, %v2955
    %v4324 = vpack.c.b16 %v2962, %v2956
    %v4325 = vpack.c.b16 %v2963, %v2957
    %v4326 = vpack.c.b16 %v2964, %v2958
    %v4327 = vpack.c.b16 %v2971, %v2965
    %v4328 = vpack.c.b16 %v2972, %v2966
    %v4329 = vpack.c.b16 %v2973, %v2967
    %v4330 = vpack.c.b16 %v2974, %v2968
    %v4331 = vpack.c.b16 %v2975, %v2969
    %v4332 = vpack.c.b16 %v2976, %v2970
    %v4333 = vpack.c.b16 %v2983, %v2977
    %v4334 = vpack.c.b16 %v2984, %v2978
    %v4335 = vpack.c.b16 %v2985, %v2979
    %v4336 = vpack.c.b16 %v2986, %v2980
    %v4337 = vpack.c.b16 %v2987, %v2981
    %v4338 = vpack.c.b16 %v2988, %v2982
    %v4339 = vpack.c.b16 %v2995, %v2989
    %v4340 = vpack.c.b16 %v2996, %v2990
    %v4341 = vpack.c.b16 %v2997, %v2991
    %v4342 = vpack.c.b16 %v2998, %v2992
    %v4343 = vpack.c.b16 %v2999, %v2993
    %v4344 = vpack.c.b16 %v3000, %v2994
    %v4345 = vpack.c.b16 %v3007, %v3001
    %v4346 = vpack.c.b16 %v3008, %v3002
    %v4347 = vpack.c.b16 %v3009, %v3003
    %v4348 = vpack.c.b16 %v3010, %v3004
    %v4349 = vpack.c.b16 %v3011, %v3005
    %v4350 = vpack.c.b16 %v3012, %v3006
    %v4351 = vpack.c.b16 %v3019, %v3013
    %v4352 = vpack.c.b16 %v3020, %v3014
    %v4353 = vpack.c.b16 %v3021, %v3015
    %v4354 = vpack.c.b16 %v3022, %v3016
    %v4355 = vpack.c.b16 %v3023, %v3017
    %v4356 = vpack.c.b16 %v3024, %v3018
    %v4357 = vpack.c.b16 %v3031, %v3025
    %v4358 = vpack.c.b16 %v3032, %v3026
    %v4359 = vpack.c.b16 %v3033, %v3027
    %v4360 = vpack.c.b16 %v3034, %v3028
    %v4361 = vpack.c.b16 %v3035, %v3029
    %v4362 = vpack.c.b16 %v3036, %v3030
    %v4363 = vpack.c.b16 %v3043, %v3037
    %v4364 = vpack.c.b16 %v3044, %v3038
    %v4365 = vpack.c.b16 %v3045, %v3039
    %v4366 = vpack.c.b16 %v3046, %v3040
    %v4367 = vpack.c.b16 %v3047, %v3041
    %v4368 = vpack.c.b16 %v3048, %v3042
    %v4369 = vpack.c.b16 %v3055, %v3049
    %v4370 = vpack.c.b16 %v3056, %v3050
    %v4371 = vpack.c.b16 %v3057, %v3051
    %v4372 = vpack.c.b16 %v3058, %v3052
    %v4373 = vpack.c.b16 %v3059, %v3053
    %v4374 = vpack.c.b16 %v3060, %v3054
    %v4375 = vpack.c.b16 %v3067, %v3061
    %v4376 = vpack.c.b16 %v3068, %v3062
    %v4377 = vpack.c.b16 %v3069, %v3063
    %v4378 = vpack.c.b16 %v3070, %v3064
    %v4379 = vpack.c.b16 %v3071, %v3065
    %v4380 = vpack.c.b16 %v3072, %v3066
    %v4381 = vpack.c.b16 %v3079, %v3073
    %v4382 = vpack.c.b16 %v3080, %v3074
    %v4383 = vpack.c.b16 %v3081, %v3075
    %v4384 = vpack.c.b16 %v3082, %v3076
    %v4385 = vpack.c.b16 %v3083, %v3077
    %v4386 = vpack.c.b16 %v3084, %v3078
    %v4387 = vpack.c.b16 %v3091, %v3085
    %v4388 = vpack.c.b16 %v3092, %v3086
    %v4389 = vpack.c.b16 %v3093, %v3087
    %v4390 = vpack.c.b16 %v3094, %v3088
    %v4391 = vpack.c.b16 %v3095, %v3089
    %v4392 = vpack.c.b16 %v3096, %v3090
    %v4393 = vpack.c.b16 %v3103, %v3097
    %v4394 = vpack.c.b16 %v3104, %v3098
    %v4395 = vpack.c.b16 %v3105, %v3099
    %v4396 = vpack.c.b16 %v3106, %v3100
    %v4397 = vpack.c.b16 %v3107, %v3101
    %v4398 = vpack.c.b16 %v3108, %v3102
    %v4399 = vpack.c.b16 %v3115, %v3109
    %v4400 = vpack.c.b16 %v3116, %v3110
    %v4401 = vpack.c.b16 %v3117, %v3111
    %v4402 = vpack.c.b16 %v3118, %v3112
    %v4403 = vpack.c.b16 %v3119, %v3113
    %v4404 = vpack.c.b16 %v3120, %v3114
    %v4405 = vpack.c.b16 %v3127, %v3121
    %v4406 = vpack.c.b16 %v3128, %v3122
    %v4407 = vpack.c.b16 %v3129, %v3123
    %v4408 = vpack.c.b16 %v3130, %v3124
    %v4409 = vpack.c.b16 %v3131, %v3125
    %v4410 = vpack.c.b16 %v3132, %v3126
    %v4411 = vpack.c.b16 %v3139, %v3133
    %v4412 = vpack.c.b16 %v3140, %v3134
    %v4413 = vpack.c.b16 %v3141, %v3135
    %v4414 = vpack.c.b16 %v3142, %v3136
    %v4415 = vpack.c.b16 %v3143, %v3137
    %v4416 = vpack.c.b16 %v3144, %v3138
    %v4417 = vpack.c.b16 %v3151, %v3145
    %v4418 = vpack.c.b16 %v3152, %v3146
    %v4419 = vpack.c.b16 %v3153, %v3147
    %v4420 = vpack.c.b16 %v3154, %v3148
    %v4421 = vpack.c.b16 %v3155, %v3149
    %v4422 = vpack.c.b16 %v3156, %v3150
    %v4423 = vpack.c.b16 %v3163, %v3157
    %v4424 = vpack.c.b16 %v3164, %v3158
    %v4425 = vpack.c.b16 %v3165, %v3159
    %v4426 = vpack.c.b16 %v3166, %v3160
    %v4427 = vpack.c.b16 %v3167, %v3161
    %v4428 = vpack.c.b16 %v3168, %v3162
    %v4429 = vpack.c.b16 %v3175, %v3169
    %v4430 = vpack.c.b16 %v3176, %v3170
    %v4431 = vpack.c.b16 %v3177, %v3171
    %v4432 = vpack.c.b16 %v3178, %v3172
    %v4433 = vpack.c.b16 %v3179, %v3173
    %v4434 = vpack.c.b16 %v3180, %v3174
    %v4435 = vpack.c.b16 %v3187, %v3181
    %v4436 = vpack.c.b16 %v3188, %v3182
    %v4437 = vpack.c.b16 %v3189, %v3183
    %v4438 = vpack.c.b16 %v3190, %v3184
    %v4439 = vpack.c.b16 %v3191, %v3185
    %v4440 = vpack.c.b16 %v3192, %v3186
    %v4441 = vpack.c.b16 %v3199, %v3193
    %v4442 = vpack.c.b16 %v3200, %v3194
    %v4443 = vpack.c.b16 %v3201, %v3195
    %v4444 = vpack.c.b16 %v3202, %v3196
    %v4445 = vpack.c.b16 %v3203, %v3197
    %v4446 = vpack.c.b16 %v3204, %v3198
    %v4447 = vpack.c.b16 %v3211, %v3205
    %v4448 = vpack.c.b16 %v3212, %v3206
    %v4449 = vpack.c.b16 %v3213, %v3207
    %v4450 = vpack.c.b16 %v3214, %v3208
    %v4451 = vpack.c.b16 %v3215, %v3209
    %v4452 = vpack.c.b16 %v3216, %v3210
    %v4453 = vpack.c.b16 %v3223, %v3217
    %v4454 = vpack.c.b16 %v3224, %v3218
    %v4455 = vpack.c.b16 %v3225, %v3219
    %v4456 = vpack.c.b16 %v3226, %v3220
    %v4457 = vpack.c.b16 %v3227, %v3221
    %v4458 = vpack.c.b16 %v3228, %v3222
    %v4459 = vpack.c.b16 %v3235, %v3229
    %v4460 = vpack.c.b16 %v3236, %v3230
    %v4461 = vpack.c.b16 %v3237, %v3231
    %v4462 = vpack.c.b16 %v3238, %v3232
    %v4463 = vpack.c.b16 %v3239, %v3233
    %v4464 = vpack.c.b16 %v3240, %v3234
    %v4465 = vpack.c.b16 %v3247, %v3241
    %v4466 = vpack.c.b16 %v3248, %v3242
    %v4467 = vpack.c.b16 %v3249, %v3243
    %v4468 = vpack.c.b16 %v3250, %v3244
    %v4469 = vpack.c.b16 %v3251, %v3245
    %v4470 = vpack.c.b16 %v3252, %v3246
    %v4471 = vpack.c.b16 %v3259, %v3253
    %v4472 = vpack.c.b16 %v3260, %v3254
    %v4473 = vpack.c.b16 %v3261, %v3255
    %v4474 = vpack.c.b16 %v3262, %v3256
    %v4475 = vpack.c.b16 %v3263, %v3257
    %v4476 = vpack.c.b16 %v3264, %v3258
    %v4477 = vpack.c.b16 %v3271, %v3265
    %v4478 = vpack.c.b16 %v3272, %v3266
    %v4479 = vpack.c.b16 %v3273, %v3267
    %v4480 = vpack.c.b16 %v3274, %v3268
    %v4481 = vpack.c.b16 %v3275, %v3269
    %v4482 = vpack.c.b16 %v3276, %v3270
    %v4483 = vpack.c.b16 %v3283, %v3277
    %v4484 = vpack.c.b16 %v3284, %v3278
    %v4485 = vpack.c.b16 %v3285, %v3279
    %v4486 = vpack.c.b16 %v3286, %v3280
    %v4487 = vpack.c.b16 %v3287, %v3281
    %v4488 = vpack.c.b16 %v3288, %v3282
    %v4489 = vpack.c.b16 %v3295, %v3289
    %v4490 = vpack.c.b16 %v3296, %v3290
    %v4491 = vpack.c.b16 %v3297, %v3291
    %v4492 = vpack.c.b16 %v3298, %v3292
    %v4493 = vpack.c.b16 %v3299, %v3293
    %v4494 = vpack.c.b16 %v3300, %v3294
    %v4495 = vpack.c.b16 %v3307, %v3301
    %v4496 = vpack.c.b16 %v3308, %v3302
    %v4497 = vpack.c.b16 %v3309, %v3303
    %v4498 = vpack.c.b16 %v3310, %v3304
    %v4499 = vpack.c.b16 %v3311, %v3305
    %v4500 = vpack.c.b16 %v3312, %v3306
    %v4501 = vpack.c.b16 %v3319, %v3313
    %v4502 = vpack.c.b16 %v3320, %v3314
    %v4503 = vpack.c.b16 %v3321, %v3315
    %v4504 = vpack.c.b16 %v3322, %v3316
    %v4505 = vpack.c.b16 %v3323, %v3317
    %v4506 = vpack.c.b16 %v3324, %v3318
    %v4507 = vpack.c.b16 %v3331, %v3325
    %v4508 = vpack.c.b16 %v3332, %v3326
    %v4509 = vpack.c.b16 %v3333, %v3327
    %v4510 = vpack.c.b16 %v3334, %v3328
    %v4511 = vpack.c.b16 %v3335, %v3329
    %v4512 = vpack.c.b16 %v3336, %v3330
    %v4513 = vpack.c.b16 %v3343, %v3337
    %v4514 = vpack.c.b16 %v3344, %v3338
    %v4515 = vpack.c.b16 %v3345, %v3339
    %v4516 = vpack.c.b16 %v3346, %v3340
    %v4517 = vpack.c.b16 %v3347, %v3341
    %v4518 = vpack.c.b16 %v3348, %v3342
    %v4519 = vpack.c.b16 %v3355, %v3349
    %v4520 = vpack.c.b16 %v3356, %v3350
    %v4521 = vpack.c.b16 %v3357, %v3351
    %v4522 = vpack.c.b16 %v3358, %v3352
    %v4523 = vpack.c.b16 %v3359, %v3353
    %v4524 = vpack.c.b16 %v3360, %v3354
    %v4525 = vpack.c.b16 %v3367, %v3361
    %v4526 = vpack.c.b16 %v3368, %v3362
    %v4527 = vpack.c.b16 %v3369, %v3363
    %v4528 = vpack.c.b16 %v3370, %v3364
    %v4529 = vpack.c.b16 %v3371, %v3365
    %v4530 = vpack.c.b16 %v3372, %v3366
    %v4531 = vpack.c.b16 %v3379, %v3373
    %v4532 = vpack.c.b16 %v3380, %v3374
    %v4533 = vpack.c.b16 %v3381, %v3375
    %v4534 = vpack.c.b16 %v3382, %v3376
    %v4535 = vpack.c.b16 %v3383, %v3377
    %v4536 = vpack.c.b16 %v3384, %v3378
    %v4537 = vpack.c.b16 %v3391, %v3385
    %v4538 = vpack.c.b16 %v3392, %v3386
    %v4539 = vpack.c.b16 %v3393, %v3387
    %v4540 = vpack.c.b16 %v3394, %v3388
    %v4541 = vpack.c.b16 %v3395, %v3389
    %v4542 = vpack.c.b16 %v3396, %v3390
    %v4543 = vpack.c.b16 %v3403, %v3397
    %v4544 = vpack.c.b16 %v3404, %v3398
    %v4545 = vpack.c.b16 %v3405, %v3399
    %v4546 = vpack.c.b16 %v3406, %v3400
    %v4547 = vpack.c.b16 %v3407, %v3401
    %v4548 = vpack.c.b16 %v3408, %v3402
    %v4549 = vpack.c.b16 %v3415, %v3409
    %v4550 = vpack.c.b16 %v3416, %v3410
    %v4551 = vpack.c.b16 %v3417, %v3411
    %v4552 = vpack.c.b16 %v3418, %v3412
    %v4553 = vpack.c.b16 %v3419, %v3413
    %v4554 = vpack.c.b16 %v3420, %v3414
    %v4555 = vpack.c.b16 %v3427, %v3421
    %v4556 = vpack.c.b16 %v3428, %v3422
    %v4557 = vpack.c.b16 %v3429, %v3423
    %v4558 = vpack.c.b16 %v3430, %v3424
    %v4559 = vpack.c.b16 %v3431, %v3425
    %v4560 = vpack.c.b16 %v3432, %v3426
    %v4561 = vpack.c.b16 %v3439, %v3433
    %v4562 = vpack.c.b16 %v3440, %v3434
    %v4563 = vpack.c.b16 %v3441, %v3435
    %v4564 = vpack.c.b16 %v3442, %v3436
    %v4565 = vpack.c.b16 %v3443, %v3437
    %v4566 = vpack.c.b16 %v3444, %v3438
    %v4567 = vpack.c.b16 %v3451, %v3445
    %v4568 = vpack.c.b16 %v3452, %v3446
    %v4569 = vpack.c.b16 %v3453, %v3447
    %v4570 = vpack.c.b16 %v3454, %v3448
    %v4571 = vpack.c.b16 %v3455, %v3449
    %v4572 = vpack.c.b16 %v3456, %v3450
    %v4573 = vpack.c.b16 %v3463, %v3457
    %v4574 = vpack.c.b16 %v3464, %v3458
    %v4575 = vpack.c.b16 %v3465, %v3459
    %v4576 = vpack.c.b16 %v3466, %v3460
    %v4577 = vpack.c.b16 %v3467, %v3461
    %v4578 = vpack.c.b16 %v3468, %v3462
    %v4579 = vpack.c.b16 %v3475, %v3469
    %v4580 = vpack.c.b16 %v3476, %v3470
    %v4581 = vpack.c.b16 %v3477, %v3471
    %v4582 = vpack.c.b16 %v3478, %v3472
    %v4583 = vpack.c.b16 %v3479, %v3473
    %v4584 = vpack.c.b16 %v3480, %v3474
    %v4585 = vpack.c.b16 %v3487, %v3481
    %v4586 = vpack.c.b16 %v3488, %v3482
    %v4587 = vpack.c.b16 %v3489, %v3483
    %v4588 = vpack.c.b16 %v3490, %v3484
    %v4589 = vpack.c.b16 %v3491, %v3485
    %v4590 = vpack.c.b16 %v3492, %v3486
    %v4591 = vpack.c.b16 %v3499, %v3493
    %v4592 = vpack.c.b16 %v3500, %v3494
    %v4593 = vpack.c.b16 %v3501, %v3495
    %v4594 = vpack.c.b16 %v3502, %v3496
    %v4595 = vpack.c.b16 %v3503, %v3497
    %v4596 = vpack.c.b16 %v3504, %v3498
    %v4597 = vpack.c.b16 %v3511, %v3505
    %v4598 = vpack.c.b16 %v3512, %v3506
    %v4599 = vpack.c.b16 %v3513, %v3507
    %v4600 = vpack.c.b16 %v3514, %v3508
    %v4601 = vpack.c.b16 %v3515, %v3509
    %v4602 = vpack.c.b16 %v3516, %v3510
    %v4603 = vpack.c.b16 %v3523, %v3517
    %v4604 = vpack.c.b16 %v3524, %v3518
    %v4605 = vpack.c.b16 %v3525, %v3519
    %v4606 = vpack.c.b16 %v3526, %v3520
    %v4607 = vpack.c.b16 %v3527, %v3521
    %v4608 = vpack.c.b16 %v3528, %v3522
    %v4609 = vpack.c.b16 %v3535, %v3529
    %v4610 = vpack.c.b16 %v3536, %v3530
    %v4611 = vpack.c.b16 %v3537, %v3531
    %v4612 = vpack.c.b16 %v3538, %v3532
    %v4613 = vpack.c.b16 %v3539, %v3533
    %v4614 = vpack.c.b16 %v3540, %v3534
    %v4615 = vpack.c.b16 %v3547, %v3541
    %v4616 = vpack.c.b16 %v3548, %v3542
    %v4617 = vpack.c.b16 %v3549, %v3543
    %v4618 = vpack.c.b16 %v3550, %v3544
    %v4619 = vpack.c.b16 %v3551, %v3545
    %v4620 = vpack.c.b16 %v3552, %v3546
    %v4621 = vpack.c.b16 %v3559, %v3553
    %v4622 = vpack.c.b16 %v3560, %v3554
    %v4623 = vpack.c.b16 %v3561, %v3555
    %v4624 = vpack.c.b16 %v3562, %v3556
    %v4625 = vpack.c.b16 %v3563, %v3557
    %v4626 = vpack.c.b16 %v3564, %v3558
    %v4627 = vpack.c.b16 %v3571, %v3565
    %v4628 = vpack.c.b16 %v3572, %v3566
    %v4629 = vpack.c.b16 %v3573, %v3567
    %v4630 = vpack.c.b16 %v3574, %v3568
    %v4631 = vpack.c.b16 %v3575, %v3569
    %v4632 = vpack.c.b16 %v3576, %v3570
    %v4633 = vpack.c.b16 %v3583, %v3577
    %v4634 = vpack.c.b16 %v3584, %v3578
    %v4635 = vpack.c.b16 %v3585, %v3579
    %v4636 = vpack.c.b16 %v3586, %v3580
    %v4637 = vpack.c.b16 %v3587, %v3581
    %v4638 = vpack.c.b16 %v3588, %v3582
    %v4639 = vpack.c.b16 %v3595, %v3589
    %v4640 = vpack.c.b16 %v3596, %v3590
    %v4641 = vpack.c.b16 %v3597, %v3591
    %v4642 = vpack.c.b16 %v3598, %v3592
    %v4643 = vpack.c.b16 %v3599, %v3593
    %v4644 = vpack.c.b16 %v3600, %v3594
    %v4645 = vpack.c.b16 %v3607, %v3601
    %v4646 = vpack.c.b16 %v3608, %v3602
    %v4647 = vpack.c.b16 %v3609, %v3603
    %v4648 = vpack.c.b16 %v3610, %v3604
    %v4649 = vpack.c.b16 %v3611, %v3605
    %v4650 = vpack.c.b16 %v3612, %v3606
    %v4651 = vpack.c.b16 %v3619, %v3613
    %v4652 = vpack.c.b16 %v3620, %v3614
    %v4653 = vpack.c.b16 %v3621, %v3615
    %v4654 = vpack.c.b16 %v3622, %v3616
    %v4655 = vpack.c.b16 %v3623, %v3617
    %v4656 = vpack.c.b16 %v3624, %v3618
    %v4657 = vpack.c.b16 %v3631, %v3625
    %v4658 = vpack.c.b16 %v3632, %v3626
    %v4659 = vpack.c.b16 %v3633, %v3627
    %v4660 = vpack.c.b16 %v3634, %v3628
    %v4661 = vpack.c.b16 %v3635, %v3629
    %v4662 = vpack.c.b16 %v3636, %v3630
    %v4663 = vpack.c.b16 %v3643, %v3637
    %v4664 = vpack.c.b16 %v3644, %v3638
    %v4665 = vpack.c.b16 %v3645, %v3639
    %v4666 = vpack.c.b16 %v3646, %v3640
    %v4667 = vpack.c.b16 %v3647, %v3641
    %v4668 = vpack.c.b16 %v3648, %v3642
    %v4669 = vpack.c.b16 %v3655, %v3649
    %v4670 = vpack.c.b16 %v3656, %v3650
    %v4671 = vpack.c.b16 %v3657, %v3651
    %v4672 = vpack.c.b16 %v3658, %v3652
    %v4673 = vpack.c.b16 %v3659, %v3653
    %v4674 = vpack.c.b16 %v3660, %v3654
    %v4675 = vpack.c.b16 %v3667, %v3661
    %v4676 = vpack.c.b16 %v3668, %v3662
    %v4677 = vpack.c.b16 %v3669, %v3663
    %v4678 = vpack.c.b16 %v3670, %v3664
    %v4679 = vpack.c.b16 %v3671, %v3665
    %v4680 = vpack.c.b16 %v3672, %v3666
    %v4681 = vpack.c.b16 %v3679, %v3673
    %v4682 = vpack.c.b16 %v3680, %v3674
    %v4683 = vpack.c.b16 %v3681, %v3675
    %v4684 = vpack.c.b16 %v3682, %v3676
    %v4685 = vpack.c.b16 %v3683, %v3677
    %v4686 = vpack.c.b16 %v3684, %v3678
    %v4687 = vpack.c.b16 %v3691, %v3685
    %v4688 = vpack.c.b16 %v3692, %v3686
    %v4689 = vpack.c.b16 %v3693, %v3687
    %v4690 = vpack.c.b16 %v3694, %v3688
    %v4691 = vpack.c.b16 %v3695, %v3689
    %v4692 = vpack.c.b16 %v3696, %v3690
    %v4693 = vpack.c.b16 %v3703, %v3697
    %v4694 = vpack.c.b16 %v3704, %v3698
    %v4695 = vpack.c.b16 %v3705, %v3699
    %v4696 = vpack.c.b16 %v3706, %v3700
    %v4697 = vpack.c.b16 %v3707, %v3701
    %v4698 = vpack.c.b16 %v3708, %v3702
    %v4699 = vpack.c.b16 %v3715, %v3709
    %v4700 = vpack.c.b16 %v3716, %v3710
    %v4701 = vpack.c.b16 %v3717, %v3711
    %v4702 = vpack.c.b16 %v3718, %v3712
    %v4703 = vpack.c.b16 %v3719, %v3713
    %v4704 = vpack.c.b16 %v3720, %v3714
    %v4705 = vpack.c.b16 %v3727, %v3721
    %v4706 = vpack.c.b16 %v3728, %v3722
    %v4707 = vpack.c.b16 %v3729, %v3723
    %v4708 = vpack.c.b16 %v3730, %v3724
    %v4709 = vpack.c.b16 %v3731, %v3725
    %v4710 = vpack.c.b16 %v3732, %v3726
    %v4711 = vpack.c.b16 %v3739, %v3733
    %v4712 = vpack.c.b16 %v3740, %v3734
    %v4713 = vpack.c.b16 %v3741, %v3735
    %v4714 = vpack.c.b16 %v3742, %v3736
    %v4715 = vpack.c.b16 %v3743, %v3737
    %v4716 = vpack.c.b16 %v3744, %v3738
    %v4717 = vpack.c.b16 %v3751, %v3745
    %v4718 = vpack.c.b16 %v3752, %v3746
    %v4719 = vpack.c.b16 %v3753, %v3747
    %v4720 = vpack.c.b16 %v3754, %v3748
    %v4721 = vpack.c.b16 %v3755, %v3749
    %v4722 = vpack.c.b16 %v3756, %v3750
    %v4723 = vpack.c.b16 %v3763, %v3757
    %v4724 = vpack.c.b16 %v3764, %v3758
    %v4725 = vpack.c.b16 %v3765, %v3759
    %v4726 = vpack.c.b16 %v3766, %v3760
    %v4727 = vpack.c.b16 %v3767, %v3761
    %v4728 = vpack.c.b16 %v3768, %v3762
    %v4729 = vpack.c.b16 %v3775, %v3769
    %v4730 = vpack.c.b16 %v3776, %v3770
    %v4731 = vpack.c.b16 %v3777, %v3771
    %v4732 = vpack.c.b16 %v3778, %v3772
    %v4733 = vpack.c.b16 %v3779, %v3773
    %v4734 = vpack.c.b16 %v3780, %v3774
    %v4735 = vpack.c.b16 %v3787, %v3781
    %v4736 = vpack.c.b16 %v3788, %v3782
    %v4737 = vpack.c.b16 %v3789, %v3783
    %v4738 = vpack.c.b16 %v3790, %v3784
    %v4739 = vpack.c.b16 %v3791, %v3785
    %v4740 = vpack.c.b16 %v3792, %v3786
    %v4741 = vpack.c.b16 %v3799, %v3793
    %v4742 = vpack.c.b16 %v3800, %v3794
    %v4743 = vpack.c.b16 %v3801, %v3795
    %v4744 = vpack.c.b16 %v3802, %v3796
    %v4745 = vpack.c.b16 %v3803, %v3797
    %v4746 = vpack.c.b16 %v3804, %v3798
    %v4747 = vpack.c.b16 %v3811, %v3805
    %v4748 = vpack.c.b16 %v3812, %v3806
    %v4749 = vpack.c.b16 %v3813, %v3807
    %v4750 = vpack.c.b16 %v3814, %v3808
    %v4751 = vpack.c.b16 %v3815, %v3809
    %v4752 = vpack.c.b16 %v3816, %v3810
    %v4753 = vpack.c.b16 %v3823, %v3817
    %v4754 = vpack.c.b16 %v3824, %v3818
    %v4755 = vpack.c.b16 %v3825, %v3819
    %v4756 = vpack.c.b16 %v3826, %v3820
    %v4757 = vpack.c.b16 %v3827, %v3821
    %v4758 = vpack.c.b16 %v3828, %v3822
    %v4759 = vpack.c.b16 %v3835, %v3829
    %v4760 = vpack.c.b16 %v3836, %v3830
    %v4761 = vpack.c.b16 %v3837, %v3831
    %v4762 = vpack.c.b16 %v3838, %v3832
    %v4763 = vpack.c.b16 %v3839, %v3833
    %v4764 = vpack.c.b16 %v3840, %v3834
    %v4765 = vpack.c.b16 %v3847, %v3841
    %v4766 = vpack.c.b16 %v3848, %v3842
    %v4767 = vpack.c.b16 %v3849, %v3843
    %v4768 = vpack.c.b16 %v3850, %v3844
    %v4769 = vpack.c.b16 %v3851, %v3845
    %v4770 = vpack.c.b16 %v3852, %v3846
    %v4771 = vpack.c.b16 %v3859, %v3853
    %v4772 = vpack.c.b16 %v3860, %v3854
    %v4773 = vpack.c.b16 %v3861, %v3855
    %v4774 = vpack.c.b16 %v3862, %v3856
    %v4775 = vpack.c.b16 %v3863, %v3857
    %v4776 = vpack.c.b16 %v3864, %v3858
    %5689 = vmatprep.subr.bf16.mxu0 %v3908
    %5690 = vmatpush1.bf16.msra.mxu0 %v3907
    %5691 = vmatprep.subr.bf16.mxu0 %v3902
    %5692 = vmatpush1.bf16.msra.mxu0 %v3901
    %5693 = vmatprep.subr.bf16.mxu0 %v3896
    %5694 = vmatpush1.bf16.msra.mxu0 %v3895
    %5695 = vmatprep.subr.bf16.mxu0 %v3890
    %5696 = vmatpush1.bf16.msra.mxu0 %v3889
    %5697 = vmatprep.subr.bf16.mxu0 %v3884
    %5698 = vmatpush1.bf16.msra.mxu0 %v3883
    %5699 = vmatprep.subr.bf16.mxu0 %v3878
    %5700 = vmatpush1.bf16.msra.mxu0 %v3877
    %5701 = vmatprep.subr.bf16.mxu0 %v3872
    %5702 = vmatpush1.bf16.msra.mxu0 %v3871
    %5703 = vmatprep.subr.bf16.mxu0 %v3866
    %5704 = vmatpush1.bf16.msra.mxu0 %v3865
    %5705 = vmatprep.subr.bf16.mxu0 %v3956
    %5706 = vmatpush2.bf16.msra.mxu0 %v3955
    %5707 = vmatprep.subr.bf16.mxu0 %v3950
    %5708 = vmatpush2.bf16.msra.mxu0 %v3949
    %5709 = vmatprep.subr.bf16.mxu0 %v3944
    %5710 = vmatpush2.bf16.msra.mxu0 %v3943
    %5711 = vmatprep.subr.bf16.mxu0 %v3938
    %5712 = vmatpush2.bf16.msra.mxu0 %v3937
    %5713 = vmatprep.subr.bf16.mxu0 %v3932
    %5714 = vmatpush2.bf16.msra.mxu0 %v3931
    %5715 = vmatprep.subr.bf16.mxu0 %v3926
    %5716 = vmatpush2.bf16.msra.mxu0 %v3925
    %5717 = vmatprep.subr.bf16.mxu0 %v3920
    %5718 = vmatpush2.bf16.msra.mxu0 %v3919
    %5719 = vmatprep.subr.bf16.mxu0 %v3914
    %5720 = vmatpush2.bf16.msra.mxu0 %v3913
    %5721 = vmatprep.mubr.bf16.mxu0 %v167
    %5722 = vmatmul.mubr.bf16.gmra.mxu0 %v166
    %v5723 = vpop.f32.mrf.mxu0
    %v5724 = vadd.f32 %v1102, %v5723
    %v5725 = vpop.f32.mrf.mxu0
    %v5726 = vadd.f32 %v1106, %v5725
    %v5727 = vpop.f32.mrf.mxu0
    %v5728 = vpop.f32.mrf.mxu0
    %5729 = vdwg.mxu0
    %5730 = vmatprep.subr.bf16.mxu0 %v4004
    %5731 = vmatpush1.bf16.msra.mxu0 %v4003
    %5732 = vmatprep.subr.bf16.mxu0 %v3998
    %5733 = vmatpush1.bf16.msra.mxu0 %v3997
    %5734 = vmatprep.subr.bf16.mxu0 %v3992
    %5735 = vmatpush1.bf16.msra.mxu0 %v3991
    %5736 = vmatprep.subr.bf16.mxu0 %v3986
    %5737 = vmatpush1.bf16.msra.mxu0 %v3985
    %5738 = vmatprep.subr.bf16.mxu0 %v3980
    %5739 = vmatpush1.bf16.msra.mxu0 %v3979
    %5740 = vmatprep.subr.bf16.mxu0 %v3974
    %5741 = vmatpush1.bf16.msra.mxu0 %v3973
    %5742 = vmatprep.subr.bf16.mxu0 %v3968
    %5743 = vmatpush1.bf16.msra.mxu0 %v3967
    %5744 = vmatprep.subr.bf16.mxu0 %v3962
    %5745 = vmatpush1.bf16.msra.mxu0 %v3961
    %5746 = vmatprep.subr.bf16.mxu0 %v4052
    %5747 = vmatpush2.bf16.msra.mxu0 %v4051
    %5748 = vmatprep.subr.bf16.mxu0 %v4046
    %5749 = vmatpush2.bf16.msra.mxu0 %v4045
    %5750 = vmatprep.subr.bf16.mxu0 %v4040
    %5751 = vmatpush2.bf16.msra.mxu0 %v4039
    %5752 = vmatprep.subr.bf16.mxu0 %v4034
    %5753 = vmatpush2.bf16.msra.mxu0 %v4033
    %5754 = vmatprep.subr.bf16.mxu0 %v4028
    %5755 = vmatpush2.bf16.msra.mxu0 %v4027
    %5756 = vmatprep.subr.bf16.mxu0 %v4022
    %5757 = vmatpush2.bf16.msra.mxu0 %v4021
    %5758 = vmatprep.subr.bf16.mxu0 %v4016
    %5759 = vmatpush2.bf16.msra.mxu0 %v4015
    %5760 = vmatprep.subr.bf16.mxu0 %v4010
    %5761 = vmatpush2.bf16.msra.mxu0 %v4009
    %5762 = vmatprep.mubr.bf16.mxu0 %v169
    %5763 = vmatmul.mubr.bf16.gmra.mxu0 %v168
    %v5764 = vpop.f32.mrf.mxu0
    %v5765 = vadd.f32 %v5724, %v5764
    %v5766 = vpop.f32.mrf.mxu0
    %v5767 = vadd.f32 %v5726, %v5766
    %v5768 = vpop.f32.mrf.mxu0
    %v5769 = vpop.f32.mrf.mxu0
    %5770 = vdwg.mxu0
    %5771 = vmatprep.subr.bf16.mxu0 %v4100
    %5772 = vmatpush1.bf16.msra.mxu0 %v4099
    %5773 = vmatprep.subr.bf16.mxu0 %v4094
    %5774 = vmatpush1.bf16.msra.mxu0 %v4093
    %5775 = vmatprep.subr.bf16.mxu0 %v4088
    %5776 = vmatpush1.bf16.msra.mxu0 %v4087
    %5777 = vmatprep.subr.bf16.mxu0 %v4082
    %5778 = vmatpush1.bf16.msra.mxu0 %v4081
    %5779 = vmatprep.subr.bf16.mxu0 %v4076
    %5780 = vmatpush1.bf16.msra.mxu0 %v4075
    %5781 = vmatprep.subr.bf16.mxu0 %v4070
    %5782 = vmatpush1.bf16.msra.mxu0 %v4069
    %5783 = vmatprep.subr.bf16.mxu0 %v4064
    %5784 = vmatpush1.bf16.msra.mxu0 %v4063
    %5785 = vmatprep.subr.bf16.mxu0 %v4058
    %5786 = vmatpush1.bf16.msra.mxu0 %v4057
    %5787 = vmatprep.subr.bf16.mxu0 %v4148
    %5788 = vmatpush2.bf16.msra.mxu0 %v4147
    %5789 = vmatprep.subr.bf16.mxu0 %v4142
    %5790 = vmatpush2.bf16.msra.mxu0 %v4141
    %5791 = vmatprep.subr.bf16.mxu0 %v4136
    %5792 = vmatpush2.bf16.msra.mxu0 %v4135
    %5793 = vmatprep.subr.bf16.mxu0 %v4130
    %5794 = vmatpush2.bf16.msra.mxu0 %v4129
    %5795 = vmatprep.subr.bf16.mxu0 %v4124
    %5796 = vmatpush2.bf16.msra.mxu0 %v4123
    %5797 = vmatprep.subr.bf16.mxu0 %v4118
    %5798 = vmatpush2.bf16.msra.mxu0 %v4117
    %5799 = vmatprep.subr.bf16.mxu0 %v4112
    %5800 = vmatpush2.bf16.msra.mxu0 %v4111
    %5801 = vmatprep.subr.bf16.mxu0 %v4106
    %5802 = vmatpush2.bf16.msra.mxu0 %v4105
    %5803 = vmatprep.mubr.bf16.mxu0 %v171
    %5804 = vmatmul.mubr.bf16.gmra.mxu0 %v170
    %v5805 = vpop.f32.mrf.mxu0
    %v5806 = vadd.f32 %v5765, %v5805
    %v5807 = vpop.f32.mrf.mxu0
    %v5808 = vadd.f32 %v5767, %v5807
    %v5809 = vpop.f32.mrf.mxu0
    %v5810 = vpop.f32.mrf.mxu0
    %5811 = vdwg.mxu0
    %5812 = vmatprep.subr.bf16.mxu0 %v4196
    %5813 = vmatpush1.bf16.msra.mxu0 %v4195
    %5814 = vmatprep.subr.bf16.mxu0 %v4190
    %5815 = vmatpush1.bf16.msra.mxu0 %v4189
    %5816 = vmatprep.subr.bf16.mxu0 %v4184
    %5817 = vmatpush1.bf16.msra.mxu0 %v4183
    %5818 = vmatprep.subr.bf16.mxu0 %v4178
    %5819 = vmatpush1.bf16.msra.mxu0 %v4177
    %5820 = vmatprep.subr.bf16.mxu0 %v4172
    %5821 = vmatpush1.bf16.msra.mxu0 %v4171
    %5822 = vmatprep.subr.bf16.mxu0 %v4166
    %5823 = vmatpush1.bf16.msra.mxu0 %v4165
    %5824 = vmatprep.subr.bf16.mxu0 %v4160
    %5825 = vmatpush1.bf16.msra.mxu0 %v4159
    %5826 = vmatprep.subr.bf16.mxu0 %v4154
    %5827 = vmatpush1.bf16.msra.mxu0 %v4153
    %5828 = vmatprep.subr.bf16.mxu0 %v4244
    %5829 = vmatpush2.bf16.msra.mxu0 %v4243
    %5830 = vmatprep.subr.bf16.mxu0 %v4238
    %5831 = vmatpush2.bf16.msra.mxu0 %v4237
    %5832 = vmatprep.subr.bf16.mxu0 %v4232
    %5833 = vmatpush2.bf16.msra.mxu0 %v4231
    %5834 = vmatprep.subr.bf16.mxu0 %v4226
    %5835 = vmatpush2.bf16.msra.mxu0 %v4225
    %5836 = vmatprep.subr.bf16.mxu0 %v4220
    %5837 = vmatpush2.bf16.msra.mxu0 %v4219
    %5838 = vmatprep.subr.bf16.mxu0 %v4214
    %5839 = vmatpush2.bf16.msra.mxu0 %v4213
    %5840 = vmatprep.subr.bf16.mxu0 %v4208
    %5841 = vmatpush2.bf16.msra.mxu0 %v4207
    %5842 = vmatprep.subr.bf16.mxu0 %v4202
    %5843 = vmatpush2.bf16.msra.mxu0 %v4201
    %5844 = vmatprep.mubr.bf16.mxu0 %v173
    %5845 = vmatmul.mubr.bf16.gmra.mxu0 %v172
    %v5846 = vpop.f32.mrf.mxu0
    %v5847 = vadd.f32 %v5806, %v5846
    %v5848 = vpop.f32.mrf.mxu0
    %v5849 = vadd.f32 %v5808, %v5848
    %v5850 = vpop.f32.mrf.mxu0
    %v5851 = vpop.f32.mrf.mxu0
    %5852 = vdwg.mxu0
    %5853 = vmatprep.subr.bf16.mxu0 %v4292
    %5854 = vmatpush1.bf16.msra.mxu0 %v4291
    %5855 = vmatprep.subr.bf16.mxu0 %v4286
    %5856 = vmatpush1.bf16.msra.mxu0 %v4285
    %5857 = vmatprep.subr.bf16.mxu0 %v4280
    %5858 = vmatpush1.bf16.msra.mxu0 %v4279
    %5859 = vmatprep.subr.bf16.mxu0 %v4274
    %5860 = vmatpush1.bf16.msra.mxu0 %v4273
    %5861 = vmatprep.subr.bf16.mxu0 %v4268
    %5862 = vmatpush1.bf16.msra.mxu0 %v4267
    %5863 = vmatprep.subr.bf16.mxu0 %v4262
    %5864 = vmatpush1.bf16.msra.mxu0 %v4261
    %5865 = vmatprep.subr.bf16.mxu0 %v4256
    %5866 = vmatpush1.bf16.msra.mxu0 %v4255
    %5867 = vmatprep.subr.bf16.mxu0 %v4250
    %5868 = vmatpush1.bf16.msra.mxu0 %v4249
    %5869 = vmatprep.subr.bf16.mxu0 %v4340
    %5870 = vmatpush2.bf16.msra.mxu0 %v4339
    %5871 = vmatprep.subr.bf16.mxu0 %v4334
    %5872 = vmatpush2.bf16.msra.mxu0 %v4333
    %5873 = vmatprep.subr.bf16.mxu0 %v4328
    %5874 = vmatpush2.bf16.msra.mxu0 %v4327
    %5875 = vmatprep.subr.bf16.mxu0 %v4322
    %5876 = vmatpush2.bf16.msra.mxu0 %v4321
    %5877 = vmatprep.subr.bf16.mxu0 %v4316
    %5878 = vmatpush2.bf16.msra.mxu0 %v4315
    %5879 = vmatprep.subr.bf16.mxu0 %v4310
    %5880 = vmatpush2.bf16.msra.mxu0 %v4309
    %5881 = vmatprep.subr.bf16.mxu0 %v4304
    %5882 = vmatpush2.bf16.msra.mxu0 %v4303
    %5883 = vmatprep.subr.bf16.mxu0 %v4298
    %5884 = vmatpush2.bf16.msra.mxu0 %v4297
    %5885 = vmatprep.mubr.bf16.mxu0 %v175
    %5886 = vmatmul.mubr.bf16.gmra.mxu0 %v174
    %v5887 = vpop.f32.mrf.mxu0
    %v5888 = vadd.f32 %v5847, %v5887
    %v5889 = vpop.f32.mrf.mxu0
    %v5890 = vadd.f32 %v5849, %v5889
    %v5891 = vpop.f32.mrf.mxu0
    %v5892 = vpop.f32.mrf.mxu0
    %5893 = vdwg.mxu0
    %5894 = vmatprep.subr.bf16.mxu0 %v4388
    %5895 = vmatpush1.bf16.msra.mxu0 %v4387
    %5896 = vmatprep.subr.bf16.mxu0 %v4382
    %5897 = vmatpush1.bf16.msra.mxu0 %v4381
    %5898 = vmatprep.subr.bf16.mxu0 %v4376
    %5899 = vmatpush1.bf16.msra.mxu0 %v4375
    %5900 = vmatprep.subr.bf16.mxu0 %v4370
    %5901 = vmatpush1.bf16.msra.mxu0 %v4369
    %5902 = vmatprep.subr.bf16.mxu0 %v4364
    %5903 = vmatpush1.bf16.msra.mxu0 %v4363
    %5904 = vmatprep.subr.bf16.mxu0 %v4358
    %5905 = vmatpush1.bf16.msra.mxu0 %v4357
    %5906 = vmatprep.subr.bf16.mxu0 %v4352
    %5907 = vmatpush1.bf16.msra.mxu0 %v4351
    %5908 = vmatprep.subr.bf16.mxu0 %v4346
    %5909 = vmatpush1.bf16.msra.mxu0 %v4345
    %5910 = vmatprep.subr.bf16.mxu0 %v4436
    %5911 = vmatpush2.bf16.msra.mxu0 %v4435
    %5912 = vmatprep.subr.bf16.mxu0 %v4430
    %5913 = vmatpush2.bf16.msra.mxu0 %v4429
    %5914 = vmatprep.subr.bf16.mxu0 %v4424
    %5915 = vmatpush2.bf16.msra.mxu0 %v4423
    %5916 = vmatprep.subr.bf16.mxu0 %v4418
    %5917 = vmatpush2.bf16.msra.mxu0 %v4417
    %5918 = vmatprep.subr.bf16.mxu0 %v4412
    %5919 = vmatpush2.bf16.msra.mxu0 %v4411
    %5920 = vmatprep.subr.bf16.mxu0 %v4406
    %5921 = vmatpush2.bf16.msra.mxu0 %v4405
    %5922 = vmatprep.subr.bf16.mxu0 %v4400
    %5923 = vmatpush2.bf16.msra.mxu0 %v4399
    %5924 = vmatprep.subr.bf16.mxu0 %v4394
    %5925 = vmatpush2.bf16.msra.mxu0 %v4393
    %5926 = vmatprep.mubr.bf16.mxu0 %v177
    %5927 = vmatmul.mubr.bf16.gmra.mxu0 %v176
    %v5928 = vpop.f32.mrf.mxu0
    %v5929 = vadd.f32 %v5888, %v5928
    %v5930 = vpop.f32.mrf.mxu0
    %v5931 = vadd.f32 %v5890, %v5930
    %v5932 = vpop.f32.mrf.mxu0
    %v5933 = vpop.f32.mrf.mxu0
    %5934 = vdwg.mxu0
    %5935 = vmatprep.subr.bf16.mxu0 %v4484
    %5936 = vmatpush1.bf16.msra.mxu0 %v4483
    %5937 = vmatprep.subr.bf16.mxu0 %v4478
    %5938 = vmatpush1.bf16.msra.mxu0 %v4477
    %5939 = vmatprep.subr.bf16.mxu0 %v4472
    %5940 = vmatpush1.bf16.msra.mxu0 %v4471
    %5941 = vmatprep.subr.bf16.mxu0 %v4466
    %5942 = vmatpush1.bf16.msra.mxu0 %v4465
    %5943 = vmatprep.subr.bf16.mxu0 %v4460
    %5944 = vmatpush1.bf16.msra.mxu0 %v4459
    %5945 = vmatprep.subr.bf16.mxu0 %v4454
    %5946 = vmatpush1.bf16.msra.mxu0 %v4453
    %5947 = vmatprep.subr.bf16.mxu0 %v4448
    %5948 = vmatpush1.bf16.msra.mxu0 %v4447
    %5949 = vmatprep.subr.bf16.mxu0 %v4442
    %5950 = vmatpush1.bf16.msra.mxu0 %v4441
    %5951 = vmatprep.subr.bf16.mxu0 %v4532
    %5952 = vmatpush2.bf16.msra.mxu0 %v4531
    %5953 = vmatprep.subr.bf16.mxu0 %v4526
    %5954 = vmatpush2.bf16.msra.mxu0 %v4525
    %5955 = vmatprep.subr.bf16.mxu0 %v4520
    %5956 = vmatpush2.bf16.msra.mxu0 %v4519
    %5957 = vmatprep.subr.bf16.mxu0 %v4514
    %5958 = vmatpush2.bf16.msra.mxu0 %v4513
    %5959 = vmatprep.subr.bf16.mxu0 %v4508
    %5960 = vmatpush2.bf16.msra.mxu0 %v4507
    %5961 = vmatprep.subr.bf16.mxu0 %v4502
    %5962 = vmatpush2.bf16.msra.mxu0 %v4501
    %5963 = vmatprep.subr.bf16.mxu0 %v4496
    %5964 = vmatpush2.bf16.msra.mxu0 %v4495
    %5965 = vmatprep.subr.bf16.mxu0 %v4490
    %5966 = vmatpush2.bf16.msra.mxu0 %v4489
    %5967 = vmatprep.mubr.bf16.mxu0 %v179
    %5968 = vmatmul.mubr.bf16.gmra.mxu0 %v178
    %v5969 = vpop.f32.mrf.mxu0
    %v5970 = vadd.f32 %v5929, %v5969
    %v5971 = vpop.f32.mrf.mxu0
    %v5972 = vadd.f32 %v5931, %v5971
    %v5973 = vpop.f32.mrf.mxu0
    %v5974 = vpop.f32.mrf.mxu0
    %5975 = vdwg.mxu0
    %5976 = vmatprep.subr.bf16.mxu0 %v4580
    %5977 = vmatpush1.bf16.msra.mxu0 %v4579
    %5978 = vmatprep.subr.bf16.mxu0 %v4574
    %5979 = vmatpush1.bf16.msra.mxu0 %v4573
    %5980 = vmatprep.subr.bf16.mxu0 %v4568
    %5981 = vmatpush1.bf16.msra.mxu0 %v4567
    %5982 = vmatprep.subr.bf16.mxu0 %v4562
    %5983 = vmatpush1.bf16.msra.mxu0 %v4561
    %5984 = vmatprep.subr.bf16.mxu0 %v4556
    %5985 = vmatpush1.bf16.msra.mxu0 %v4555
    %5986 = vmatprep.subr.bf16.mxu0 %v4550
    %5987 = vmatpush1.bf16.msra.mxu0 %v4549
    %5988 = vmatprep.subr.bf16.mxu0 %v4544
    %5989 = vmatpush1.bf16.msra.mxu0 %v4543
    %5990 = vmatprep.subr.bf16.mxu0 %v4538
    %5991 = vmatpush1.bf16.msra.mxu0 %v4537
    %5992 = vmatprep.subr.bf16.mxu0 %v4628
    %5993 = vmatpush2.bf16.msra.mxu0 %v4627
    %5994 = vmatprep.subr.bf16.mxu0 %v4622
    %5995 = vmatpush2.bf16.msra.mxu0 %v4621
    %5996 = vmatprep.subr.bf16.mxu0 %v4616
    %5997 = vmatpush2.bf16.msra.mxu0 %v4615
    %5998 = vmatprep.subr.bf16.mxu0 %v4610
    %5999 = vmatpush2.bf16.msra.mxu0 %v4609
    %6000 = vmatprep.subr.bf16.mxu0 %v4604
    %6001 = vmatpush2.bf16.msra.mxu0 %v4603
    %6002 = vmatprep.subr.bf16.mxu0 %v4598
    %6003 = vmatpush2.bf16.msra.mxu0 %v4597
    %6004 = vmatprep.subr.bf16.mxu0 %v4592
    %6005 = vmatpush2.bf16.msra.mxu0 %v4591
    %6006 = vmatprep.subr.bf16.mxu0 %v4586
    %6007 = vmatpush2.bf16.msra.mxu0 %v4585
    %6008 = vmatprep.mubr.bf16.mxu0 %v181
    %6009 = vmatmul.mubr.bf16.gmra.mxu0 %v180
    %v6010 = vpop.f32.mrf.mxu0
    %v6011 = vadd.f32 %v5970, %v6010
    %v6012 = vpop.f32.mrf.mxu0
    %v6013 = vadd.f32 %v5972, %v6012
    %v6014 = vpop.f32.mrf.mxu0
    %v6015 = vpop.f32.mrf.mxu0
    %6016 = vdwg.mxu0
    %6017 = vmatprep.subr.bf16.mxu0 %v4676
    %6018 = vmatpush1.bf16.msra.mxu0 %v4675
    %6019 = vmatprep.subr.bf16.mxu0 %v4670
    %6020 = vmatpush1.bf16.msra.mxu0 %v4669
    %6021 = vmatprep.subr.bf16.mxu0 %v4664
    %6022 = vmatpush1.bf16.msra.mxu0 %v4663
    %6023 = vmatprep.subr.bf16.mxu0 %v4658
    %6024 = vmatpush1.bf16.msra.mxu0 %v4657
    %6025 = vmatprep.subr.bf16.mxu0 %v4652
    %6026 = vmatpush1.bf16.msra.mxu0 %v4651
    %6027 = vmatprep.subr.bf16.mxu0 %v4646
    %6028 = vmatpush1.bf16.msra.mxu0 %v4645
    %6029 = vmatprep.subr.bf16.mxu0 %v4640
    %6030 = vmatpush1.bf16.msra.mxu0 %v4639
    %6031 = vmatprep.subr.bf16.mxu0 %v4634
    %6032 = vmatpush1.bf16.msra.mxu0 %v4633
    %6033 = vmatprep.subr.bf16.mxu0 %v4724
    %6034 = vmatpush2.bf16.msra.mxu0 %v4723
    %6035 = vmatprep.subr.bf16.mxu0 %v4718
    %6036 = vmatpush2.bf16.msra.mxu0 %v4717
    %6037 = vmatprep.subr.bf16.mxu0 %v4712
    %6038 = vmatpush2.bf16.msra.mxu0 %v4711
    %6039 = vmatprep.subr.bf16.mxu0 %v4706
    %6040 = vmatpush2.bf16.msra.mxu0 %v4705
    %6041 = vmatprep.subr.bf16.mxu0 %v4700
    %6042 = vmatpush2.bf16.msra.mxu0 %v4699
    %6043 = vmatprep.subr.bf16.mxu0 %v4694
    %6044 = vmatpush2.bf16.msra.mxu0 %v4693
    %6045 = vmatprep.subr.bf16.mxu0 %v4688
    %6046 = vmatpush2.bf16.msra.mxu0 %v4687
    %6047 = vmatprep.subr.bf16.mxu0 %v4682
    %6048 = vmatpush2.bf16.msra.mxu0 %v4681
    %6049 = vmatprep.mubr.bf16.mxu0 %v183
    %6050 = vmatmul.mubr.bf16.gmra.mxu0 %v182
    %v6051 = vpop.f32.mrf.mxu0
    %v6052 = vadd.f32 %v6011, %v6051
    %v6053 = vpop.f32.mrf.mxu0
    %v6054 = vadd.f32 %v6013, %v6053
    %v6055 = vpop.f32.mrf.mxu0
    %v6056 = vpop.f32.mrf.mxu0
    %6057 = vdwg.mxu0
    %6058 = vmatprep.subr.bf16.mxu0 %v4772
    %6059 = vmatpush1.bf16.msra.mxu0 %v4771
    %6060 = vmatprep.subr.bf16.mxu0 %v4766
    %6061 = vmatpush1.bf16.msra.mxu0 %v4765
    %6062 = vmatprep.subr.bf16.mxu0 %v4760
    %6063 = vmatpush1.bf16.msra.mxu0 %v4759
    %6064 = vmatprep.subr.bf16.mxu0 %v4754
    %6065 = vmatpush1.bf16.msra.mxu0 %v4753
    %6066 = vmatprep.subr.bf16.mxu0 %v4748
    %6067 = vmatpush1.bf16.msra.mxu0 %v4747
    %6068 = vmatprep.subr.bf16.mxu0 %v4742
    %6069 = vmatpush1.bf16.msra.mxu0 %v4741
    %6070 = vmatprep.subr.bf16.mxu0 %v4736
    %6071 = vmatpush1.bf16.msra.mxu0 %v4735
    %6072 = vmatprep.subr.bf16.mxu0 %v4730
    %6073 = vmatpush1.bf16.msra.mxu0 %v4729
    %6074 = vmatprep.subr.bf16.mxu0 0
    %6075 = vmatpush2.bf16.msra.mxu0 0
    %6076 = vmatprep.subr.bf16.mxu0 0
    %6077 = vmatpush2.bf16.msra.mxu0 0
    %6078 = vmatprep.subr.bf16.mxu0 0
    %6079 = vmatpush2.bf16.msra.mxu0 0
    %6080 = vmatprep.subr.bf16.mxu0 0
    %6081 = vmatpush2.bf16.msra.mxu0 0
    %6082 = vmatprep.subr.bf16.mxu0 0
    %6083 = vmatpush2.bf16.msra.mxu0 0
    %6084 = vmatprep.subr.bf16.mxu0 0
    %6085 = vmatpush2.bf16.msra.mxu0 0
    %6086 = vmatprep.subr.bf16.mxu0 0
    %6087 = vmatpush2.bf16.msra.mxu0 0
    %6088 = vmatprep.subr.bf16.mxu0 0
    %6089 = vmatpush2.bf16.msra.mxu0 0
    %6090 = vmatprep.mubr.bf16.mxu0 0
    %6091 = vmatmul.mubr.bf16.gmra.mxu0 %v184
    %v6092 = vpop.f32.mrf.mxu0
    %v6093 = vadd.f32 %v6052, %v6092
    %v6094 = vpop.f32.mrf.mxu0
    %v6095 = vadd.f32 %v6054, %v6094
    %v6096 = vpop.f32.mrf.mxu0
    %v6097 = vpop.f32.mrf.mxu0
    %6098 = vdwg.mxu0
    %6099 = vmatprep.subr.bf16.mxu0 %v3910
    %6100 = vmatpush1.bf16.msra.mxu0 %v3909
    %6101 = vmatprep.subr.bf16.mxu0 %v3904
    %6102 = vmatpush1.bf16.msra.mxu0 %v3903
    %6103 = vmatprep.subr.bf16.mxu0 %v3898
    %6104 = vmatpush1.bf16.msra.mxu0 %v3897
    %6105 = vmatprep.subr.bf16.mxu0 %v3892
    %6106 = vmatpush1.bf16.msra.mxu0 %v3891
    %6107 = vmatprep.subr.bf16.mxu0 %v3886
    %6108 = vmatpush1.bf16.msra.mxu0 %v3885
    %6109 = vmatprep.subr.bf16.mxu0 %v3880
    %6110 = vmatpush1.bf16.msra.mxu0 %v3879
    %6111 = vmatprep.subr.bf16.mxu0 %v3874
    %6112 = vmatpush1.bf16.msra.mxu0 %v3873
    %6113 = vmatprep.subr.bf16.mxu0 %v3868
    %6114 = vmatpush1.bf16.msra.mxu0 %v3867
    %6115 = vmatprep.subr.bf16.mxu0 %v3958
    %6116 = vmatpush2.bf16.msra.mxu0 %v3957
    %6117 = vmatprep.subr.bf16.mxu0 %v3952
    %6118 = vmatpush2.bf16.msra.mxu0 %v3951
    %6119 = vmatprep.subr.bf16.mxu0 %v3946
    %6120 = vmatpush2.bf16.msra.mxu0 %v3945
    %6121 = vmatprep.subr.bf16.mxu0 %v3940
    %6122 = vmatpush2.bf16.msra.mxu0 %v3939
    %6123 = vmatprep.subr.bf16.mxu0 %v3934
    %6124 = vmatpush2.bf16.msra.mxu0 %v3933
    %6125 = vmatprep.subr.bf16.mxu0 %v3928
    %6126 = vmatpush2.bf16.msra.mxu0 %v3927
    %6127 = vmatprep.subr.bf16.mxu0 %v3922
    %6128 = vmatpush2.bf16.msra.mxu0 %v3921
    %6129 = vmatprep.subr.bf16.mxu0 %v3916
    %6130 = vmatpush2.bf16.msra.mxu0 %v3915
    %6131 = vmatprep.mubr.bf16.mxu0 %v167
    %6132 = vmatmul.mubr.bf16.gmra.mxu0 %v166
    %v6133 = vpop.f32.mrf.mxu0
    %v6134 = vadd.f32 %v1110, %v6133
    %v6135 = vpop.f32.mrf.mxu0
    %v6136 = vadd.f32 %v1114, %v6135
    %v6137 = vpop.f32.mrf.mxu0
    %v6138 = vpop.f32.mrf.mxu0
    %6139 = vdwg.mxu0
    %6140 = vmatprep.subr.bf16.mxu0 %v4006
    %6141 = vmatpush1.bf16.msra.mxu0 %v4005
    %6142 = vmatprep.subr.bf16.mxu0 %v4000
    %6143 = vmatpush1.bf16.msra.mxu0 %v3999
    %6144 = vmatprep.subr.bf16.mxu0 %v3994
    %6145 = vmatpush1.bf16.msra.mxu0 %v3993
    %6146 = vmatprep.subr.bf16.mxu0 %v3988
    %6147 = vmatpush1.bf16.msra.mxu0 %v3987
    %6148 = vmatprep.subr.bf16.mxu0 %v3982
    %6149 = vmatpush1.bf16.msra.mxu0 %v3981
    %6150 = vmatprep.subr.bf16.mxu0 %v3976
    %6151 = vmatpush1.bf16.msra.mxu0 %v3975
    %6152 = vmatprep.subr.bf16.mxu0 %v3970
    %6153 = vmatpush1.bf16.msra.mxu0 %v3969
    %6154 = vmatprep.subr.bf16.mxu0 %v3964
    %6155 = vmatpush1.bf16.msra.mxu0 %v3963
    %6156 = vmatprep.subr.bf16.mxu0 %v4054
    %6157 = vmatpush2.bf16.msra.mxu0 %v4053
    %6158 = vmatprep.subr.bf16.mxu0 %v4048
    %6159 = vmatpush2.bf16.msra.mxu0 %v4047
    %6160 = vmatprep.subr.bf16.mxu0 %v4042
    %6161 = vmatpush2.bf16.msra.mxu0 %v4041
    %6162 = vmatprep.subr.bf16.mxu0 %v4036
    %6163 = vmatpush2.bf16.msra.mxu0 %v4035
    %6164 = vmatprep.subr.bf16.mxu0 %v4030
    %6165 = vmatpush2.bf16.msra.mxu0 %v4029
    %6166 = vmatprep.subr.bf16.mxu0 %v4024
    %6167 = vmatpush2.bf16.msra.mxu0 %v4023
    %6168 = vmatprep.subr.bf16.mxu0 %v4018
    %6169 = vmatpush2.bf16.msra.mxu0 %v4017
    %6170 = vmatprep.subr.bf16.mxu0 %v4012
    %6171 = vmatpush2.bf16.msra.mxu0 %v4011
    %6172 = vmatprep.mubr.bf16.mxu0 %v169
    %6173 = vmatmul.mubr.bf16.gmra.mxu0 %v168
    %v6174 = vpop.f32.mrf.mxu0
    %v6175 = vadd.f32 %v6134, %v6174
    %v6176 = vpop.f32.mrf.mxu0
    %v6177 = vadd.f32 %v6136, %v6176
    %v6178 = vpop.f32.mrf.mxu0
    %v6179 = vpop.f32.mrf.mxu0
    %6180 = vdwg.mxu0
    %6181 = vmatprep.subr.bf16.mxu0 %v4102
    %6182 = vmatpush1.bf16.msra.mxu0 %v4101
    %6183 = vmatprep.subr.bf16.mxu0 %v4096
    %6184 = vmatpush1.bf16.msra.mxu0 %v4095
    %6185 = vmatprep.subr.bf16.mxu0 %v4090
    %6186 = vmatpush1.bf16.msra.mxu0 %v4089
    %6187 = vmatprep.subr.bf16.mxu0 %v4084
    %6188 = vmatpush1.bf16.msra.mxu0 %v4083
    %6189 = vmatprep.subr.bf16.mxu0 %v4078
    %6190 = vmatpush1.bf16.msra.mxu0 %v4077
    %6191 = vmatprep.subr.bf16.mxu0 %v4072
    %6192 = vmatpush1.bf16.msra.mxu0 %v4071
    %6193 = vmatprep.subr.bf16.mxu0 %v4066
    %6194 = vmatpush1.bf16.msra.mxu0 %v4065
    %6195 = vmatprep.subr.bf16.mxu0 %v4060
    %6196 = vmatpush1.bf16.msra.mxu0 %v4059
    %6197 = vmatprep.subr.bf16.mxu0 %v4150
    %6198 = vmatpush2.bf16.msra.mxu0 %v4149
    %6199 = vmatprep.subr.bf16.mxu0 %v4144
    %6200 = vmatpush2.bf16.msra.mxu0 %v4143
    %6201 = vmatprep.subr.bf16.mxu0 %v4138
    %6202 = vmatpush2.bf16.msra.mxu0 %v4137
    %6203 = vmatprep.subr.bf16.mxu0 %v4132
    %6204 = vmatpush2.bf16.msra.mxu0 %v4131
    %6205 = vmatprep.subr.bf16.mxu0 %v4126
    %6206 = vmatpush2.bf16.msra.mxu0 %v4125
    %6207 = vmatprep.subr.bf16.mxu0 %v4120
    %6208 = vmatpush2.bf16.msra.mxu0 %v4119
    %6209 = vmatprep.subr.bf16.mxu0 %v4114
    %6210 = vmatpush2.bf16.msra.mxu0 %v4113
    %6211 = vmatprep.subr.bf16.mxu0 %v4108
    %6212 = vmatpush2.bf16.msra.mxu0 %v4107
    %6213 = vmatprep.mubr.bf16.mxu0 %v171
    %6214 = vmatmul.mubr.bf16.gmra.mxu0 %v170
    %v6215 = vpop.f32.mrf.mxu0
    %v6216 = vadd.f32 %v6175, %v6215
    %v6217 = vpop.f32.mrf.mxu0
    %v6218 = vadd.f32 %v6177, %v6217
    %v6219 = vpop.f32.mrf.mxu0
    %v6220 = vpop.f32.mrf.mxu0
    %6221 = vdwg.mxu0
    %6222 = vmatprep.subr.bf16.mxu0 %v4198
    %6223 = vmatpush1.bf16.msra.mxu0 %v4197
    %6224 = vmatprep.subr.bf16.mxu0 %v4192
    %6225 = vmatpush1.bf16.msra.mxu0 %v4191
    %6226 = vmatprep.subr.bf16.mxu0 %v4186
    %6227 = vmatpush1.bf16.msra.mxu0 %v4185
    %6228 = vmatprep.subr.bf16.mxu0 %v4180
    %6229 = vmatpush1.bf16.msra.mxu0 %v4179
    %6230 = vmatprep.subr.bf16.mxu0 %v4174
    %6231 = vmatpush1.bf16.msra.mxu0 %v4173
    %6232 = vmatprep.subr.bf16.mxu0 %v4168
    %6233 = vmatpush1.bf16.msra.mxu0 %v4167
    %6234 = vmatprep.subr.bf16.mxu0 %v4162
    %6235 = vmatpush1.bf16.msra.mxu0 %v4161
    %6236 = vmatprep.subr.bf16.mxu0 %v4156
    %6237 = vmatpush1.bf16.msra.mxu0 %v4155
    %6238 = vmatprep.subr.bf16.mxu0 %v4246
    %6239 = vmatpush2.bf16.msra.mxu0 %v4245
    %6240 = vmatprep.subr.bf16.mxu0 %v4240
    %6241 = vmatpush2.bf16.msra.mxu0 %v4239
    %6242 = vmatprep.subr.bf16.mxu0 %v4234
    %6243 = vmatpush2.bf16.msra.mxu0 %v4233
    %6244 = vmatprep.subr.bf16.mxu0 %v4228
    %6245 = vmatpush2.bf16.msra.mxu0 %v4227
    %6246 = vmatprep.subr.bf16.mxu0 %v4222
    %6247 = vmatpush2.bf16.msra.mxu0 %v4221
    %6248 = vmatprep.subr.bf16.mxu0 %v4216
    %6249 = vmatpush2.bf16.msra.mxu0 %v4215
    %6250 = vmatprep.subr.bf16.mxu0 %v4210
    %6251 = vmatpush2.bf16.msra.mxu0 %v4209
    %6252 = vmatprep.subr.bf16.mxu0 %v4204
    %6253 = vmatpush2.bf16.msra.mxu0 %v4203
    %6254 = vmatprep.mubr.bf16.mxu0 %v173
    %6255 = vmatmul.mubr.bf16.gmra.mxu0 %v172
    %v6256 = vpop.f32.mrf.mxu0
    %v6257 = vadd.f32 %v6216, %v6256
    %v6258 = vpop.f32.mrf.mxu0
    %v6259 = vadd.f32 %v6218, %v6258
    %v6260 = vpop.f32.mrf.mxu0
    %v6261 = vpop.f32.mrf.mxu0
    %6262 = vdwg.mxu0
    %6263 = vmatprep.subr.bf16.mxu0 %v4294
    %6264 = vmatpush1.bf16.msra.mxu0 %v4293
    %6265 = vmatprep.subr.bf16.mxu0 %v4288
    %6266 = vmatpush1.bf16.msra.mxu0 %v4287
    %6267 = vmatprep.subr.bf16.mxu0 %v4282
    %6268 = vmatpush1.bf16.msra.mxu0 %v4281
    %6269 = vmatprep.subr.bf16.mxu0 %v4276
    %6270 = vmatpush1.bf16.msra.mxu0 %v4275
    %6271 = vmatprep.subr.bf16.mxu0 %v4270
    %6272 = vmatpush1.bf16.msra.mxu0 %v4269
    %6273 = vmatprep.subr.bf16.mxu0 %v4264
    %6274 = vmatpush1.bf16.msra.mxu0 %v4263
    %6275 = vmatprep.subr.bf16.mxu0 %v4258
    %6276 = vmatpush1.bf16.msra.mxu0 %v4257
    %6277 = vmatprep.subr.bf16.mxu0 %v4252
    %6278 = vmatpush1.bf16.msra.mxu0 %v4251
    %6279 = vmatprep.subr.bf16.mxu0 %v4342
    %6280 = vmatpush2.bf16.msra.mxu0 %v4341
    %6281 = vmatprep.subr.bf16.mxu0 %v4336
    %6282 = vmatpush2.bf16.msra.mxu0 %v4335
    %6283 = vmatprep.subr.bf16.mxu0 %v4330
    %6284 = vmatpush2.bf16.msra.mxu0 %v4329
    %6285 = vmatprep.subr.bf16.mxu0 %v4324
    %6286 = vmatpush2.bf16.msra.mxu0 %v4323
    %6287 = vmatprep.subr.bf16.mxu0 %v4318
    %6288 = vmatpush2.bf16.msra.mxu0 %v4317
    %6289 = vmatprep.subr.bf16.mxu0 %v4312
    %6290 = vmatpush2.bf16.msra.mxu0 %v4311
    %6291 = vmatprep.subr.bf16.mxu0 %v4306
    %6292 = vmatpush2.bf16.msra.mxu0 %v4305
    %6293 = vmatprep.subr.bf16.mxu0 %v4300
    %6294 = vmatpush2.bf16.msra.mxu0 %v4299
    %6295 = vmatprep.mubr.bf16.mxu0 %v175
    %6296 = vmatmul.mubr.bf16.gmra.mxu0 %v174
    %v6297 = vpop.f32.mrf.mxu0
    %v6298 = vadd.f32 %v6257, %v6297
    %v6299 = vpop.f32.mrf.mxu0
    %v6300 = vadd.f32 %v6259, %v6299
    %v6301 = vpop.f32.mrf.mxu0
    %v6302 = vpop.f32.mrf.mxu0
    %6303 = vdwg.mxu0
    %6304 = vmatprep.subr.bf16.mxu0 %v4390
    %6305 = vmatpush1.bf16.msra.mxu0 %v4389
    %6306 = vmatprep.subr.bf16.mxu0 %v4384
    %6307 = vmatpush1.bf16.msra.mxu0 %v4383
    %6308 = vmatprep.subr.bf16.mxu0 %v4378
    %6309 = vmatpush1.bf16.msra.mxu0 %v4377
    %6310 = vmatprep.subr.bf16.mxu0 %v4372
    %6311 = vmatpush1.bf16.msra.mxu0 %v4371
    %6312 = vmatprep.subr.bf16.mxu0 %v4366
    %6313 = vmatpush1.bf16.msra.mxu0 %v4365
    %6314 = vmatprep.subr.bf16.mxu0 %v4360
    %6315 = vmatpush1.bf16.msra.mxu0 %v4359
    %6316 = vmatprep.subr.bf16.mxu0 %v4354
    %6317 = vmatpush1.bf16.msra.mxu0 %v4353
    %6318 = vmatprep.subr.bf16.mxu0 %v4348
    %6319 = vmatpush1.bf16.msra.mxu0 %v4347
    %6320 = vmatprep.subr.bf16.mxu0 %v4438
    %6321 = vmatpush2.bf16.msra.mxu0 %v4437
    %6322 = vmatprep.subr.bf16.mxu0 %v4432
    %6323 = vmatpush2.bf16.msra.mxu0 %v4431
    %6324 = vmatprep.subr.bf16.mxu0 %v4426
    %6325 = vmatpush2.bf16.msra.mxu0 %v4425
    %6326 = vmatprep.subr.bf16.mxu0 %v4420
    %6327 = vmatpush2.bf16.msra.mxu0 %v4419
    %6328 = vmatprep.subr.bf16.mxu0 %v4414
    %6329 = vmatpush2.bf16.msra.mxu0 %v4413
    %6330 = vmatprep.subr.bf16.mxu0 %v4408
    %6331 = vmatpush2.bf16.msra.mxu0 %v4407
    %6332 = vmatprep.subr.bf16.mxu0 %v4402
    %6333 = vmatpush2.bf16.msra.mxu0 %v4401
    %6334 = vmatprep.subr.bf16.mxu0 %v4396
    %6335 = vmatpush2.bf16.msra.mxu0 %v4395
    %6336 = vmatprep.mubr.bf16.mxu0 %v177
    %6337 = vmatmul.mubr.bf16.gmra.mxu0 %v176
    %v6338 = vpop.f32.mrf.mxu0
    %v6339 = vadd.f32 %v6298, %v6338
    %v6340 = vpop.f32.mrf.mxu0
    %v6341 = vadd.f32 %v6300, %v6340
    %v6342 = vpop.f32.mrf.mxu0
    %v6343 = vpop.f32.mrf.mxu0
    %6344 = vdwg.mxu0
    %6345 = vmatprep.subr.bf16.mxu0 %v4486
    %6346 = vmatpush1.bf16.msra.mxu0 %v4485
    %6347 = vmatprep.subr.bf16.mxu0 %v4480
    %6348 = vmatpush1.bf16.msra.mxu0 %v4479
    %6349 = vmatprep.subr.bf16.mxu0 %v4474
    %6350 = vmatpush1.bf16.msra.mxu0 %v4473
    %6351 = vmatprep.subr.bf16.mxu0 %v4468
    %6352 = vmatpush1.bf16.msra.mxu0 %v4467
    %6353 = vmatprep.subr.bf16.mxu0 %v4462
    %6354 = vmatpush1.bf16.msra.mxu0 %v4461
    %6355 = vmatprep.subr.bf16.mxu0 %v4456
    %6356 = vmatpush1.bf16.msra.mxu0 %v4455
    %6357 = vmatprep.subr.bf16.mxu0 %v4450
    %6358 = vmatpush1.bf16.msra.mxu0 %v4449
    %6359 = vmatprep.subr.bf16.mxu0 %v4444
    %6360 = vmatpush1.bf16.msra.mxu0 %v4443
    %6361 = vmatprep.subr.bf16.mxu0 %v4534
    %6362 = vmatpush2.bf16.msra.mxu0 %v4533
    %6363 = vmatprep.subr.bf16.mxu0 %v4528
    %6364 = vmatpush2.bf16.msra.mxu0 %v4527
    %6365 = vmatprep.subr.bf16.mxu0 %v4522
    %6366 = vmatpush2.bf16.msra.mxu0 %v4521
    %6367 = vmatprep.subr.bf16.mxu0 %v4516
    %6368 = vmatpush2.bf16.msra.mxu0 %v4515
    %6369 = vmatprep.subr.bf16.mxu0 %v4510
    %6370 = vmatpush2.bf16.msra.mxu0 %v4509
    %6371 = vmatprep.subr.bf16.mxu0 %v4504
    %6372 = vmatpush2.bf16.msra.mxu0 %v4503
    %6373 = vmatprep.subr.bf16.mxu0 %v4498
    %6374 = vmatpush2.bf16.msra.mxu0 %v4497
    %6375 = vmatprep.subr.bf16.mxu0 %v4492
    %6376 = vmatpush2.bf16.msra.mxu0 %v4491
    %6377 = vmatprep.mubr.bf16.mxu0 %v179
    %6378 = vmatmul.mubr.bf16.gmra.mxu0 %v178
    %v6379 = vpop.f32.mrf.mxu0
    %v6380 = vadd.f32 %v6339, %v6379
    %v6381 = vpop.f32.mrf.mxu0
    %v6382 = vadd.f32 %v6341, %v6381
    %v6383 = vpop.f32.mrf.mxu0
    %v6384 = vpop.f32.mrf.mxu0
    %6385 = vdwg.mxu0
    %6386 = vmatprep.subr.bf16.mxu0 %v4582
    %6387 = vmatpush1.bf16.msra.mxu0 %v4581
    %6388 = vmatprep.subr.bf16.mxu0 %v4576
    %6389 = vmatpush1.bf16.msra.mxu0 %v4575
    %6390 = vmatprep.subr.bf16.mxu0 %v4570
    %6391 = vmatpush1.bf16.msra.mxu0 %v4569
    %6392 = vmatprep.subr.bf16.mxu0 %v4564
    %6393 = vmatpush1.bf16.msra.mxu0 %v4563
    %6394 = vmatprep.subr.bf16.mxu0 %v4558
    %6395 = vmatpush1.bf16.msra.mxu0 %v4557
    %6396 = vmatprep.subr.bf16.mxu0 %v4552
    %6397 = vmatpush1.bf16.msra.mxu0 %v4551
    %6398 = vmatprep.subr.bf16.mxu0 %v4546
    %6399 = vmatpush1.bf16.msra.mxu0 %v4545
    %6400 = vmatprep.subr.bf16.mxu0 %v4540
    %6401 = vmatpush1.bf16.msra.mxu0 %v4539
    %6402 = vmatprep.subr.bf16.mxu0 %v4630
    %6403 = vmatpush2.bf16.msra.mxu0 %v4629
    %6404 = vmatprep.subr.bf16.mxu0 %v4624
    %6405 = vmatpush2.bf16.msra.mxu0 %v4623
    %6406 = vmatprep.subr.bf16.mxu0 %v4618
    %6407 = vmatpush2.bf16.msra.mxu0 %v4617
    %6408 = vmatprep.subr.bf16.mxu0 %v4612
    %6409 = vmatpush2.bf16.msra.mxu0 %v4611
    %6410 = vmatprep.subr.bf16.mxu0 %v4606
    %6411 = vmatpush2.bf16.msra.mxu0 %v4605
    %6412 = vmatprep.subr.bf16.mxu0 %v4600
    %6413 = vmatpush2.bf16.msra.mxu0 %v4599
    %6414 = vmatprep.subr.bf16.mxu0 %v4594
    %6415 = vmatpush2.bf16.msra.mxu0 %v4593
    %6416 = vmatprep.subr.bf16.mxu0 %v4588
    %6417 = vmatpush2.bf16.msra.mxu0 %v4587
    %6418 = vmatprep.mubr.bf16.mxu0 %v181
    %6419 = vmatmul.mubr.bf16.gmra.mxu0 %v180
    %v6420 = vpop.f32.mrf.mxu0
    %v6421 = vadd.f32 %v6380, %v6420
    %v6422 = vpop.f32.mrf.mxu0
    %v6423 = vadd.f32 %v6382, %v6422
    %v6424 = vpop.f32.mrf.mxu0
    %v6425 = vpop.f32.mrf.mxu0
    %6426 = vdwg.mxu0
    %6427 = vmatprep.subr.bf16.mxu0 %v4678
    %6428 = vmatpush1.bf16.msra.mxu0 %v4677
    %6429 = vmatprep.subr.bf16.mxu0 %v4672
    %6430 = vmatpush1.bf16.msra.mxu0 %v4671
    %6431 = vmatprep.subr.bf16.mxu0 %v4666
    %6432 = vmatpush1.bf16.msra.mxu0 %v4665
    %6433 = vmatprep.subr.bf16.mxu0 %v4660
    %6434 = vmatpush1.bf16.msra.mxu0 %v4659
    %6435 = vmatprep.subr.bf16.mxu0 %v4654
    %6436 = vmatpush1.bf16.msra.mxu0 %v4653
    %6437 = vmatprep.subr.bf16.mxu0 %v4648
    %6438 = vmatpush1.bf16.msra.mxu0 %v4647
    %6439 = vmatprep.subr.bf16.mxu0 %v4642
    %6440 = vmatpush1.bf16.msra.mxu0 %v4641
    %6441 = vmatprep.subr.bf16.mxu0 %v4636
    %6442 = vmatpush1.bf16.msra.mxu0 %v4635
    %6443 = vmatprep.subr.bf16.mxu0 %v4726
    %6444 = vmatpush2.bf16.msra.mxu0 %v4725
    %6445 = vmatprep.subr.bf16.mxu0 %v4720
    %6446 = vmatpush2.bf16.msra.mxu0 %v4719
    %6447 = vmatprep.subr.bf16.mxu0 %v4714
    %6448 = vmatpush2.bf16.msra.mxu0 %v4713
    %6449 = vmatprep.subr.bf16.mxu0 %v4708
    %6450 = vmatpush2.bf16.msra.mxu0 %v4707
    %6451 = vmatprep.subr.bf16.mxu0 %v4702
    %6452 = vmatpush2.bf16.msra.mxu0 %v4701
    %6453 = vmatprep.subr.bf16.mxu0 %v4696
    %6454 = vmatpush2.bf16.msra.mxu0 %v4695
    %6455 = vmatprep.subr.bf16.mxu0 %v4690
    %6456 = vmatpush2.bf16.msra.mxu0 %v4689
    %6457 = vmatprep.subr.bf16.mxu0 %v4684
    %6458 = vmatpush2.bf16.msra.mxu0 %v4683
    %6459 = vmatprep.mubr.bf16.mxu0 %v183
    %6460 = vmatmul.mubr.bf16.gmra.mxu0 %v182
    %v6461 = vpop.f32.mrf.mxu0
    %v6462 = vadd.f32 %v6421, %v6461
    %v6463 = vpop.f32.mrf.mxu0
    %v6464 = vadd.f32 %v6423, %v6463
    %v6465 = vpop.f32.mrf.mxu0
    %v6466 = vpop.f32.mrf.mxu0
    %6467 = vdwg.mxu0
    %6468 = vmatprep.subr.bf16.mxu0 %v4774
    %6469 = vmatpush1.bf16.msra.mxu0 %v4773
    %6470 = vmatprep.subr.bf16.mxu0 %v4768
    %6471 = vmatpush1.bf16.msra.mxu0 %v4767
    %6472 = vmatprep.subr.bf16.mxu0 %v4762
    %6473 = vmatpush1.bf16.msra.mxu0 %v4761
    %6474 = vmatprep.subr.bf16.mxu0 %v4756
    %6475 = vmatpush1.bf16.msra.mxu0 %v4755
    %6476 = vmatprep.subr.bf16.mxu0 %v4750
    %6477 = vmatpush1.bf16.msra.mxu0 %v4749
    %6478 = vmatprep.subr.bf16.mxu0 %v4744
    %6479 = vmatpush1.bf16.msra.mxu0 %v4743
    %6480 = vmatprep.subr.bf16.mxu0 %v4738
    %6481 = vmatpush1.bf16.msra.mxu0 %v4737
    %6482 = vmatprep.subr.bf16.mxu0 %v4732
    %6483 = vmatpush1.bf16.msra.mxu0 %v4731
    %6484 = vmatprep.subr.bf16.mxu0 0
    %6485 = vmatpush2.bf16.msra.mxu0 0
    %6486 = vmatprep.subr.bf16.mxu0 0
    %6487 = vmatpush2.bf16.msra.mxu0 0
    %6488 = vmatprep.subr.bf16.mxu0 0
    %6489 = vmatpush2.bf16.msra.mxu0 0
    %6490 = vmatprep.subr.bf16.mxu0 0
    %6491 = vmatpush2.bf16.msra.mxu0 0
    %6492 = vmatprep.subr.bf16.mxu0 0
    %6493 = vmatpush2.bf16.msra.mxu0 0
    %6494 = vmatprep.subr.bf16.mxu0 0
    %6495 = vmatpush2.bf16.msra.mxu0 0
    %6496 = vmatprep.subr.bf16.mxu0 0
    %6497 = vmatpush2.bf16.msra.mxu0 0
    %6498 = vmatprep.subr.bf16.mxu0 0
    %6499 = vmatpush2.bf16.msra.mxu0 0
    %6500 = vmatprep.mubr.bf16.mxu0 0
    %6501 = vmatmul.mubr.bf16.gmra.mxu0 %v184
    %v6502 = vpop.f32.mrf.mxu0
    %v6503 = vadd.f32 %v6462, %v6502
    %v6504 = vpop.f32.mrf.mxu0
    %v6505 = vadd.f32 %v6464, %v6504
    %v6506 = vpop.f32.mrf.mxu0
    %v6507 = vpop.f32.mrf.mxu0
    %6508 = vdwg.mxu0
    %6509 = vmatprep.subr.bf16.mxu0 %v3912
    %6510 = vmatpush1.bf16.msra.mxu0 %v3911
    %6511 = vmatprep.subr.bf16.mxu0 %v3906
    %6512 = vmatpush1.bf16.msra.mxu0 %v3905
    %6513 = vmatprep.subr.bf16.mxu0 %v3900
    %6514 = vmatpush1.bf16.msra.mxu0 %v3899
    %6515 = vmatprep.subr.bf16.mxu0 %v3894
    %6516 = vmatpush1.bf16.msra.mxu0 %v3893
    %6517 = vmatprep.subr.bf16.mxu0 %v3888
    %6518 = vmatpush1.bf16.msra.mxu0 %v3887
    %6519 = vmatprep.subr.bf16.mxu0 %v3882
    %6520 = vmatpush1.bf16.msra.mxu0 %v3881
    %6521 = vmatprep.subr.bf16.mxu0 %v3876
    %6522 = vmatpush1.bf16.msra.mxu0 %v3875
    %6523 = vmatprep.subr.bf16.mxu0 %v3870
    %6524 = vmatpush1.bf16.msra.mxu0 %v3869
    %6525 = vmatprep.subr.bf16.mxu0 %v3960
    %6526 = vmatpush2.bf16.msra.mxu0 %v3959
    %6527 = vmatprep.subr.bf16.mxu0 %v3954
    %6528 = vmatpush2.bf16.msra.mxu0 %v3953
    %6529 = vmatprep.subr.bf16.mxu0 %v3948
    %6530 = vmatpush2.bf16.msra.mxu0 %v3947
    %6531 = vmatprep.subr.bf16.mxu0 %v3942
    %6532 = vmatpush2.bf16.msra.mxu0 %v3941
    %6533 = vmatprep.subr.bf16.mxu0 %v3936
    %6534 = vmatpush2.bf16.msra.mxu0 %v3935
    %6535 = vmatprep.subr.bf16.mxu0 %v3930
    %6536 = vmatpush2.bf16.msra.mxu0 %v3929
    %6537 = vmatprep.subr.bf16.mxu0 %v3924
    %6538 = vmatpush2.bf16.msra.mxu0 %v3923
    %6539 = vmatprep.subr.bf16.mxu0 %v3918
    %6540 = vmatpush2.bf16.msra.mxu0 %v3917
    %6541 = vmatprep.mubr.bf16.mxu0 %v167
    %6542 = vmatmul.mubr.bf16.gmra.mxu0 %v166
    %v6543 = vpop.f32.mrf.mxu0
    %v6544 = vadd.f32 %v1118, %v6543
    %v6545 = vpop.f32.mrf.mxu0
    %v6546 = vadd.f32 %v1122, %v6545
    %v6547 = vpop.f32.mrf.mxu0
    %v6548 = vpop.f32.mrf.mxu0
    %6549 = vdwg.mxu0
    %6550 = vmatprep.subr.bf16.mxu0 %v4008
    %6551 = vmatpush1.bf16.msra.mxu0 %v4007
    %6552 = vmatprep.subr.bf16.mxu0 %v4002
    %6553 = vmatpush1.bf16.msra.mxu0 %v4001
    %6554 = vmatprep.subr.bf16.mxu0 %v3996
    %6555 = vmatpush1.bf16.msra.mxu0 %v3995
    %6556 = vmatprep.subr.bf16.mxu0 %v3990
    %6557 = vmatpush1.bf16.msra.mxu0 %v3989
    %6558 = vmatprep.subr.bf16.mxu0 %v3984
    %6559 = vmatpush1.bf16.msra.mxu0 %v3983
    %6560 = vmatprep.subr.bf16.mxu0 %v3978
    %6561 = vmatpush1.bf16.msra.mxu0 %v3977
    %6562 = vmatprep.subr.bf16.mxu0 %v3972
    %6563 = vmatpush1.bf16.msra.mxu0 %v3971
    %6564 = vmatprep.subr.bf16.mxu0 %v3966
    %6565 = vmatpush1.bf16.msra.mxu0 %v3965
    %6566 = vmatprep.subr.bf16.mxu0 %v4056
    %6567 = vmatpush2.bf16.msra.mxu0 %v4055
    %6568 = vmatprep.subr.bf16.mxu0 %v4050
    %6569 = vmatpush2.bf16.msra.mxu0 %v4049
    %6570 = vmatprep.subr.bf16.mxu0 %v4044
    %6571 = vmatpush2.bf16.msra.mxu0 %v4043
    %6572 = vmatprep.subr.bf16.mxu0 %v4038
    %6573 = vmatpush2.bf16.msra.mxu0 %v4037
    %6574 = vmatprep.subr.bf16.mxu0 %v4032
    %6575 = vmatpush2.bf16.msra.mxu0 %v4031
    %6576 = vmatprep.subr.bf16.mxu0 %v4026
    %6577 = vmatpush2.bf16.msra.mxu0 %v4025
    %6578 = vmatprep.subr.bf16.mxu0 %v4020
    %6579 = vmatpush2.bf16.msra.mxu0 %v4019
    %6580 = vmatprep.subr.bf16.mxu0 %v4014
    %6581 = vmatpush2.bf16.msra.mxu0 %v4013
    %6582 = vmatprep.mubr.bf16.mxu0 %v169
    %6583 = vmatmul.mubr.bf16.gmra.mxu0 %v168
    %v6584 = vpop.f32.mrf.mxu0
    %v6585 = vadd.f32 %v6544, %v6584
    %v6586 = vpop.f32.mrf.mxu0
    %v6587 = vadd.f32 %v6546, %v6586
    %v6588 = vpop.f32.mrf.mxu0
    %v6589 = vpop.f32.mrf.mxu0
    %6590 = vdwg.mxu0
    %6591 = vmatprep.subr.bf16.mxu0 %v4104
    %6592 = vmatpush1.bf16.msra.mxu0 %v4103
    %6593 = vmatprep.subr.bf16.mxu0 %v4098
    %6594 = vmatpush1.bf16.msra.mxu0 %v4097
    %6595 = vmatprep.subr.bf16.mxu0 %v4092
    %6596 = vmatpush1.bf16.msra.mxu0 %v4091
    %6597 = vmatprep.subr.bf16.mxu0 %v4086
    %6598 = vmatpush1.bf16.msra.mxu0 %v4085
    %6599 = vmatprep.subr.bf16.mxu0 %v4080
    %6600 = vmatpush1.bf16.msra.mxu0 %v4079
    %6601 = vmatprep.subr.bf16.mxu0 %v4074
    %6602 = vmatpush1.bf16.msra.mxu0 %v4073
    %6603 = vmatprep.subr.bf16.mxu0 %v4068
    %6604 = vmatpush1.bf16.msra.mxu0 %v4067
    %6605 = vmatprep.subr.bf16.mxu0 %v4062
    %6606 = vmatpush1.bf16.msra.mxu0 %v4061
    %6607 = vmatprep.subr.bf16.mxu0 %v4152
    %6608 = vmatpush2.bf16.msra.mxu0 %v4151
    %6609 = vmatprep.subr.bf16.mxu0 %v4146
    %6610 = vmatpush2.bf16.msra.mxu0 %v4145
    %6611 = vmatprep.subr.bf16.mxu0 %v4140
    %6612 = vmatpush2.bf16.msra.mxu0 %v4139
    %6613 = vmatprep.subr.bf16.mxu0 %v4134
    %6614 = vmatpush2.bf16.msra.mxu0 %v4133
    %6615 = vmatprep.subr.bf16.mxu0 %v4128
    %6616 = vmatpush2.bf16.msra.mxu0 %v4127
    %6617 = vmatprep.subr.bf16.mxu0 %v4122
    %6618 = vmatpush2.bf16.msra.mxu0 %v4121
    %6619 = vmatprep.subr.bf16.mxu0 %v4116
    %6620 = vmatpush2.bf16.msra.mxu0 %v4115
    %6621 = vmatprep.subr.bf16.mxu0 %v4110
    %6622 = vmatpush2.bf16.msra.mxu0 %v4109
    %6623 = vmatprep.mubr.bf16.mxu0 %v171
    %6624 = vmatmul.mubr.bf16.gmra.mxu0 %v170
    %v6625 = vpop.f32.mrf.mxu0
    %v6626 = vadd.f32 %v6585, %v6625
    %v6627 = vpop.f32.mrf.mxu0
    %v6628 = vadd.f32 %v6587, %v6627
    %v6629 = vpop.f32.mrf.mxu0
    %v6630 = vpop.f32.mrf.mxu0
    %6631 = vdwg.mxu0
    %6632 = vmatprep.subr.bf16.mxu0 %v4200
    %6633 = vmatpush1.bf16.msra.mxu0 %v4199
    %6634 = vmatprep.subr.bf16.mxu0 %v4194
    %6635 = vmatpush1.bf16.msra.mxu0 %v4193
    %6636 = vmatprep.subr.bf16.mxu0 %v4188
    %6637 = vmatpush1.bf16.msra.mxu0 %v4187
    %6638 = vmatprep.subr.bf16.mxu0 %v4182
    %6639 = vmatpush1.bf16.msra.mxu0 %v4181
    %6640 = vmatprep.subr.bf16.mxu0 %v4176
    %6641 = vmatpush1.bf16.msra.mxu0 %v4175
    %6642 = vmatprep.subr.bf16.mxu0 %v4170
    %6643 = vmatpush1.bf16.msra.mxu0 %v4169
    %6644 = vmatprep.subr.bf16.mxu0 %v4164
    %6645 = vmatpush1.bf16.msra.mxu0 %v4163
    %6646 = vmatprep.subr.bf16.mxu0 %v4158
    %6647 = vmatpush1.bf16.msra.mxu0 %v4157
    %6648 = vmatprep.subr.bf16.mxu0 %v4248
    %6649 = vmatpush2.bf16.msra.mxu0 %v4247
    %6650 = vmatprep.subr.bf16.mxu0 %v4242
    %6651 = vmatpush2.bf16.msra.mxu0 %v4241
    %6652 = vmatprep.subr.bf16.mxu0 %v4236
    %6653 = vmatpush2.bf16.msra.mxu0 %v4235
    %6654 = vmatprep.subr.bf16.mxu0 %v4230
    %6655 = vmatpush2.bf16.msra.mxu0 %v4229
    %6656 = vmatprep.subr.bf16.mxu0 %v4224
    %6657 = vmatpush2.bf16.msra.mxu0 %v4223
    %6658 = vmatprep.subr.bf16.mxu0 %v4218
    %6659 = vmatpush2.bf16.msra.mxu0 %v4217
    %6660 = vmatprep.subr.bf16.mxu0 %v4212
    %6661 = vmatpush2.bf16.msra.mxu0 %v4211
    %6662 = vmatprep.subr.bf16.mxu0 %v4206
    %6663 = vmatpush2.bf16.msra.mxu0 %v4205
    %6664 = vmatprep.mubr.bf16.mxu0 %v173
    %6665 = vmatmul.mubr.bf16.gmra.mxu0 %v172
    %v6666 = vpop.f32.mrf.mxu0
    %v6667 = vadd.f32 %v6626, %v6666
    %v6668 = vpop.f32.mrf.mxu0
    %v6669 = vadd.f32 %v6628, %v6668
    %v6670 = vpop.f32.mrf.mxu0
    %v6671 = vpop.f32.mrf.mxu0
    %6672 = vdwg.mxu0
    %6673 = vmatprep.subr.bf16.mxu0 %v4296
    %6674 = vmatpush1.bf16.msra.mxu0 %v4295
    %6675 = vmatprep.subr.bf16.mxu0 %v4290
    %6676 = vmatpush1.bf16.msra.mxu0 %v4289
    %6677 = vmatprep.subr.bf16.mxu0 %v4284
    %6678 = vmatpush1.bf16.msra.mxu0 %v4283
    %6679 = vmatprep.subr.bf16.mxu0 %v4278
    %6680 = vmatpush1.bf16.msra.mxu0 %v4277
    %6681 = vmatprep.subr.bf16.mxu0 %v4272
    %6682 = vmatpush1.bf16.msra.mxu0 %v4271
    %6683 = vmatprep.subr.bf16.mxu0 %v4266
    %6684 = vmatpush1.bf16.msra.mxu0 %v4265
    %6685 = vmatprep.subr.bf16.mxu0 %v4260
    %6686 = vmatpush1.bf16.msra.mxu0 %v4259
    %6687 = vmatprep.subr.bf16.mxu0 %v4254
    %6688 = vmatpush1.bf16.msra.mxu0 %v4253
    %6689 = vmatprep.subr.bf16.mxu0 %v4344
    %6690 = vmatpush2.bf16.msra.mxu0 %v4343
    %6691 = vmatprep.subr.bf16.mxu0 %v4338
    %6692 = vmatpush2.bf16.msra.mxu0 %v4337
    %6693 = vmatprep.subr.bf16.mxu0 %v4332
    %6694 = vmatpush2.bf16.msra.mxu0 %v4331
    %6695 = vmatprep.subr.bf16.mxu0 %v4326
    %6696 = vmatpush2.bf16.msra.mxu0 %v4325
    %6697 = vmatprep.subr.bf16.mxu0 %v4320
    %6698 = vmatpush2.bf16.msra.mxu0 %v4319
    %6699 = vmatprep.subr.bf16.mxu0 %v4314
    %6700 = vmatpush2.bf16.msra.mxu0 %v4313
    %6701 = vmatprep.subr.bf16.mxu0 %v4308
    %6702 = vmatpush2.bf16.msra.mxu0 %v4307
    %6703 = vmatprep.subr.bf16.mxu0 %v4302
    %6704 = vmatpush2.bf16.msra.mxu0 %v4301
    %6705 = vmatprep.mubr.bf16.mxu0 %v175
    %6706 = vmatmul.mubr.bf16.gmra.mxu0 %v174
    %v6707 = vpop.f32.mrf.mxu0
    %v6708 = vadd.f32 %v6667, %v6707
    %v6709 = vpop.f32.mrf.mxu0
    %v6710 = vadd.f32 %v6669, %v6709
    %v6711 = vpop.f32.mrf.mxu0
    %v6712 = vpop.f32.mrf.mxu0
    %6713 = vdwg.mxu0
    %6714 = vmatprep.subr.bf16.mxu0 %v4392
    %6715 = vmatpush1.bf16.msra.mxu0 %v4391
    %6716 = vmatprep.subr.bf16.mxu0 %v4386
    %6717 = vmatpush1.bf16.msra.mxu0 %v4385
    %6718 = vmatprep.subr.bf16.mxu0 %v4380
    %6719 = vmatpush1.bf16.msra.mxu0 %v4379
    %6720 = vmatprep.subr.bf16.mxu0 %v4374
    %6721 = vmatpush1.bf16.msra.mxu0 %v4373
    %6722 = vmatprep.subr.bf16.mxu0 %v4368
    %6723 = vmatpush1.bf16.msra.mxu0 %v4367
    %6724 = vmatprep.subr.bf16.mxu0 %v4362
    %6725 = vmatpush1.bf16.msra.mxu0 %v4361
    %6726 = vmatprep.subr.bf16.mxu0 %v4356
    %6727 = vmatpush1.bf16.msra.mxu0 %v4355
    %6728 = vmatprep.subr.bf16.mxu0 %v4350
    %6729 = vmatpush1.bf16.msra.mxu0 %v4349
    %6730 = vmatprep.subr.bf16.mxu0 %v4440
    %6731 = vmatpush2.bf16.msra.mxu0 %v4439
    %6732 = vmatprep.subr.bf16.mxu0 %v4434
    %6733 = vmatpush2.bf16.msra.mxu0 %v4433
    %6734 = vmatprep.subr.bf16.mxu0 %v4428
    %6735 = vmatpush2.bf16.msra.mxu0 %v4427
    %6736 = vmatprep.subr.bf16.mxu0 %v4422
    %6737 = vmatpush2.bf16.msra.mxu0 %v4421
    %6738 = vmatprep.subr.bf16.mxu0 %v4416
    %6739 = vmatpush2.bf16.msra.mxu0 %v4415
    %6740 = vmatprep.subr.bf16.mxu0 %v4410
    %6741 = vmatpush2.bf16.msra.mxu0 %v4409
    %6742 = vmatprep.subr.bf16.mxu0 %v4404
    %6743 = vmatpush2.bf16.msra.mxu0 %v4403
    %6744 = vmatprep.subr.bf16.mxu0 %v4398
    %6745 = vmatpush2.bf16.msra.mxu0 %v4397
    %6746 = vmatprep.mubr.bf16.mxu0 %v177
    %6747 = vmatmul.mubr.bf16.gmra.mxu0 %v176
    %v6748 = vpop.f32.mrf.mxu0
    %v6749 = vadd.f32 %v6708, %v6748
    %v6750 = vpop.f32.mrf.mxu0
    %v6751 = vadd.f32 %v6710, %v6750
    %v6752 = vpop.f32.mrf.mxu0
    %v6753 = vpop.f32.mrf.mxu0
    %6754 = vdwg.mxu0
    %6755 = vmatprep.subr.bf16.mxu0 %v4488
    %6756 = vmatpush1.bf16.msra.mxu0 %v4487
    %6757 = vmatprep.subr.bf16.mxu0 %v4482
    %6758 = vmatpush1.bf16.msra.mxu0 %v4481
    %6759 = vmatprep.subr.bf16.mxu0 %v4476
    %6760 = vmatpush1.bf16.msra.mxu0 %v4475
    %6761 = vmatprep.subr.bf16.mxu0 %v4470
    %6762 = vmatpush1.bf16.msra.mxu0 %v4469
    %6763 = vmatprep.subr.bf16.mxu0 %v4464
    %6764 = vmatpush1.bf16.msra.mxu0 %v4463
    %6765 = vmatprep.subr.bf16.mxu0 %v4458
    %6766 = vmatpush1.bf16.msra.mxu0 %v4457
    %6767 = vmatprep.subr.bf16.mxu0 %v4452
    %6768 = vmatpush1.bf16.msra.mxu0 %v4451
    %6769 = vmatprep.subr.bf16.mxu0 %v4446
    %6770 = vmatpush1.bf16.msra.mxu0 %v4445
    %6771 = vmatprep.subr.bf16.mxu0 %v4536
    %6772 = vmatpush2.bf16.msra.mxu0 %v4535
    %6773 = vmatprep.subr.bf16.mxu0 %v4530
    %6774 = vmatpush2.bf16.msra.mxu0 %v4529
    %6775 = vmatprep.subr.bf16.mxu0 %v4524
    %6776 = vmatpush2.bf16.msra.mxu0 %v4523
    %6777 = vmatprep.subr.bf16.mxu0 %v4518
    %6778 = vmatpush2.bf16.msra.mxu0 %v4517
    %6779 = vmatprep.subr.bf16.mxu0 %v4512
    %6780 = vmatpush2.bf16.msra.mxu0 %v4511
    %6781 = vmatprep.subr.bf16.mxu0 %v4506
    %6782 = vmatpush2.bf16.msra.mxu0 %v4505
    %6783 = vmatprep.subr.bf16.mxu0 %v4500
    %6784 = vmatpush2.bf16.msra.mxu0 %v4499
    %6785 = vmatprep.subr.bf16.mxu0 %v4494
    %6786 = vmatpush2.bf16.msra.mxu0 %v4493
    %6787 = vmatprep.mubr.bf16.mxu0 %v179
    %6788 = vmatmul.mubr.bf16.gmra.mxu0 %v178
    %v6789 = vpop.f32.mrf.mxu0
    %v6790 = vadd.f32 %v6749, %v6789
    %v6791 = vpop.f32.mrf.mxu0
    %v6792 = vadd.f32 %v6751, %v6791
    %v6793 = vpop.f32.mrf.mxu0
    %v6794 = vpop.f32.mrf.mxu0
    %6795 = vdwg.mxu0
    %6796 = vmatprep.subr.bf16.mxu0 %v4584
    %6797 = vmatpush1.bf16.msra.mxu0 %v4583
    %6798 = vmatprep.subr.bf16.mxu0 %v4578
    %6799 = vmatpush1.bf16.msra.mxu0 %v4577
    %6800 = vmatprep.subr.bf16.mxu0 %v4572
    %6801 = vmatpush1.bf16.msra.mxu0 %v4571
    %6802 = vmatprep.subr.bf16.mxu0 %v4566
    %6803 = vmatpush1.bf16.msra.mxu0 %v4565
    %6804 = vmatprep.subr.bf16.mxu0 %v4560
    %6805 = vmatpush1.bf16.msra.mxu0 %v4559
    %6806 = vmatprep.subr.bf16.mxu0 %v4554
    %6807 = vmatpush1.bf16.msra.mxu0 %v4553
    %6808 = vmatprep.subr.bf16.mxu0 %v4548
    %6809 = vmatpush1.bf16.msra.mxu0 %v4547
    %6810 = vmatprep.subr.bf16.mxu0 %v4542
    %6811 = vmatpush1.bf16.msra.mxu0 %v4541
    %6812 = vmatprep.subr.bf16.mxu0 %v4632
    %6813 = vmatpush2.bf16.msra.mxu0 %v4631
    %6814 = vmatprep.subr.bf16.mxu0 %v4626
    %6815 = vmatpush2.bf16.msra.mxu0 %v4625
    %6816 = vmatprep.subr.bf16.mxu0 %v4620
    %6817 = vmatpush2.bf16.msra.mxu0 %v4619
    %6818 = vmatprep.subr.bf16.mxu0 %v4614
    %6819 = vmatpush2.bf16.msra.mxu0 %v4613
    %6820 = vmatprep.subr.bf16.mxu0 %v4608
    %6821 = vmatpush2.bf16.msra.mxu0 %v4607
    %6822 = vmatprep.subr.bf16.mxu0 %v4602
    %6823 = vmatpush2.bf16.msra.mxu0 %v4601
    %6824 = vmatprep.subr.bf16.mxu0 %v4596
    %6825 = vmatpush2.bf16.msra.mxu0 %v4595
    %6826 = vmatprep.subr.bf16.mxu0 %v4590
    %6827 = vmatpush2.bf16.msra.mxu0 %v4589
    %6828 = vmatprep.mubr.bf16.mxu0 %v181
    %6829 = vmatmul.mubr.bf16.gmra.mxu0 %v180
    %v6830 = vpop.f32.mrf.mxu0
    %v6831 = vadd.f32 %v6790, %v6830
    %v6832 = vpop.f32.mrf.mxu0
    %v6833 = vadd.f32 %v6792, %v6832
    %v6834 = vpop.f32.mrf.mxu0
    %v6835 = vpop.f32.mrf.mxu0
    %6836 = vdwg.mxu0
    %6837 = vmatprep.subr.bf16.mxu0 %v4680
    %6838 = vmatpush1.bf16.msra.mxu0 %v4679
    %6839 = vmatprep.subr.bf16.mxu0 %v4674
    %6840 = vmatpush1.bf16.msra.mxu0 %v4673
    %6841 = vmatprep.subr.bf16.mxu0 %v4668
    %6842 = vmatpush1.bf16.msra.mxu0 %v4667
    %6843 = vmatprep.subr.bf16.mxu0 %v4662
    %6844 = vmatpush1.bf16.msra.mxu0 %v4661
    %6845 = vmatprep.subr.bf16.mxu0 %v4656
    %6846 = vmatpush1.bf16.msra.mxu0 %v4655
    %6847 = vmatprep.subr.bf16.mxu0 %v4650
    %6848 = vmatpush1.bf16.msra.mxu0 %v4649
    %6849 = vmatprep.subr.bf16.mxu0 %v4644
    %6850 = vmatpush1.bf16.msra.mxu0 %v4643
    %6851 = vmatprep.subr.bf16.mxu0 %v4638
    %6852 = vmatpush1.bf16.msra.mxu0 %v4637
    %6853 = vmatprep.subr.bf16.mxu0 %v4728
    %6854 = vmatpush2.bf16.msra.mxu0 %v4727
    %6855 = vmatprep.subr.bf16.mxu0 %v4722
    %6856 = vmatpush2.bf16.msra.mxu0 %v4721
    %6857 = vmatprep.subr.bf16.mxu0 %v4716
    %6858 = vmatpush2.bf16.msra.mxu0 %v4715
    %6859 = vmatprep.subr.bf16.mxu0 %v4710
    %6860 = vmatpush2.bf16.msra.mxu0 %v4709
    %6861 = vmatprep.subr.bf16.mxu0 %v4704
    %6862 = vmatpush2.bf16.msra.mxu0 %v4703
    %6863 = vmatprep.subr.bf16.mxu0 %v4698
    %6864 = vmatpush2.bf16.msra.mxu0 %v4697
    %6865 = vmatprep.subr.bf16.mxu0 %v4692
    %6866 = vmatpush2.bf16.msra.mxu0 %v4691
    %6867 = vmatprep.subr.bf16.mxu0 %v4686
    %6868 = vmatpush2.bf16.msra.mxu0 %v4685
    %6869 = vmatprep.mubr.bf16.mxu0 %v183
    %6870 = vmatmul.mubr.bf16.gmra.mxu0 %v182
    %v6871 = vpop.f32.mrf.mxu0
    %v6872 = vadd.f32 %v6831, %v6871
    %v6873 = vpop.f32.mrf.mxu0
    %v6874 = vadd.f32 %v6833, %v6873
    %v6875 = vpop.f32.mrf.mxu0
    %v6876 = vpop.f32.mrf.mxu0
    %6877 = vdwg.mxu0
    %6878 = vmatprep.subr.bf16.mxu0 %v4776
    %6879 = vmatpush1.bf16.msra.mxu0 %v4775
    %6880 = vmatprep.subr.bf16.mxu0 %v4770
    %6881 = vmatpush1.bf16.msra.mxu0 %v4769
    %6882 = vmatprep.subr.bf16.mxu0 %v4764
    %6883 = vmatpush1.bf16.msra.mxu0 %v4763
    %6884 = vmatprep.subr.bf16.mxu0 %v4758
    %6885 = vmatpush1.bf16.msra.mxu0 %v4757
    %6886 = vmatprep.subr.bf16.mxu0 %v4752
    %6887 = vmatpush1.bf16.msra.mxu0 %v4751
    %6888 = vmatprep.subr.bf16.mxu0 %v4746
    %6889 = vmatpush1.bf16.msra.mxu0 %v4745
    %6890 = vmatprep.subr.bf16.mxu0 %v4740
    %6891 = vmatpush1.bf16.msra.mxu0 %v4739
    %6892 = vmatprep.subr.bf16.mxu0 %v4734
    %6893 = vmatpush1.bf16.msra.mxu0 %v4733
    %6894 = vmatprep.subr.bf16.mxu0 0
    %6895 = vmatpush2.bf16.msra.mxu0 0
    %6896 = vmatprep.subr.bf16.mxu0 0
    %6897 = vmatpush2.bf16.msra.mxu0 0
    %6898 = vmatprep.subr.bf16.mxu0 0
    %6899 = vmatpush2.bf16.msra.mxu0 0
    %6900 = vmatprep.subr.bf16.mxu0 0
    %6901 = vmatpush2.bf16.msra.mxu0 0
    %6902 = vmatprep.subr.bf16.mxu0 0
    %6903 = vmatpush2.bf16.msra.mxu0 0
    %6904 = vmatprep.subr.bf16.mxu0 0
    %6905 = vmatpush2.bf16.msra.mxu0 0
    %6906 = vmatprep.subr.bf16.mxu0 0
    %6907 = vmatpush2.bf16.msra.mxu0 0
    %6908 = vmatprep.subr.bf16.mxu0 0
    %6909 = vmatpush2.bf16.msra.mxu0 0
    %6910 = vmatprep.mubr.bf16.mxu0 0
    %6911 = vmatmul.mubr.bf16.gmra.mxu0 %v184
    %v6912 = vpop.f32.mrf.mxu0
    %v6913 = vadd.f32 %v6872, %v6912
    %v6914 = vpop.f32.mrf.mxu0
    %v6915 = vadd.f32 %v6874, %v6914
    %v6916 = vpop.f32.mrf.mxu0
    %v6917 = vpop.f32.mrf.mxu0
    %6918 = vdwg.mxu0
    %v6925 = vcombine.low %v6093, %v6095
    %v6926 = vcombine.low %v6503, %v6505
    %v6928 = vunpack.c.l.s4 1983009808
    %v6929 = vunpack.c.0.s8 %v6928
    %v6930 = vlaneseq
    %v6931 = vshrl.u32 %v6930, 7
    %v6932 = vsub.s32 %v6929, %v6931
    %v6933 = vrot.slane %v6925, %v6932
    %v6935 = vunpack.c.l.s4 1983009808
    %v6936 = vunpack.c.0.s8 %v6935
    %v6937 = vlaneseq
    %v6938 = vshrl.u32 %v6937, 7
    %v6939 = vsub.s32 %v6936, %v6938
    %v6940 = vrot.slane %v6926, %v6939
    %v6941 = vcombine.low %v6933, %v6940
    %v6942 = vcombine.low %v6913, %v6915
    %v6944 = vunpack.c.l.s4 1983009808
    %v6945 = vunpack.c.0.s8 %v6944
    %v6946 = vlaneseq
    %v6947 = vshrl.u32 %v6946, 7
    %v6948 = vsub.s32 %v6945, %v6947
    %v6949 = vrot.slane %v6942, %v6948
    %6952 = vst [vmem:[#allocation8] sm:$0xff] %v6941
    %6953 = vst [vmem:[#allocation8 + $0x8] sm:$0xf] %v6949
    // Predicated region
    $region26: #{tpu_custom_call.1} parent=1 // pred_check
      _
    $region27: #{tpu_custom_call.1} parent=1 // pred_check_branch
      %6955 = sbr.rel (0) target = $region29
    $region28: #{tpu_custom_call.1} parent=1 // pred_region
      %s6957 = ssub.s32 192, 192
      %6958 = vsyncadd [#allocation4], %s6957
      %s6960 = sshll.u32 [#allocation8], 4
      %s6961 = int_to_ptr.vmem [resolvable:$true] %s6960
      %6963 = dma.vmem_to_hbm [thread:$0]  %s6961, 192, %s3, [#allocation4]
    $region29: #{tpu_custom_call.1} parent=1 // pred_fallthru
      _
    // Predicated region
    $region30: #{tpu_custom_call.1} parent=1 // pred_check
      _
    $region31: #{tpu_custom_call.1} parent=1 // pred_check_branch
      %6965 = sbr.rel (0) target = $region33
    $region32: #{tpu_custom_call.1} parent=1 // pred_region
      %6966 = dma.done [#allocation4], 192
    $region33: #{tpu_custom_call.1} parent=1 // pred_fallthru
      _
    %6967 = vsyncpa [#allocation3], 1
    %6968 = vsyncpa [#allocation6], 1
    %6969 = vsyncpa [#allocation4], 1

</llo_original>
